<compile_context>
chip_gen: v7x
topology: tpu7x:2x2x1
jax: 0.10.0
libtpu: 0.0.40
codegen_flags: <defaults>
</compile_context>

<pallas_src>
import functools
import itertools

import jax
import jax.numpy as jnp
import numpy as np
from jax import lax
from jax.experimental import pallas as pl
from jax.experimental.pallas import tpu as pltpu


# Per-dimension tap rule for ConvTranspose(k=3, s=2, p=1, op=1):
#   output o = 2*i - 1 + k (k in {0,1,2}); for output parity p and input shift
#   s = i - floor(o/2):  (s=0,p=0)->k=1  (s=0,p=1)->k=2  (s=1,p=1)->k=0
#   (s=1,p=0)-> no tap.
_KMAP = {(0, 0): 1, (0, 1): 2, (1, 1): 0}
_SHIFTS = tuple(itertools.product((0, 1), repeat=3))   # (sd, sh, sw)
_PHASES = tuple(itertools.product((0, 1), repeat=3))   # (pd, ph, pw)


def pack_phase_weights(wt):
    """PyTorch ConvTranspose3d weight (Cin, Cout, 3,3,3) -> (8 shifts, Cin, 8*Cout)."""
    cin, cout = wt.shape[0], wt.shape[1]
    zero = jnp.zeros((cin, cout), wt.dtype)
    shift_blocks = []
    for sd, sh, sw in _SHIFTS:
        cols = []
        for pd, ph, pw in _PHASES:
            pairs = ((sd, pd), (sh, ph), (sw, pw))
            if any(s == 1 and p == 0 for s, p in pairs):
                cols.append(zero)
            else:
                kd, kh, kw = (_KMAP[pr] for pr in pairs)
                cols.append(wt[:, :, kd, kh, kw])
        shift_blocks.append(jnp.concatenate(cols, axis=1))     # (Cin, 8*Cout)
    return jnp.stack(shift_blocks, axis=0)                     # (8, Cin, 8*Cout)


# ----------------------------------------------------------------------------
# Fused Pallas kernel: (folded 1x1) -> upconv1 -> ReLU -> upconv2 -> ReLU -> 1x1
# ----------------------------------------------------------------------------
def _fused_kernel(x_ref, wA_ref, bA_ref, wB_ref, bB_ref, w2t_ref, b2_ref,
                  o_ref, a_ref, *, T, H, W):
    f32 = jnp.float32
    cinA = x_ref.shape[-1]
    m1 = T * H * W
    n1 = wA_ref.shape[-1]          # 8 * 64  (phase-packed stage-1 channels)
    cmid = n1 // 8                 # 64

    # ---- Stage 1: one deep concat-K matmul over the 8 shifted windows ------------
    xw = x_ref[0]                                                # (T+1, H+1, W+1, cinA)
    parts = [xw[sd:sd + T, sh:sh + H, sw:sw + W, :].reshape(m1, cinA)
             for sd, sh, sw in _SHIFTS]
    staged1 = jnp.concatenate(parts, axis=-1)                    # (m1, 8*cinA)
    y1 = jnp.dot(staged1, wA_ref[...], preferred_element_type=f32)
    y1 = jnp.maximum(y1 + bA_ref[...], 0.0)                      # (m1, 8*cmid)

    # Stash y1 (base-indexed rows, phase-packed columns) with a +1 zero halo on the
    # base dims; the halo provides the out-of-range zeros for stage-2 taps.
    a_ref[...] = jnp.zeros_like(a_ref)
    a_ref[pl.ds(0, T), pl.ds(0, H), pl.ds(0, W), :] = y1.reshape(T, H, W, n1)

    # ---- Stage 2: concat-K matrix gathered straight from the phase blocks --------
    # For stage-2 output parity r and tap shift s (per dim): r + s = 2*t + p, so the
    # needed dense value a[2q + r + s] equals Ypad[q + t, phase p].  Only 27 distinct
    # taps exist; they are cached and reused across the 8x8 (r, s) block grid.
    taps = {}

    def tap(key):
        if key not in taps:
            (td, pd), (th, ph), (tw, pw) = key
            pidx = (pd * 2 + ph) * 2 + pw
            blk = a_ref[pl.ds(td, T), pl.ds(th, H), pl.ds(tw, W),
                        pl.ds(pidx * cmid, cmid)]                # (T, H, W, cmid)
            taps[key] = blk.reshape(m1, cmid)
        return taps[key]

    row_blocks = []
    for r in _PHASES:                                            # output parity (r-major rows)
        cols = [tap(tuple(divmod(ri + si, 2) for ri, si in zip(r, s)))
                for s in _SHIFTS]
        row_blocks.append(jnp.concatenate(cols, axis=-1))        # (m1, 8*cmid)
    staged2 = jnp.concatenate(row_blocks, axis=0)                # (8*m1, 8*cmid)

    y2 = jnp.dot(staged2, wB_ref[...], preferred_element_type=f32)
    y2 = jnp.maximum(y2 + bB_ref[...], 0.0)                      # (8*m1, 8*cout2)

    # ---- Fused final 1x1 conv: contract y2's LAST dim (no transpose materialized);
    # store transposed & phase-packed so the minor (lane) dim is 8*m1 (128-multiple).
    z = lax.dot_general(w2t_ref[...], y2, (((1,), (1,)), ((), ())),
                        preferred_element_type=f32)              # (8*oc, 8*m1)
    o_ref[...] = (z + b2_ref[...]).reshape(o_ref.shape).astype(o_ref.dtype)


def fused_projection(x_pad, wA, bA, wB, bB, w2t, b2col, *, T, H, W):
    """x_pad: (B, T+1, H+1, W+1, cinA); returns (B, 8*oc, 8*T*H*W) with
    output rows packed (p_d,p_h,p_w,oc) and columns packed (r_d,r_h,r_w, q_d,q_h,q_w)."""
    B, Dp1, Hp1, Wp1, cinA = x_pad.shape
    n1 = wA.shape[-1]
    nout = w2t.shape[0]
    m2 = 8 * T * H * W
    kernel = functools.partial(_fused_kernel, T=T, H=H, W=W)
    return pl.pallas_call(
        kernel,
        out_shape=jax.ShapeDtypeStruct((B, nout, m2), jnp.float32),
        grid_spec=pltpu.PrefetchScalarGridSpec(
            num_scalar_prefetch=0,
            grid=(B,),
            in_specs=[
                pl.BlockSpec((1, Dp1, Hp1, Wp1, cinA), lambda b: (b, 0, 0, 0, 0)),
                pl.BlockSpec(wA.shape, lambda b: (0, 0)),
                pl.BlockSpec(bA.shape, lambda b: (0, 0)),
                pl.BlockSpec(wB.shape, lambda b: (0, 0)),
                pl.BlockSpec(bB.shape, lambda b: (0, 0)),
                pl.BlockSpec(w2t.shape, lambda b: (0, 0)),
                pl.BlockSpec(b2col.shape, lambda b: (0, 0)),
            ],
            out_specs=pl.BlockSpec((1, nout, m2), lambda b: (b, 0, 0)),
            scratch_shapes=[pltpu.VMEM((T + 1, H + 1, W + 1, n1), jnp.float32)],
        ),
        compiler_params=pltpu.CompilerParams(
            dimension_semantics=("parallel",)),
    )(x_pad, wA, bA, wB, bB, w2t, b2col)


# ----------------------------------------------------------------------------
# Parameters (deterministic, PyTorch-style uniform fan-in init, PyTorch layouts)
# ----------------------------------------------------------------------------
def init_params(key, input_dim, output_channels):
    ks = jax.random.split(key, 8)

    def u(k, shape, fan_in):
        bound = 1.0 / np.sqrt(fan_in)
        return jax.random.uniform(k, shape, jnp.float32, -bound, bound)

    return dict(
        w1=u(ks[0], (input_dim, 64), input_dim),
        b1=u(ks[1], (64,), input_dim),
        wt1=u(ks[2], (64, 64, 3, 3, 3), 64 * 27),   # (Cin, Cout, kD, kH, kW)
        bt1=u(ks[3], (64,), 64 * 27),
        wt2=u(ks[4], (64, 32, 3, 3, 3), 64 * 27),
        bt2=u(ks[5], (32,), 64 * 27),
        w2=u(ks[6], (32, output_channels), 32),
        b2=u(ks[7], (output_channels,), 32),
    )


# ----------------------------------------------------------------------------
# Forward pass (Pallas) and pure-JAX reference
# ----------------------------------------------------------------------------
def final_projection_forward(x, params, T, H, W, input_dim, output_channels):
    B = x.shape[0]
    f32 = jnp.float32
    oc = output_channels

    # Fold Conv3d(k=1) #1 (w1, b1) into the first transposed conv via an appended
    # "ones" channel; the spatial zero halo also zeroes that channel, so b1 correctly
    # vanishes at out-of-range shifted taps (keep the halo zero-padded!).
    w1_aug = jnp.concatenate([params["w1"], params["b1"][None, :]], axis=0)  # (Ci+1,64)
    wA = jnp.einsum("ck,skn->scn", w1_aug, pack_phase_weights(params["wt1"]))
    cinA = -(-(input_dim + 1) // 8) * 8              # pad folded K only to mult-of-8
    wA = jnp.pad(wA, ((0, 0), (0, cinA - (input_dim + 1)), (0, 0)))
    wA = wA.reshape(8 * cinA, 8 * 64).astype(f32)    # concat-K layout (shift-major)
    bA = jnp.tile(params["bt1"], 8)[None, :].astype(f32)                     # (1, 512)

    wB = pack_phase_weights(params["wt2"]).reshape(8 * 64, 8 * 32).astype(f32)
    bB = jnp.tile(params["bt2"], 8)[None, :].astype(f32)                     # (1, 256)

    # Fused final Conv3d(k=1): per-phase block-diagonal, pre-transposed.
    w2t = jnp.kron(jnp.eye(8, dtype=f32), params["w2"].T).astype(f32)        # (8*oc,256)
    b2col = jnp.tile(params["b2"], 8)[:, None].astype(f32)                   # (8*oc, 1)

    h = x.reshape(B, T, H, W, input_dim).astype(f32)
    ones = jnp.ones(h.shape[:-1] + (1,), f32)
    h = jnp.concatenate([h, ones], axis=-1)
    h = jnp.pad(h, ((0, 0), (0, 1), (0, 1), (0, 1), (0, cinA - (input_dim + 1))))

    z = fused_projection(h, wA, bA, wB, bB, w2t, b2col, T=T, H=H, W=W)
    # z: (B, [p_d,p_h,p_w,oc], [r_d,r_h,r_w, q_d,q_h,q_w]); final spatial index per
    # dim is 4*q + 2*r + p.  Un-pack straight into NCDHW.
    z = z.reshape(B, 2, 2, 2, oc, 2, 2, 2, T, H, W)
    z = jnp.transpose(z, (0, 4, 8, 5, 1, 9, 6, 2, 10, 7, 3))
    return z.reshape(B, oc, 4 * T, 4 * H, 4 * W)


def reference_forward(x, params, T, H, W, input_dim, output_channels):
    B = x.shape[0]
    hp = lax.Precision.HIGHEST

    def to_fwd(wt):  # (Cin,Cout,kD,kH,kW) -> flipped DHWIO for dilated forward conv
        return jnp.transpose(wt, (2, 3, 4, 0, 1))[::-1, ::-1, ::-1]

    h = x.reshape(B, T, H, W, input_dim)
    h = jnp.einsum("bdhwc,co->bdhwo", h, params["w1"], precision=hp) + params["b1"]
    for wt, bt in ((params["wt1"], params["bt1"]), (params["wt2"], params["bt2"])):
        h = lax.conv_general_dilated(
            h, to_fwd(wt), window_strides=(1, 1, 1),
            padding=((1, 2), (1, 2), (1, 2)), lhs_dilation=(2, 2, 2),
            dimension_numbers=("NDHWC", "DHWIO", "NDHWC"), precision=hp,
        ) + bt
        h = jnp.maximum(h, 0.0)
    h = jnp.einsum("bdhwc,co->bdhwo", h, params["w2"], precision=hp) + params["b2"]
    return jnp.transpose(h, (0, 4, 1, 2, 3))


# ----------------------------------------------------------------------------
if __name__ == "__main__":
    B, T, H, W = 2, 4, 4, 4
    input_dim, output_channels = 32, 3

    key = jax.random.PRNGKey(0)
    kx, kp = jax.random.split(key)
    x = jax.random.normal(kx, (B, T * H * W, input_dim), jnp.float32)
    params = init_params(kp, input_dim, output_channels)

    fwd = jax.jit(functools.partial(
        final_projection_forward, T=T, H=H, W=W,
        input_dim=input_dim, output_channels=output_channels))
    out = jax.block_until_ready(fwd(x, params))

    assert out.shape == (B, output_channels, 4 * T, 4 * H, 4 * W), out.shape

    ref = reference_forward(x, params, T, H, W, input_dim, output_channels)
    np.testing.assert_allclose(np.asarray(out), np.asarray(ref), rtol=2e-3, atol=2e-3)

    print("KERNEL_OK")
</pallas_src>

<mosaic_0001>
module attributes {stable_mosaic.version = 11 : i64} {
  func.func @_fused_kernel(%arg0: i32, %arg1: memref<1x5x5x5x40xf32, #tpu.memory_space<vmem>>, %arg2: memref<320x512xf32, #tpu.memory_space<vmem>>, %arg3: memref<1x512xf32, #tpu.memory_space<vmem>>, %arg4: memref<512x256xf32, #tpu.memory_space<vmem>>, %arg5: memref<1x256xf32, #tpu.memory_space<vmem>>, %arg6: memref<24x256xf32, #tpu.memory_space<vmem>>, %arg7: memref<24x1xf32, #tpu.memory_space<vmem>>, %arg8: memref<1x24x512xf32, #tpu.memory_space<vmem>>, %arg9: memref<5x5x5x512xf32, #tpu.memory_space<vmem>>) attributes {dimension_semantics = [#tpu.dimension_semantics<parallel>], iteration_bounds = array<i64: 2>, scalar_prefetch = 0 : i64, scratch_operands = 1 : i64, tpu.core_type = #tpu.core_type<tc>, window_params = [{transform_indices = @transform_0, window_bounds = array<i64: 1, 5, 5, 5, 40>}, {pipeline_mode = #tpu.pipeline_mode<synchronous>, transform_indices = @transform_1, window_bounds = array<i64: 320, 512>}, {pipeline_mode = #tpu.pipeline_mode<synchronous>, transform_indices = @transform_2, window_bounds = array<i64: 1, 512>}, {pipeline_mode = #tpu.pipeline_mode<synchronous>, transform_indices = @transform_3, window_bounds = array<i64: 512, 256>}, {pipeline_mode = #tpu.pipeline_mode<synchronous>, transform_indices = @transform_4, window_bounds = array<i64: 1, 256>}, {pipeline_mode = #tpu.pipeline_mode<synchronous>, transform_indices = @transform_5, window_bounds = array<i64: 24, 256>}, {pipeline_mode = #tpu.pipeline_mode<synchronous>, transform_indices = @transform_6, window_bounds = array<i64: 24, 1>}, {transform_indices = @transform_7, window_bounds = array<i64: 1, 24, 512>}]} {
    %c0 = arith.constant 0 : index
    %c0_0 = arith.constant 0 : index
    %c0_1 = arith.constant 0 : index
    %c0_2 = arith.constant 0 : index
    %c0_3 = arith.constant 0 : index
    %0 = vector.load %arg1[%c0, %c0_0, %c0_1, %c0_2, %c0_3] : memref<1x5x5x5x40xf32, #tpu.memory_space<vmem>>, vector<1x5x5x5x40xf32>
    %1 = vector.shape_cast %0 : vector<1x5x5x5x40xf32> to vector<5x5x5x40xf32>
    %2 = vector.extract_strided_slice %1 {offsets = [0, 0, 0, 0], sizes = [4, 4, 4, 40], strides = [1, 1, 1, 1]} : vector<5x5x5x40xf32> to vector<4x4x4x40xf32>
    %3 = vector.shape_cast %2 : vector<4x4x4x40xf32> to vector<64x40xf32>
    %4 = vector.extract_strided_slice %1 {offsets = [0, 0, 1, 0], sizes = [4, 4, 4, 40], strides = [1, 1, 1, 1]} : vector<5x5x5x40xf32> to vector<4x4x4x40xf32>
    %5 = vector.shape_cast %4 : vector<4x4x4x40xf32> to vector<64x40xf32>
    %6 = vector.extract_strided_slice %1 {offsets = [0, 1, 0, 0], sizes = [4, 4, 4, 40], strides = [1, 1, 1, 1]} : vector<5x5x5x40xf32> to vector<4x4x4x40xf32>
    %7 = vector.shape_cast %6 : vector<4x4x4x40xf32> to vector<64x40xf32>
    %8 = vector.extract_strided_slice %1 {offsets = [0, 1, 1, 0], sizes = [4, 4, 4, 40], strides = [1, 1, 1, 1]} : vector<5x5x5x40xf32> to vector<4x4x4x40xf32>
    %9 = vector.shape_cast %8 : vector<4x4x4x40xf32> to vector<64x40xf32>
    %10 = vector.extract_strided_slice %1 {offsets = [1, 0, 0, 0], sizes = [4, 4, 4, 40], strides = [1, 1, 1, 1]} : vector<5x5x5x40xf32> to vector<4x4x4x40xf32>
    %11 = vector.shape_cast %10 : vector<4x4x4x40xf32> to vector<64x40xf32>
    %12 = vector.extract_strided_slice %1 {offsets = [1, 0, 1, 0], sizes = [4, 4, 4, 40], strides = [1, 1, 1, 1]} : vector<5x5x5x40xf32> to vector<4x4x4x40xf32>
    %13 = vector.shape_cast %12 : vector<4x4x4x40xf32> to vector<64x40xf32>
    %14 = vector.extract_strided_slice %1 {offsets = [1, 1, 0, 0], sizes = [4, 4, 4, 40], strides = [1, 1, 1, 1]} : vector<5x5x5x40xf32> to vector<4x4x4x40xf32>
    %15 = vector.shape_cast %14 : vector<4x4x4x40xf32> to vector<64x40xf32>
    %16 = vector.extract_strided_slice %1 {offsets = [1, 1, 1, 0], sizes = [4, 4, 4, 40], strides = [1, 1, 1, 1]} : vector<5x5x5x40xf32> to vector<4x4x4x40xf32>
    %17 = vector.shape_cast %16 : vector<4x4x4x40xf32> to vector<64x40xf32>
    %18 = tpu.concatenate %3, %5, %7, %9, %11, %13, %15, %17 in 1 : vector<64x40xf32>, vector<64x40xf32>, vector<64x40xf32>, vector<64x40xf32>, vector<64x40xf32>, vector<64x40xf32>, vector<64x40xf32>, vector<64x40xf32> -> vector<64x320xf32>
    %c0_4 = arith.constant 0 : index
    %c0_5 = arith.constant 0 : index
    %19 = vector.load %arg2[%c0_4, %c0_5] : memref<320x512xf32, #tpu.memory_space<vmem>>, vector<320x512xf32>
    %cst = arith.constant dense<0.000000e+00> : vector<64x512xf32>
    %20 = tpu.matmul %18, %19, %cst {dimension_numbers = #tpu.dot_dimension_numbers<[1], [0], [0], [1], [0, 0, 1, 1], [], []>} : vector<64x320xf32>, vector<320x512xf32>, vector<64x512xf32> -> vector<64x512xf32>
    %c0_6 = arith.constant 0 : index
    %c0_7 = arith.constant 0 : index
    %21 = vector.load %arg3[%c0_6, %c0_7] : memref<1x512xf32, #tpu.memory_space<vmem>>, vector<1x512xf32>
    %22 = vector.broadcast %21 : vector<1x512xf32> to vector<64x512xf32>
    %23 = arith.addf %20, %22 : vector<64x512xf32>
    %cst_8 = arith.constant 0.000000e+00 : f32
    %24 = vector.broadcast %cst_8 : f32 to vector<64x512xf32>
    %25 = arith.maximumf %23, %24 : vector<64x512xf32>
    %cst_9 = arith.constant 0.000000e+00 : f32
    %26 = vector.broadcast %cst_9 : f32 to vector<5x5x5x512xf32>
    %c0_10 = arith.constant 0 : index
    %c0_11 = arith.constant 0 : index
    %c0_12 = arith.constant 0 : index
    %c0_13 = arith.constant 0 : index
    %27 = vector.load %arg9[%c0_10, %c0_11, %c0_12, %c0_13] : memref<5x5x5x512xf32, #tpu.memory_space<vmem>>, vector<5x5x5x512xf32>
    tpu.vector_store %arg9[%c0_10, %c0_11, %c0_12, %c0_13], %26 {strides = array<i32>} : memref<5x5x5x512xf32, #tpu.memory_space<vmem>>, vector<5x5x5x512xf32>,
    %28 = vector.shape_cast %25 : vector<64x512xf32> to vector<4x4x4x512xf32>
    %c0_14 = arith.constant 0 : index
    %c0_15 = arith.constant 0 : index
    %c0_16 = arith.constant 0 : index
    %c0_17 = arith.constant 0 : index
    %29 = vector.load %arg9[%c0_14, %c0_15, %c0_16, %c0_17] : memref<5x5x5x512xf32, #tpu.memory_space<vmem>>, vector<4x4x4x512xf32>
    tpu.vector_store %arg9[%c0_14, %c0_15, %c0_16, %c0_17], %28 {strides = array<i32>} : memref<5x5x5x512xf32, #tpu.memory_space<vmem>>, vector<4x4x4x512xf32>,
    %c0_18 = arith.constant 0 : index
    %c0_19 = arith.constant 0 : index
    %c0_20 = arith.constant 0 : index
    %c0_21 = arith.constant 0 : index
    %30 = vector.load %arg9[%c0_18, %c0_19, %c0_20, %c0_21] : memref<5x5x5x512xf32, #tpu.memory_space<vmem>>, vector<4x4x4x64xf32>
    %31 = vector.shape_cast %30 : vector<4x4x4x64xf32> to vector<64x64xf32>
    %c0_22 = arith.constant 0 : index
    %c0_23 = arith.constant 0 : index
    %c0_24 = arith.constant 0 : index
    %c64 = arith.constant 64 : index
    %32 = vector.load %arg9[%c0_22, %c0_23, %c0_24, %c64] : memref<5x5x5x512xf32, #tpu.memory_space<vmem>>, vector<4x4x4x64xf32>
    %33 = vector.shape_cast %32 : vector<4x4x4x64xf32> to vector<64x64xf32>
    %c0_25 = arith.constant 0 : index
    %c0_26 = arith.constant 0 : index
    %c0_27 = arith.constant 0 : index
    %c128 = arith.constant 128 : index
    %34 = vector.load %arg9[%c0_25, %c0_26, %c0_27, %c128] : memref<5x5x5x512xf32, #tpu.memory_space<vmem>>, vector<4x4x4x64xf32>
    %35 = vector.shape_cast %34 : vector<4x4x4x64xf32> to vector<64x64xf32>
    %c0_28 = arith.constant 0 : index
    %c0_29 = arith.constant 0 : index
    %c0_30 = arith.constant 0 : index
    %c192 = arith.constant 192 : index
    %36 = vector.load %arg9[%c0_28, %c0_29, %c0_30, %c192] : memref<5x5x5x512xf32, #tpu.memory_space<vmem>>, vector<4x4x4x64xf32>
    %37 = vector.shape_cast %36 : vector<4x4x4x64xf32> to vector<64x64xf32>
    %c0_31 = arith.constant 0 : index
    %c0_32 = arith.constant 0 : index
    %c0_33 = arith.constant 0 : index
    %c256 = arith.constant 256 : index
    %38 = vector.load %arg9[%c0_31, %c0_32, %c0_33, %c256] : memref<5x5x5x512xf32, #tpu.memory_space<vmem>>, vector<4x4x4x64xf32>
    %39 = vector.shape_cast %38 : vector<4x4x4x64xf32> to vector<64x64xf32>
    %c0_34 = arith.constant 0 : index
    %c0_35 = arith.constant 0 : index
    %c0_36 = arith.constant 0 : index
    %c320 = arith.constant 320 : index
    %40 = vector.load %arg9[%c0_34, %c0_35, %c0_36, %c320] : memref<5x5x5x512xf32, #tpu.memory_space<vmem>>, vector<4x4x4x64xf32>
    %41 = vector.shape_cast %40 : vector<4x4x4x64xf32> to vector<64x64xf32>
    %c0_37 = arith.constant 0 : index
    %c0_38 = arith.constant 0 : index
    %c0_39 = arith.constant 0 : index
    %c384 = arith.constant 384 : index
    %42 = vector.load %arg9[%c0_37, %c0_38, %c0_39, %c384] : memref<5x5x5x512xf32, #tpu.memory_space<vmem>>, vector<4x4x4x64xf32>
    %43 = vector.shape_cast %42 : vector<4x4x4x64xf32> to vector<64x64xf32>
    %c0_40 = arith.constant 0 : index
    %c0_41 = arith.constant 0 : index
    %c0_42 = arith.constant 0 : index
    %c448 = arith.constant 448 : index
    %44 = vector.load %arg9[%c0_40, %c0_41, %c0_42, %c448] : memref<5x5x5x512xf32, #tpu.memory_space<vmem>>, vector<4x4x4x64xf32>
    %45 = vector.shape_cast %44 : vector<4x4x4x64xf32> to vector<64x64xf32>
    %46 = tpu.concatenate %31, %33, %35, %37, %39, %41, %43, %45 in 1 : vector<64x64xf32>, vector<64x64xf32>, vector<64x64xf32>, vector<64x64xf32>, vector<64x64xf32>, vector<64x64xf32>, vector<64x64xf32>, vector<64x64xf32> -> vector<64x512xf32>
    %c0_43 = arith.constant 0 : index
    %c0_44 = arith.constant 0 : index
    %c1 = arith.constant 1 : index
    %c0_45 = arith.constant 0 : index
    %47 = vector.load %arg9[%c0_43, %c0_44, %c1, %c0_45] : memref<5x5x5x512xf32, #tpu.memory_space<vmem>>, vector<4x4x4x64xf32>
    %48 = vector.shape_cast %47 : vector<4x4x4x64xf32> to vector<64x64xf32>
    %c0_46 = arith.constant 0 : index
    %c0_47 = arith.constant 0 : index
    %c1_48 = arith.constant 1 : index
    %c128_49 = arith.constant 128 : index
    %49 = vector.load %arg9[%c0_46, %c0_47, %c1_48, %c128_49] : memref<5x5x5x512xf32, #tpu.memory_space<vmem>>, vector<4x4x4x64xf32>
    %50 = vector.shape_cast %49 : vector<4x4x4x64xf32> to vector<64x64xf32>
    %c0_50 = arith.constant 0 : index
    %c0_51 = arith.constant 0 : index
    %c1_52 = arith.constant 1 : index
    %c256_53 = arith.constant 256 : index
    %51 = vector.load %arg9[%c0_50, %c0_51, %c1_52, %c256_53] : memref<5x5x5x512xf32, #tpu.memory_space<vmem>>, vector<4x4x4x64xf32>
    %52 = vector.shape_cast %51 : vector<4x4x4x64xf32> to vector<64x64xf32>
    %c0_54 = arith.constant 0 : index
    %c0_55 = arith.constant 0 : index
    %c1_56 = arith.constant 1 : index
    %c384_57 = arith.constant 384 : index
    %53 = vector.load %arg9[%c0_54, %c0_55, %c1_56, %c384_57] : memref<5x5x5x512xf32, #tpu.memory_space<vmem>>, vector<4x4x4x64xf32>
    %54 = vector.shape_cast %53 : vector<4x4x4x64xf32> to vector<64x64xf32>
    %55 = tpu.concatenate %33, %48, %37, %50, %41, %52, %45, %54 in 1 : vector<64x64xf32>, vector<64x64xf32>, vector<64x64xf32>, vector<64x64xf32>, vector<64x64xf32>, vector<64x64xf32>, vector<64x64xf32>, vector<64x64xf32> -> vector<64x512xf32>
    %c0_58 = arith.constant 0 : index
    %c1_59 = arith.constant 1 : index
    %c0_60 = arith.constant 0 : index
    %c0_61 = arith.constant 0 : index
    %56 = vector.load %arg9[%c0_58, %c1_59, %c0_60, %c0_61] : memref<5x5x5x512xf32, #tpu.memory_space<vmem>>, vector<4x4x4x64xf32>
    %57 = vector.shape_cast %56 : vector<4x4x4x64xf32> to vector<64x64xf32>
    %c0_62 = arith.constant 0 : index
    %c1_63 = arith.constant 1 : index
    %c0_64 = arith.constant 0 : index
    %c64_65 = arith.constant 64 : index
    %58 = vector.load %arg9[%c0_62, %c1_63, %c0_64, %c64_65] : memref<5x5x5x512xf32, #tpu.memory_space<vmem>>, vector<4x4x4x64xf32>
    %59 = vector.shape_cast %58 : vector<4x4x4x64xf32> to vector<64x64xf32>
    %c0_66 = arith.constant 0 : index
    %c1_67 = arith.constant 1 : index
    %c0_68 = arith.constant 0 : index
    %c256_69 = arith.constant 256 : index
    %60 = vector.load %arg9[%c0_66, %c1_67, %c0_68, %c256_69] : memref<5x5x5x512xf32, #tpu.memory_space<vmem>>, vector<4x4x4x64xf32>
    %61 = vector.shape_cast %60 : vector<4x4x4x64xf32> to vector<64x64xf32>
    %c0_70 = arith.constant 0 : index
    %c1_71 = arith.constant 1 : index
    %c0_72 = arith.constant 0 : index
    %c320_73 = arith.constant 320 : index
    %62 = vector.load %arg9[%c0_70, %c1_71, %c0_72, %c320_73] : memref<5x5x5x512xf32, #tpu.memory_space<vmem>>, vector<4x4x4x64xf32>
    %63 = vector.shape_cast %62 : vector<4x4x4x64xf32> to vector<64x64xf32>
    %64 = tpu.concatenate %35, %37, %57, %59, %43, %45, %61, %63 in 1 : vector<64x64xf32>, vector<64x64xf32>, vector<64x64xf32>, vector<64x64xf32>, vector<64x64xf32>, vector<64x64xf32>, vector<64x64xf32>, vector<64x64xf32> -> vector<64x512xf32>
    %c0_74 = arith.constant 0 : index
    %c1_75 = arith.constant 1 : index
    %c1_76 = arith.constant 1 : index
    %c0_77 = arith.constant 0 : index
    %65 = vector.load %arg9[%c0_74, %c1_75, %c1_76, %c0_77] : memref<5x5x5x512xf32, #tpu.memory_space<vmem>>, vector<4x4x4x64xf32>
    %66 = vector.shape_cast %65 : vector<4x4x4x64xf32> to vector<64x64xf32>
    %c0_78 = arith.constant 0 : index
    %c1_79 = arith.constant 1 : index
    %c1_80 = arith.constant 1 : index
    %c256_81 = arith.constant 256 : index
    %67 = vector.load %arg9[%c0_78, %c1_79, %c1_80, %c256_81] : memref<5x5x5x512xf32, #tpu.memory_space<vmem>>, vector<4x4x4x64xf32>
    %68 = vector.shape_cast %67 : vector<4x4x4x64xf32> to vector<64x64xf32>
    %69 = tpu.concatenate %37, %50, %59, %66, %45, %54, %63, %68 in 1 : vector<64x64xf32>, vector<64x64xf32>, vector<64x64xf32>, vector<64x64xf32>, vector<64x64xf32>, vector<64x64xf32>, vector<64x64xf32>, vector<64x64xf32> -> vector<64x512xf32>
    %c1_82 = arith.constant 1 : index
    %c0_83 = arith.constant 0 : index
    %c0_84 = arith.constant 0 : index
    %c0_85 = arith.constant 0 : index
    %70 = vector.load %arg9[%c1_82, %c0_83, %c0_84, %c0_85] : memref<5x5x5x512xf32, #tpu.memory_space<vmem>>, vector<4x4x4x64xf32>
    %71 = vector.shape_cast %70 : vector<4x4x4x64xf32> to vector<64x64xf32>
    %c1_86 = arith.constant 1 : index
    %c0_87 = arith.constant 0 : index
    %c0_88 = arith.constant 0 : index
    %c64_89 = arith.constant 64 : index
    %72 = vector.load %arg9[%c1_86, %c0_87, %c0_88, %c64_89] : memref<5x5x5x512xf32, #tpu.memory_space<vmem>>, vector<4x4x4x64xf32>
    %73 = vector.shape_cast %72 : vector<4x4x4x64xf32> to vector<64x64xf32>
    %c1_90 = arith.constant 1 : index
    %c0_91 = arith.constant 0 : index
    %c0_92 = arith.constant 0 : index
    %c128_93 = arith.constant 128 : index
    %74 = vector.load %arg9[%c1_90, %c0_91, %c0_92, %c128_93] : memref<5x5x5x512xf32, #tpu.memory_space<vmem>>, vector<4x4x4x64xf32>
    %75 = vector.shape_cast %74 : vector<4x4x4x64xf32> to vector<64x64xf32>
    %c1_94 = arith.constant 1 : index
    %c0_95 = arith.constant 0 : index
    %c0_96 = arith.constant 0 : index
    %c192_97 = arith.constant 192 : index
    %76 = vector.load %arg9[%c1_94, %c0_95, %c0_96, %c192_97] : memref<5x5x5x512xf32, #tpu.memory_space<vmem>>, vector<4x4x4x64xf32>
    %77 = vector.shape_cast %76 : vector<4x4x4x64xf32> to vector<64x64xf32>
    %78 = tpu.concatenate %39, %41, %43, %45, %71, %73, %75, %77 in 1 : vector<64x64xf32>, vector<64x64xf32>, vector<64x64xf32>, vector<64x64xf32>, vector<64x64xf32>, vector<64x64xf32>, vector<64x64xf32>, vector<64x64xf32> -> vector<64x512xf32>
    %c1_98 = arith.constant 1 : index
    %c0_99 = arith.constant 0 : index
    %c1_100 = arith.constant 1 : index
    %c0_101 = arith.constant 0 : index
    %79 = vector.load %arg9[%c1_98, %c0_99, %c1_100, %c0_101] : memref<5x5x5x512xf32, #tpu.memory_space<vmem>>, vector<4x4x4x64xf32>
    %80 = vector.shape_cast %79 : vector<4x4x4x64xf32> to vector<64x64xf32>
    %c1_102 = arith.constant 1 : index
    %c0_103 = arith.constant 0 : index
    %c1_104 = arith.constant 1 : index
    %c128_105 = arith.constant 128 : index
    %81 = vector.load %arg9[%c1_102, %c0_103, %c1_104, %c128_105] : memref<5x5x5x512xf32, #tpu.memory_space<vmem>>, vector<4x4x4x64xf32>
    %82 = vector.shape_cast %81 : vector<4x4x4x64xf32> to vector<64x64xf32>
    %83 = tpu.concatenate %41, %52, %45, %54, %73, %80, %77, %82 in 1 : vector<64x64xf32>, vector<64x64xf32>, vector<64x64xf32>, vector<64x64xf32>, vector<64x64xf32>, vector<64x64xf32>, vector<64x64xf32>, vector<64x64xf32> -> vector<64x512xf32>
    %c1_106 = arith.constant 1 : index
    %c1_107 = arith.constant 1 : index
    %c0_108 = arith.constant 0 : index
    %c0_109 = arith.constant 0 : index
    %84 = vector.load %arg9[%c1_106, %c1_107, %c0_108, %c0_109] : memref<5x5x5x512xf32, #tpu.memory_space<vmem>>, vector<4x4x4x64xf32>
    %85 = vector.shape_cast %84 : vector<4x4x4x64xf32> to vector<64x64xf32>
    %c1_110 = arith.constant 1 : index
    %c1_111 = arith.constant 1 : index
    %c0_112 = arith.constant 0 : index
    %c64_113 = arith.constant 64 : index
    %86 = vector.load %arg9[%c1_110, %c1_111, %c0_112, %c64_113] : memref<5x5x5x512xf32, #tpu.memory_space<vmem>>, vector<4x4x4x64xf32>
    %87 = vector.shape_cast %86 : vector<4x4x4x64xf32> to vector<64x64xf32>
    %88 = tpu.concatenate %43, %45, %61, %63, %75, %77, %85, %87 in 1 : vector<64x64xf32>, vector<64x64xf32>, vector<64x64xf32>, vector<64x64xf32>, vector<64x64xf32>, vector<64x64xf32>, vector<64x64xf32>, vector<64x64xf32> -> vector<64x512xf32>
    %c1_114 = arith.constant 1 : index
    %c1_115 = arith.constant 1 : index
    %c1_116 = arith.constant 1 : index
    %c0_117 = arith.constant 0 : index
    %89 = vector.load %arg9[%c1_114, %c1_115, %c1_116, %c0_117] : memref<5x5x5x512xf32, #tpu.memory_space<vmem>>, vector<4x4x4x64xf32>
    %90 = vector.shape_cast %89 : vector<4x4x4x64xf32> to vector<64x64xf32>
    %91 = tpu.concatenate %45, %54, %63, %68, %77, %82, %87, %90 in 1 : vector<64x64xf32>, vector<64x64xf32>, vector<64x64xf32>, vector<64x64xf32>, vector<64x64xf32>, vector<64x64xf32>, vector<64x64xf32>, vector<64x64xf32> -> vector<64x512xf32>
    %92 = tpu.concatenate %46, %55, %64, %69, %78, %83, %88, %91 in 0 : vector<64x512xf32>, vector<64x512xf32>, vector<64x512xf32>, vector<64x512xf32>, vector<64x512xf32>, vector<64x512xf32>, vector<64x512xf32>, vector<64x512xf32> -> vector<512x512xf32>
    %c0_118 = arith.constant 0 : index
    %c0_119 = arith.constant 0 : index
    %93 = vector.load %arg4[%c0_118, %c0_119] : memref<512x256xf32, #tpu.memory_space<vmem>>, vector<512x256xf32>
    %cst_120 = arith.constant dense<0.000000e+00> : vector<512x256xf32>
    %94 = tpu.matmul %92, %93, %cst_120 {dimension_numbers = #tpu.dot_dimension_numbers<[1], [0], [0], [1], [0, 0, 1, 1], [], []>} : vector<512x512xf32>, vector<512x256xf32>, vector<512x256xf32> -> vector<512x256xf32>
    %c0_121 = arith.constant 0 : index
    %c0_122 = arith.constant 0 : index
    %95 = vector.load %arg5[%c0_121, %c0_122] : memref<1x256xf32, #tpu.memory_space<vmem>>, vector<1x256xf32>
    %96 = vector.broadcast %95 : vector<1x256xf32> to vector<512x256xf32>
    %97 = arith.addf %94, %96 : vector<512x256xf32>
    %cst_123 = arith.constant 0.000000e+00 : f32
    %98 = vector.broadcast %cst_123 : f32 to vector<512x256xf32>
    %99 = arith.maximumf %97, %98 : vector<512x256xf32>
    %c0_124 = arith.constant 0 : index
    %c0_125 = arith.constant 0 : index
    %100 = vector.load %arg6[%c0_124, %c0_125] : memref<24x256xf32, #tpu.memory_space<vmem>>, vector<24x256xf32>
    %cst_126 = arith.constant dense<0.000000e+00> : vector<24x512xf32>
    %101 = tpu.matmul %100, %99, %cst_126 {dimension_numbers = #tpu.dot_dimension_numbers<[1], [1], [0], [0], [0, 0, 1, 0], [], []>} : vector<24x256xf32>, vector<512x256xf32>, vector<24x512xf32> -> vector<24x512xf32>
    %c0_127 = arith.constant 0 : index
    %c0_128 = arith.constant 0 : index
    %102 = vector.load %arg7[%c0_127, %c0_128] : memref<24x1xf32, #tpu.memory_space<vmem>>, vector<24x1xf32>
    %103 = vector.broadcast %102 : vector<24x1xf32> to vector<24x512xf32>
    %104 = arith.addf %101, %103 : vector<24x512xf32>
    %105 = vector.shape_cast %104 : vector<24x512xf32> to vector<1x24x512xf32>
    %c0_129 = arith.constant 0 : index
    %c0_130 = arith.constant 0 : index
    %c0_131 = arith.constant 0 : index
    %106 = vector.load %arg8[%c0_129, %c0_130, %c0_131] : memref<1x24x512xf32, #tpu.memory_space<vmem>>, vector<1x24x512xf32>
    tpu.vector_store %arg8[%c0_129, %c0_130, %c0_131], %105 {strides = array<i32>} : memref<1x24x512xf32, #tpu.memory_space<vmem>>, vector<1x24x512xf32>,
    return
  }
  func.func @transform_0(%arg0: i32) -> (i32, i32, i32, i32, i32) {
    %c0_i32 = arith.constant 0 : i32
    %c0_i32_0 = arith.constant 0 : i32
    %c0_i32_1 = arith.constant 0 : i32
    %c0_i32_2 = arith.constant 0 : i32
    %c0_i32_3 = arith.constant 0 : i32
    return %arg0, %c0_i32, %c0_i32_0, %c0_i32_1, %c0_i32_2 : i32, i32, i32, i32, i32
  }
  func.func @transform_1(%arg0: i32) -> (i32, i32) {
    %c0_i32 = arith.constant 0 : i32
    %c0_i32_0 = arith.constant 0 : i32
    %c0_i32_1 = arith.constant 0 : i32
    return %c0_i32, %c0_i32_0 : i32, i32
  }
  func.func @transform_2(%arg0: i32) -> (i32, i32) {
    %c0_i32 = arith.constant 0 : i32
    %c0_i32_0 = arith.constant 0 : i32
    %c0_i32_1 = arith.constant 0 : i32
    return %c0_i32, %c0_i32_0 : i32, i32
  }
  func.func @transform_3(%arg0: i32) -> (i32, i32) {
    %c0_i32 = arith.constant 0 : i32
    %c0_i32_0 = arith.constant 0 : i32
    %c0_i32_1 = arith.constant 0 : i32
    return %c0_i32, %c0_i32_0 : i32, i32
  }
  func.func @transform_4(%arg0: i32) -> (i32, i32) {
    %c0_i32 = arith.constant 0 : i32
    %c0_i32_0 = arith.constant 0 : i32
    %c0_i32_1 = arith.constant 0 : i32
    return %c0_i32, %c0_i32_0 : i32, i32
  }
  func.func @transform_5(%arg0: i32) -> (i32, i32) {
    %c0_i32 = arith.constant 0 : i32
    %c0_i32_0 = arith.constant 0 : i32
    %c0_i32_1 = arith.constant 0 : i32
    return %c0_i32, %c0_i32_0 : i32, i32
  }
  func.func @transform_6(%arg0: i32) -> (i32, i32) {
    %c0_i32 = arith.constant 0 : i32
    %c0_i32_0 = arith.constant 0 : i32
    %c0_i32_1 = arith.constant 0 : i32
    return %c0_i32, %c0_i32_0 : i32, i32
  }
  func.func @transform_7(%arg0: i32) -> (i32, i32, i32) {
    %c0_i32 = arith.constant 0 : i32
    %c0_i32_0 = arith.constant 0 : i32
    %c0_i32_1 = arith.constant 0 : i32
    return %arg0, %c0_i32, %c0_i32_0 : i32, i32, i32
  }
}

</mosaic_0001>

<llo_original>
// kernel: tile.28
$region0: #{tile.28}
  #allocation2 [shape = 's32[1]{0}', space=sflag, size = 0x4, scoped, tag = 'scoped memory for tile.28']
  %s0 = inlined_call_operand.hbm [shape: f32[3], index: 0, kind: input, shape index: {}]
  %s1 = inlined_call_operand.vmem [shape: f32[8,3], index: 1, kind: output, shape index: {}]
  $region1: #{tile.28} parent=0
    #allocation0 [shape = 'u8[512]{0}', space=vmem, size = 0x400, scoped, tag = 'operand span for operand 0']
    #allocation1 [shape = 's32[1]{0}', space=sflag, size = 0x4, scoped, tag = 'scoped memory for tile.28']
    %2 = vsyncpa [#allocation1], 0
    // Predicated region
    $region2: #{tile.28} parent=1 // pred_check
      _
    $region3: #{tile.28} parent=1 // pred_check_branch
      %4 = sbr.rel (0) target = $region5
    $region4: #{tile.28} parent=1 // pred_region
      %s6 = ssub.s32 16, 16
      %7 = vsyncadd [#allocation1], %s6
      %s9 = sshll.u32 [#allocation0], 4
      %s10 = int_to_ptr.vmem [resolvable:$true] %s9
      %12 = dma.hbm_to_vmem [thread:$0]  %s0, 16, %s10, [#allocation1]
    $region5: #{tile.28} parent=1 // pred_fallthru
      _
    // Predicated region
    $region6: #{tile.28} parent=1 // pred_check
      _
    $region7: #{tile.28} parent=1 // pred_check_branch
      %14 = sbr.rel (0) target = $region9
    $region8: #{tile.28} parent=1 // pred_region
      %15 = dma.done [#allocation1], 16
    $region9: #{tile.28} parent=1 // pred_fallthru
      _
    %v16 = vld [vmem:[#allocation0] ss:$0 sm:$0xff]
    %17 = vst [vmem:[%s1] sm:$0xff] %v16
    %18 = vsyncpa [#allocation1], 1

// kernel: tile.18
$region0: #{tile.18}
  #allocation2 [shape = 's32[1]{0}', space=sflag, size = 0x4, scoped, tag = 'scoped memory for tile.18']
  %s0 = inlined_call_operand.hbm [shape: f32[64], index: 0, kind: input, shape index: {}]
  %s1 = inlined_call_operand.vmem [shape: f32[8,64], index: 1, kind: output, shape index: {}]
  $region1: #{tile.18} parent=0
    #allocation0 [shape = 'u8[512]{0}', space=vmem, size = 0x400, scoped, tag = 'operand span for operand 0']
    #allocation1 [shape = 's32[1]{0}', space=sflag, size = 0x4, scoped, tag = 'scoped memory for tile.18']
    %2 = vsyncpa [#allocation1], 0
    // Predicated region
    $region2: #{tile.18} parent=1 // pred_check
      _
    $region3: #{tile.18} parent=1 // pred_check_branch
      %4 = sbr.rel (0) target = $region5
    $region4: #{tile.18} parent=1 // pred_region
      %s6 = ssub.s32 16, 16
      %7 = vsyncadd [#allocation1], %s6
      %s9 = sshll.u32 [#allocation0], 4
      %s10 = int_to_ptr.vmem [resolvable:$true] %s9
      %12 = dma.hbm_to_vmem [thread:$0]  %s0, 16, %s10, [#allocation1]
    $region5: #{tile.18} parent=1 // pred_fallthru
      _
    // Predicated region
    $region6: #{tile.18} parent=1 // pred_check
      _
    $region7: #{tile.18} parent=1 // pred_check_branch
      %14 = sbr.rel (0) target = $region9
    $region8: #{tile.18} parent=1 // pred_region
      %15 = dma.done [#allocation1], 16
    $region9: #{tile.18} parent=1 // pred_fallthru
      _
    %v16 = vld [vmem:[#allocation0] ss:$0 sm:$0xff]
    %17 = vst [vmem:[%s1] sm:$0xff] %v16
    %18 = vsyncpa [#allocation1], 1

// kernel: tile.24
$region0: #{tile.24}
  %s0 = inlined_call_operand.vmem [shape: f32[8,32], index: 0, kind: input, shape index: {}]
  %s1 = inlined_call_operand.vmem [shape: f32[1,256], index: 1, kind: output, shape index: {}]
  $region1: #{tile.24} parent=0
    #allocation0 [shape = 'u8[8192]{0}', space=vmem, size = 0x2000, scoped, tag = 'scoped mem for output reshape']
    %s2 = smov 3
    %v3 = vld [vmem:[%s0] ss:$4 sm:%s2]
    %vm4 = vcmask 261120
    %5 = vst.msk [vmem:[#allocation0] ss:$8 sm:$0x3] %vm4, %v3
    %s6 = scalar_lea.vmem %s0, 3
    %s7 = smov 3
    %v8 = vld [vmem:[%s6] ss:$4 sm:%s7]
    %9 = vrot.lane.b32.xlu0 %v8, 96
    %v10 = vpop.permute.xlu0 %9
    %vm11 = vcmask 1048320
    %12 = vst.msk [vmem:[#allocation0] ss:$8 sm:$0x3] %vm11, %v10
    %s13 = scalar_lea.vmem %s0, 2
    %s14 = smov 3
    %v15 = vld [vmem:[%s13] ss:$4 sm:%s14]
    %16 = vrot.lane.b32.xlu0 %v15, 64
    %v17 = vpop.permute.xlu0 %16
    %vm18 = vcmask 785920
    %19 = vst.msk [vmem:[#allocation0] ss:$8 sm:$0x3] %vm18, %v17
    %s20 = scalar_lea.vmem %s0, 1
    %s21 = smov 3
    %v22 = vld [vmem:[%s20] ss:$4 sm:%s21]
    %23 = vrot.lane.b32.xlu0 %v22, 32
    %v24 = vpop.permute.xlu0 %23
    %vm25 = vcmask 523520
    %26 = vst.msk [vmem:[#allocation0] ss:$8 sm:$0x3] %vm25, %v24
    %s28 = sshllo.u32 0, 1
    %v30 = vld [vmem:[#allocation0] sm:%s28]
    %s31 = sshllo.u32 0, 1
    %32 = vst [vmem:[%s1] sm:%s31] %v30
    %s33 = scalar_lea.vmem [#allocation0], 8
    %v34 = vld [vmem:[%s33] sm:%s28]
    %s35 = sshllo.u32 0, 1
    %s36 = scalar_lea.vmem %s1, 1
    %37 = vst [vmem:[%s36] sm:%s35] %v34

// kernel: tile.19
$region0: #{tile.19}
  %s0 = inlined_call_operand.vmem [shape: f32[8,64], index: 0, kind: input, shape index: {}]
  %s1 = inlined_call_operand.vmem [shape: f32[1,512], index: 1, kind: output, shape index: {}]
  $region1: #{tile.19} parent=0
    #allocation0 [shape = 'u8[16384]{0}', space=vmem, size = 0x4000, scoped, tag = 'scoped mem for output reshape']
    %v2 = vld [vmem:[%s0] ss:$2 sm:$0xf]
    %vm3 = vcmask 523264
    %4 = vst.msk [vmem:[#allocation0] ss:$8 sm:$0xf] %vm3, %v2
    %s5 = scalar_lea.vmem %s0, 1
    %v6 = vld [vmem:[%s5] ss:$2 sm:$0xf]
    %7 = vrot.lane.b32.xlu0 %v6, 64
    %v8 = vpop.permute.xlu0 %7
    %vm9 = vcmask 1048064
    %10 = vst.msk [vmem:[#allocation0] ss:$8 sm:$0xf] %vm9, %v8
    %s12 = sshllo.u32 0, 1
    %v14 = vld [vmem:[#allocation0] sm:%s12]
    %s15 = sshllo.u32 0, 1
    %16 = vst [vmem:[%s1] sm:%s15] %v14
    %s17 = scalar_lea.vmem [#allocation0], 8
    %v18 = vld [vmem:[%s17] sm:%s12]
    %s19 = sshllo.u32 0, 1
    %s20 = scalar_lea.vmem %s1, 1
    %21 = vst [vmem:[%s20] sm:%s19] %v18
    %s22 = scalar_lea.vmem [#allocation0], 16
    %v23 = vld [vmem:[%s22] sm:%s12]
    %s24 = sshllo.u32 0, 1
    %s25 = smul.addr 1, 2
    %s26 = scalar_lea.vmem %s1, %s25
    %27 = vst [vmem:[%s26] sm:%s24] %v23
    %s28 = scalar_lea.vmem [#allocation0], 24
    %v29 = vld [vmem:[%s28] sm:%s12]
    %s30 = sshllo.u32 0, 1
    %s31 = smul.addr 1, 3
    %s32 = scalar_lea.vmem %s1, %s31
    %33 = vst [vmem:[%s32] sm:%s30] %v29

// kernel: tile.23
$region0: #{tile.23}
  #allocation2 [shape = 's32[1]{0}', space=sflag, size = 0x4, scoped, tag = 'scoped memory for tile.23']
  %s0 = inlined_call_operand.hbm [shape: f32[32], index: 0, kind: input, shape index: {}]
  %s1 = inlined_call_operand.vmem [shape: f32[8,32], index: 1, kind: output, shape index: {}]
  $region1: #{tile.23} parent=0
    #allocation0 [shape = 'u8[512]{0}', space=vmem, size = 0x400, scoped, tag = 'operand span for operand 0']
    #allocation1 [shape = 's32[1]{0}', space=sflag, size = 0x4, scoped, tag = 'scoped memory for tile.23']
    %2 = vsyncpa [#allocation1], 0
    // Predicated region
    $region2: #{tile.23} parent=1 // pred_check
      _
    $region3: #{tile.23} parent=1 // pred_check_branch
      %4 = sbr.rel (0) target = $region5
    $region4: #{tile.23} parent=1 // pred_region
      %s6 = ssub.s32 16, 16
      %7 = vsyncadd [#allocation1], %s6
      %s9 = sshll.u32 [#allocation0], 4
      %s10 = int_to_ptr.vmem [resolvable:$true] %s9
      %12 = dma.hbm_to_vmem [thread:$0]  %s0, 16, %s10, [#allocation1]
    $region5: #{tile.23} parent=1 // pred_fallthru
      _
    // Predicated region
    $region6: #{tile.23} parent=1 // pred_check
      _
    $region7: #{tile.23} parent=1 // pred_check_branch
      %14 = sbr.rel (0) target = $region9
    $region8: #{tile.23} parent=1 // pred_region
      %15 = dma.done [#allocation1], 16
    $region9: #{tile.23} parent=1 // pred_fallthru
      _
    %v16 = vld [vmem:[#allocation0] ss:$0 sm:$0xff]
    %17 = vst [vmem:[%s1] sm:$0xff] %v16
    %18 = vsyncpa [#allocation1], 1

// kernel: tile.0
$region0: #{tile.0}
  %s0 = inlined_call_operand.vmem [shape: f32[8,3], index: 0, kind: input, shape index: {}]
  %s1 = inlined_call_operand.vmem [shape: f32[24,1], index: 1, kind: output, shape index: {}]
  %v2 = vld [vmem:[%s0] sm:$0xff]
  %vm3 = vcmask 7168
  %4 = vst.msk [vmem:[%s1] ss:$3 sm:$0xff] %vm3, %v2
  %v5 = vld [vmem:[%s0] sm:$0xff]
  %6 = vrot.lane.b32.xlu0 %v5, 127
  %v7 = vpop.permute.xlu0 %6
  %vm8 = vcmask 7168
  %s9 = scalar_lea.vmem %s1, 1
  %10 = vst.msk [vmem:[%s9] ss:$3 sm:$0xff] %vm8, %v7
  %v11 = vld [vmem:[%s0] sm:$0xff]
  %12 = vrot.lane.b32.xlu0 %v11, 126
  %v13 = vpop.permute.xlu0 %12
  %vm14 = vcmask 7168
  %s15 = scalar_lea.vmem %s1, 2
  %16 = vst.msk [vmem:[%s15] ss:$3 sm:$0xff] %vm14, %v13

// kernel: final_projection_forward.1
$region0: #{final_projection_forward.1}
  #allocation0 [shape = 'u32[]', space=smem, size = 0x4, offset = 0x4, fixed_abs, tag = 'smem constant byte address 0x4 - core index']
  #allocation1 [shape = 'u32[144,128]{1,0:T(1,128)}', space=vmem, size = 0x12000, scoped, tag = 'internal scratch']
  #allocation2 [shape = 'f32[5,5,5,512]{3,2,1,0:T(8,128)}', space=vmem, size = 0x64000, scoped, tag = 'scratch operand']
  %s0 = inlined_call_operand.vmem [shape: f32[2,5,5,5,40], index: 0, kind: input, shape index: {}]
  %s1 = inlined_call_operand.vmem [shape: f32[320,512], index: 1, kind: input, shape index: {}]
  %s2 = inlined_call_operand.vmem [shape: f32[1,512], index: 2, kind: input, shape index: {}]
  %s3 = inlined_call_operand.vmem [shape: f32[512,256], index: 3, kind: input, shape index: {}]
  %s4 = inlined_call_operand.vmem [shape: f32[1,256], index: 4, kind: input, shape index: {}]
  %s5 = inlined_call_operand.vmem [shape: f32[24,256], index: 5, kind: input, shape index: {}]
  %s6 = inlined_call_operand.vmem [shape: f32[24,1], index: 6, kind: input, shape index: {}]
  %s7 = inlined_call_operand.vmem [shape: f32[2,24,512], index: 7, kind: output, shape index: {}]
  %s8 = sld [smem:[#allocation0]]
  $region61: #{final_projection_forward.1} parent=0
    _
  %s10 = ssub.s32 1, %s8
  %s11 = scalar_select 0, %s10, %s8
  loop: start=0, step=1, limit=4
  $region2: #{final_projection_forward.1} parent=0 // loop_pre_header
    _
  $region3: #{final_projection_forward.1} parent=0 // loop_header
    %s13 = sphi 0, %s17
    %p14 = scmp.ge.s32.totalorder %s13, 4
    %s23 = sphi 0, %s25
    %s26 = sphi 0, %s23
    %s27 = sphi 0, %s26
    %s43 = sphi 0, %s27
    %s47 = sphi 0, %s47
    %s49 = sphi 0, %s47
    %s50 = sphi 0, %s49
    %s64 = sphi 0, %s50
    %s68 = sphi 0, %s68
    %s70 = sphi 0, %s68
    %s71 = sphi 0, %s70
    %s85 = sphi 0, %s71
    %s89 = sphi 0, %s89
    %s91 = sphi 0, %s89
    %s92 = sphi 0, %s91
    %s106 = sphi 0, %s92
    %s110 = sphi 0, %s110
    %s112 = sphi 0, %s110
    %s113 = sphi 0, %s112
    %s127 = sphi 0, %s113
    %s131 = sphi 0, %s131
    %s133 = sphi 0, %s131
    %s134 = sphi 0, %s133
    %s148 = sphi 0, %s134
    %s152 = sphi 0, %s152
    %s154 = sphi 0, %s152
    %s155 = sphi 0, %s154
    %s169 = sphi 0, %s155
    %s175 = sphi 0, %s177
    %s178 = sphi 0, %s175
    %s179 = sphi 0, %s178
    %s195 = sphi 0, %s179
  $region4: #{final_projection_forward.1} parent=0 // loop_header_branch
    %16 = sbr.rel (%p14) target = $region8
  $region5: #{final_projection_forward.1} parent=0 // loop_body
    %s18 = ssub.s32 %s13, 1
    %s19 = ssub.s32 %s13, 2
    %s20 = sadd.s32 %s13, 1
    %s21 = ssub.s32 %s13, %s20
    %p22 = scmp.eq.s32.totalorder %s21, 0
    %s24 = sadd.s32 %s23, 1
    %s25 = scalar_select %p22, %s23, %s24
    %p28 = pneg %p22
    %p29 = scmp.eq.s32.totalorder %s13, 1
    %p30 = por %p28, %p29
    %p31 = scmp.ne.s32.totalorder %s23, %s26
    %p32 = scmp.eq.s32.totalorder %s13, 0
    %p33 = por %p31, %p32
    %p34 = scmp.ne.s32.totalorder %s23, %s26
    %p35 = scmp.eq.s32.totalorder %s18, 1
    %p36 = por %p34, %p35
    %p37 = scmp.ne.s32.totalorder %s26, %s27
    %p38 = scmp.eq.s32.totalorder %s18, 0
    %p39 = por %p37, %p38
    %p40 = scmp.ne.s32.totalorder %s26, %s27
    %p41 = scmp.eq.s32.totalorder %s19, 1
    %p42 = por %p40, %p41
    %p44 = scmp.ne.s32.totalorder %s27, %s43
    %p45 = scmp.eq.s32.totalorder %s19, 0
    %p46 = por %p44, %p45
    %s48 = sadd.s32 %s47, 1
    %p51 = scmp.eq.s32.totalorder %s13, 1
    %p52 = scmp.ne.s32.totalorder %s47, %s49
    %p53 = scmp.eq.s32.totalorder %s13, 0
    %p54 = por %p52, %p53
    %p55 = scmp.ne.s32.totalorder %s47, %s49
    %p56 = scmp.eq.s32.totalorder %s18, 1
    %p57 = por %p55, %p56
    %p58 = scmp.ne.s32.totalorder %s49, %s50
    %p59 = scmp.eq.s32.totalorder %s18, 0
    %p60 = por %p58, %p59
    %p61 = scmp.ne.s32.totalorder %s49, %s50
    %p62 = scmp.eq.s32.totalorder %s19, 1
    %p63 = por %p61, %p62
    %p65 = scmp.ne.s32.totalorder %s50, %s64
    %p66 = scmp.eq.s32.totalorder %s19, 0
    %p67 = por %p65, %p66
    %s69 = sadd.s32 %s68, 1
    %p72 = scmp.eq.s32.totalorder %s13, 1
    %p73 = scmp.ne.s32.totalorder %s68, %s70
    %p74 = scmp.eq.s32.totalorder %s13, 0
    %p75 = por %p73, %p74
    %p76 = scmp.ne.s32.totalorder %s68, %s70
    %p77 = scmp.eq.s32.totalorder %s18, 1
    %p78 = por %p76, %p77
    %p79 = scmp.ne.s32.totalorder %s70, %s71
    %p80 = scmp.eq.s32.totalorder %s18, 0
    %p81 = por %p79, %p80
    %p82 = scmp.ne.s32.totalorder %s70, %s71
    %p83 = scmp.eq.s32.totalorder %s19, 1
    %p84 = por %p82, %p83
    %p86 = scmp.ne.s32.totalorder %s71, %s85
    %p87 = scmp.eq.s32.totalorder %s19, 0
    %p88 = por %p86, %p87
    %s90 = sadd.s32 %s89, 1
    %p93 = scmp.eq.s32.totalorder %s13, 1
    %p94 = scmp.ne.s32.totalorder %s89, %s91
    %p95 = scmp.eq.s32.totalorder %s13, 0
    %p96 = por %p94, %p95
    %p97 = scmp.ne.s32.totalorder %s89, %s91
    %p98 = scmp.eq.s32.totalorder %s18, 1
    %p99 = por %p97, %p98
    %p100 = scmp.ne.s32.totalorder %s91, %s92
    %p101 = scmp.eq.s32.totalorder %s18, 0
    %p102 = por %p100, %p101
    %p103 = scmp.ne.s32.totalorder %s91, %s92
    %p104 = scmp.eq.s32.totalorder %s19, 1
    %p105 = por %p103, %p104
    %p107 = scmp.ne.s32.totalorder %s92, %s106
    %p108 = scmp.eq.s32.totalorder %s19, 0
    %p109 = por %p107, %p108
    %s111 = sadd.s32 %s110, 1
    %p114 = scmp.eq.s32.totalorder %s13, 1
    %p115 = scmp.ne.s32.totalorder %s110, %s112
    %p116 = scmp.eq.s32.totalorder %s13, 0
    %p117 = por %p115, %p116
    %p118 = scmp.ne.s32.totalorder %s110, %s112
    %p119 = scmp.eq.s32.totalorder %s18, 1
    %p120 = por %p118, %p119
    %p121 = scmp.ne.s32.totalorder %s112, %s113
    %p122 = scmp.eq.s32.totalorder %s18, 0
    %p123 = por %p121, %p122
    %p124 = scmp.ne.s32.totalorder %s112, %s113
    %p125 = scmp.eq.s32.totalorder %s19, 1
    %p126 = por %p124, %p125
    %p128 = scmp.ne.s32.totalorder %s113, %s127
    %p129 = scmp.eq.s32.totalorder %s19, 0
    %p130 = por %p128, %p129
    %s132 = sadd.s32 %s131, 1
    %p135 = scmp.eq.s32.totalorder %s13, 1
    %p136 = scmp.ne.s32.totalorder %s131, %s133
    %p137 = scmp.eq.s32.totalorder %s13, 0
    %p138 = por %p136, %p137
    %p139 = scmp.ne.s32.totalorder %s131, %s133
    %p140 = scmp.eq.s32.totalorder %s18, 1
    %p141 = por %p139, %p140
    %p142 = scmp.ne.s32.totalorder %s133, %s134
    %p143 = scmp.eq.s32.totalorder %s18, 0
    %p144 = por %p142, %p143
    %p145 = scmp.ne.s32.totalorder %s133, %s134
    %p146 = scmp.eq.s32.totalorder %s19, 1
    %p147 = por %p145, %p146
    %p149 = scmp.ne.s32.totalorder %s134, %s148
    %p150 = scmp.eq.s32.totalorder %s19, 0
    %p151 = por %p149, %p150
    %s153 = sadd.s32 %s152, 1
    %p156 = scmp.eq.s32.totalorder %s13, 1
    %p157 = scmp.ne.s32.totalorder %s152, %s154
    %p158 = scmp.eq.s32.totalorder %s13, 0
    %p159 = por %p157, %p158
    %p160 = scmp.ne.s32.totalorder %s152, %s154
    %p161 = scmp.eq.s32.totalorder %s18, 1
    %p162 = por %p160, %p161
    %p163 = scmp.ne.s32.totalorder %s154, %s155
    %p164 = scmp.eq.s32.totalorder %s18, 0
    %p165 = por %p163, %p164
    %p166 = scmp.ne.s32.totalorder %s154, %s155
    %p167 = scmp.eq.s32.totalorder %s19, 1
    %p168 = por %p166, %p167
    %p170 = scmp.ne.s32.totalorder %s155, %s169
    %p171 = scmp.eq.s32.totalorder %s19, 0
    %p172 = por %p170, %p171
    %s173 = ssub.s32 %s13, %s20
    %p174 = scmp.eq.s32.totalorder %s173, 0
    %s176 = sadd.s32 %s175, 1
    %s177 = scalar_select %p174, %s175, %s176
    %p180 = pneg %p174
    %p181 = scmp.eq.s32.totalorder %s13, 1
    %p182 = por %p180, %p181
    %p183 = scmp.ne.s32.totalorder %s175, %s178
    %p184 = scmp.eq.s32.totalorder %s13, 0
    %p185 = por %p183, %p184
    %p186 = scmp.ne.s32.totalorder %s175, %s178
    %p187 = scmp.eq.s32.totalorder %s18, 1
    %p188 = por %p186, %p187
    %p189 = scmp.ne.s32.totalorder %s178, %s179
    %p190 = scmp.eq.s32.totalorder %s18, 0
    %p191 = por %p189, %p190
    %p192 = scmp.ne.s32.totalorder %s178, %s179
    %p193 = scmp.eq.s32.totalorder %s19, 1
    %p194 = por %p192, %p193
    %p196 = scmp.ne.s32.totalorder %s179, %s195
    %p197 = scmp.eq.s32.totalorder %s19, 0
    %p198 = por %p196, %p197
    %p199 = scmp.le.s32.totalorder 1, %s13
    %p200 = scmp.lt.s32.totalorder %s13, 3
    %p201 = pnand %p199, %p200
    %p202 = pneg %p201
    // Predicated region
    $region9: #{final_projection_forward.1} parent=5 // pred_check
      _
    $region10: #{final_projection_forward.1} parent=5 // pred_check_branch
      %204 = sbr.rel (%p201) target = $region12
    $region11: #{final_projection_forward.1} parent=5 // pred_region
      %s205 = ssub.s32 %s13, 1
      // Predicated region
      $region13: #{final_projection_forward.1} parent=11 // pred_check
        %p206 = pneg %p60
      $region14: #{final_projection_forward.1} parent=11 // pred_check_branch
        %208 = sbr.rel (%p206) target = $region16
      $region15: #{final_projection_forward.1} parent=11 // pred_region
        _
      $region16: #{final_projection_forward.1} parent=11 // pred_fallthru
        _
      // Predicated region
      $region17: #{final_projection_forward.1} parent=11 // pred_check
        %p209 = pneg %p81
      $region18: #{final_projection_forward.1} parent=11 // pred_check_branch
        %211 = sbr.rel (%p209) target = $region20
      $region19: #{final_projection_forward.1} parent=11 // pred_region
        _
      $region20: #{final_projection_forward.1} parent=11 // pred_fallthru
        _
      // Predicated region
      $region21: #{final_projection_forward.1} parent=11 // pred_check
        %p212 = pneg %p102
      $region22: #{final_projection_forward.1} parent=11 // pred_check_branch
        %214 = sbr.rel (%p212) target = $region24
      $region23: #{final_projection_forward.1} parent=11 // pred_region
        _
      $region24: #{final_projection_forward.1} parent=11 // pred_fallthru
        _
      // Predicated region
      $region25: #{final_projection_forward.1} parent=11 // pred_check
        %p215 = pneg %p123
      $region26: #{final_projection_forward.1} parent=11 // pred_check_branch
        %217 = sbr.rel (%p215) target = $region28
      $region27: #{final_projection_forward.1} parent=11 // pred_region
        _
      $region28: #{final_projection_forward.1} parent=11 // pred_fallthru
        _
      // Predicated region
      $region29: #{final_projection_forward.1} parent=11 // pred_check
        %p218 = pneg %p144
      $region30: #{final_projection_forward.1} parent=11 // pred_check_branch
        %220 = sbr.rel (%p218) target = $region32
      $region31: #{final_projection_forward.1} parent=11 // pred_region
        _
      $region32: #{final_projection_forward.1} parent=11 // pred_fallthru
        _
      // Predicated region
      $region33: #{final_projection_forward.1} parent=11 // pred_check
        %p221 = pneg %p165
      $region34: #{final_projection_forward.1} parent=11 // pred_check_branch
        %223 = sbr.rel (%p221) target = $region36
      $region35: #{final_projection_forward.1} parent=11 // pred_region
        _
      $region36: #{final_projection_forward.1} parent=11 // pred_fallthru
        _
    $region12: #{final_projection_forward.1} parent=5 // pred_fallthru
      _
    %p224 = scmp.lt.s32.totalorder %s13, 2
    // Predicated region
    $region37: #{final_projection_forward.1} parent=5 // pred_check
      %p225 = pneg %p224
    $region38: #{final_projection_forward.1} parent=5 // pred_check_branch
      %227 = sbr.rel (%p225) target = $region40
    $region39: #{final_projection_forward.1} parent=5 // pred_region
      // Predicated region
      $region41: #{final_projection_forward.1} parent=39 // pred_check
        %p228 = pneg %p33
      $region42: #{final_projection_forward.1} parent=39 // pred_check_branch
        %230 = sbr.rel (%p228) target = $region44
      $region43: #{final_projection_forward.1} parent=39 // pred_region
        %p231 = scmp.lt.s32.totalorder %s13, 1
        %s232 = scalar_select %p231, %s13, 1
        %s233 = smul.addr %s232, 25
        %s234 = smul.addr %s233, 8
        %s235 = scalar_lea.vmem %s0, %s234
      $region44: #{final_projection_forward.1} parent=39 // pred_fallthru
        _
    $region40: #{final_projection_forward.1} parent=5 // pred_fallthru
      _
    %p236 = scmp.le.s32.totalorder 1, %s13
    %p237 = scmp.lt.s32.totalorder %s13, 3
    %p238 = pnand %p236, %p237
    %p239 = pneg %p238
    // Predicated region
    $region45: #{final_projection_forward.1} parent=5 // pred_check
      _
    $region46: #{final_projection_forward.1} parent=5 // pred_check_branch
      %241 = sbr.rel (%p238) target = $region48
    $region47: #{final_projection_forward.1} parent=5 // pred_region
      %s242 = ssub.s32 %s13, 1
      %p243 = scmp.lt.s32.totalorder %s18, 1
      %s244 = scalar_select %p243, %s18, 1
      %s245 = smul.addr %s244, 25
      %s246 = smul.addr %s245, 8
      %s247 = scalar_lea.vmem %s0, %s246
      %p248 = pneg %p39
      %p249 = pneg %p36
      %p250 = pneg %p60
      %p251 = pneg %p57
      %p252 = pneg %p81
      %p253 = pneg %p78
      %p254 = pneg %p102
      %p255 = pneg %p99
      %p256 = pneg %p123
      %p257 = pneg %p120
      %p258 = pneg %p144
      %p259 = pneg %p141
      %p260 = pneg %p165
      %p261 = pneg %p162
      %p262 = pneg %p191
      %p263 = pneg %p188
      %p264 = scmp.lt.s32.totalorder %s18, 1
      %s265 = scalar_select %p264, %s18, 1
      %s266 = smul.addr %s265, 12
      %s267 = smul.addr %s266, 8
      %s268 = scalar_lea.vmem %s7, %s267
      %p269 = scmp.lt.s32.totalorder %s18, 1
      %s270 = scalar_select %p269, %s18, 1
      %s271 = smul.addr %s270, 25
      %s272 = smul.addr %s271, 8
      %s273 = scalar_lea.vmem %s0, %s272
      %p274 = scmp.lt.s32.totalorder %s18, 1
      %s275 = scalar_select %p274, %s18, 1
      %s276 = smul.addr %s275, 12
      %s277 = smul.addr %s276, 8
      %s278 = scalar_lea.vmem %s7, %s277
      %v279 = vld [vmem:[%s273] sm:$0x1f]
      %v280 = vld [vmem:[%s273 + $0x8] sm:$0x1f]
      %v281 = vld [vmem:[%s273 + $0x10] sm:$0x1f]
      %v282 = vld [vmem:[%s273 + $0x18] sm:$0x1f]
      %v283 = vld [vmem:[%s273 + $0x20] sm:$0x1f]
      %v284 = vld [vmem:[%s273 + $0x28] sm:$0x1f]
      %v285 = vld [vmem:[%s273 + $0x30] sm:$0x1f]
      %v286 = vld [vmem:[%s273 + $0x38] sm:$0x1f]
      %v287 = vld [vmem:[%s273 + $0x40] sm:$0x1f]
      %v288 = vld [vmem:[%s273 + $0x48] sm:$0x1f]
      %v289 = vld [vmem:[%s273 + $0x50] sm:$0x1f]
      %v290 = vld [vmem:[%s273 + $0x58] sm:$0x1f]
      %v291 = vld [vmem:[%s273 + $0x60] sm:$0x1f]
      %v292 = vld [vmem:[%s273 + $0x68] sm:$0x1f]
      %v293 = vld [vmem:[%s273 + $0x70] sm:$0x1f]
      %v294 = vld [vmem:[%s273 + $0x78] sm:$0x1f]
      %v295 = vld [vmem:[%s273 + $0x80] sm:$0x1f]
      %v296 = vld [vmem:[%s273 + $0x88] sm:$0x1f]
      %v297 = vld [vmem:[%s273 + $0x90] sm:$0x1f]
      %v298 = vld [vmem:[%s273 + $0x98] sm:$0x1f]
      %v299 = vld [vmem:[%s273 + $0xa0] sm:$0x1f]
      %v300 = vld [vmem:[%s273 + $0xa8] sm:$0x1f]
      %v301 = vld [vmem:[%s273 + $0xb0] sm:$0x1f]
      %v302 = vld [vmem:[%s273 + $0xb8] sm:$0x1f]
      %v303 = vld [vmem:[%s273 + $0xc0] sm:$0x1f]
      %v320 = vcombine.high %v279, %v279
      %v321 = vcombine.high %v280, %v280
      %v322 = vcombine.high %v281, %v281
      %v323 = vcombine.high %v282, %v282
      %v324 = vcombine.high %v284, %v284
      %v325 = vcombine.high %v285, %v285
      %v326 = vcombine.high %v286, %v286
      %v327 = vcombine.high %v287, %v287
      %v328 = vcombine.high %v289, %v289
      %v329 = vcombine.high %v290, %v290
      %v330 = vcombine.high %v291, %v291
      %v331 = vcombine.high %v292, %v292
      %v332 = vcombine.high %v294, %v294
      %v333 = vcombine.high %v295, %v295
      %v334 = vcombine.high %v296, %v296
      %v335 = vcombine.high %v297, %v297
      %vm336 = vcmask 1042432
      %vm337 = vcmask 1046532
      %vm338 = vmor %vm336, %vm337
      %v339 = vrot.slane %v279, 5
      %v340 = vrot.slane %v339, 4
      %v341 = vrot.slane %v320, 5
      %v342 = vsel %vm338, %v340, %v341
      %v343 = vrot.slane %v280, 5
      %v344 = vrot.slane %v343, 4
      %v345 = vrot.slane %v321, 5
      %v346 = vsel %vm338, %v344, %v345
      %v347 = vrot.slane %v281, 5
      %v348 = vrot.slane %v347, 4
      %v349 = vrot.slane %v322, 5
      %v350 = vsel %vm338, %v348, %v349
      %v351 = vrot.slane %v282, 5
      %v352 = vrot.slane %v351, 4
      %v353 = vrot.slane %v323, 5
      %v354 = vsel %vm338, %v352, %v353
      %v355 = vrot.slane %v284, 5
      %v356 = vrot.slane %v355, 4
      %v357 = vrot.slane %v324, 5
      %v358 = vsel %vm338, %v356, %v357
      %v359 = vrot.slane %v285, 5
      %v360 = vrot.slane %v359, 4
      %v361 = vrot.slane %v325, 5
      %v362 = vsel %vm338, %v360, %v361
      %v363 = vrot.slane %v286, 5
      %v364 = vrot.slane %v363, 4
      %v365 = vrot.slane %v326, 5
      %v366 = vsel %vm338, %v364, %v365
      %v367 = vrot.slane %v287, 5
      %v368 = vrot.slane %v367, 4
      %v369 = vrot.slane %v327, 5
      %v370 = vsel %vm338, %v368, %v369
      %v371 = vrot.slane %v289, 5
      %v372 = vrot.slane %v371, 4
      %v373 = vrot.slane %v328, 5
      %v374 = vsel %vm338, %v372, %v373
      %v375 = vrot.slane %v290, 5
      %v376 = vrot.slane %v375, 4
      %v377 = vrot.slane %v329, 5
      %v378 = vsel %vm338, %v376, %v377
      %v379 = vrot.slane %v291, 5
      %v380 = vrot.slane %v379, 4
      %v381 = vrot.slane %v330, 5
      %v382 = vsel %vm338, %v380, %v381
      %v383 = vrot.slane %v292, 5
      %v384 = vrot.slane %v383, 4
      %v385 = vrot.slane %v331, 5
      %v386 = vsel %vm338, %v384, %v385
      %v387 = vrot.slane %v294, 5
      %v388 = vrot.slane %v387, 4
      %v389 = vrot.slane %v332, 5
      %v390 = vsel %vm338, %v388, %v389
      %v391 = vrot.slane %v295, 5
      %v392 = vrot.slane %v391, 4
      %v393 = vrot.slane %v333, 5
      %v394 = vsel %vm338, %v392, %v393
      %v395 = vrot.slane %v296, 5
      %v396 = vrot.slane %v395, 4
      %v397 = vrot.slane %v334, 5
      %v398 = vsel %vm338, %v396, %v397
      %v399 = vrot.slane %v297, 5
      %v400 = vrot.slane %v399, 4
      %v401 = vrot.slane %v335, 5
      %v402 = vsel %vm338, %v400, %v401
      %v407 = vcombine.high %v283, %v283
      %v408 = vcombine.high %v288, %v288
      %v409 = vcombine.high %v293, %v293
      %v410 = vcombine.high %v298, %v298
      %v411 = vrot.slane %v283, 5
      %v412 = vrot.slane %v411, 4
      %v413 = vrot.slane %v407, 5
      %v414 = vsel %vm338, %v412, %v413
      %v415 = vrot.slane %v288, 5
      %v416 = vrot.slane %v415, 4
      %v417 = vrot.slane %v408, 5
      %v418 = vsel %vm338, %v416, %v417
      %v419 = vrot.slane %v293, 5
      %v420 = vrot.slane %v419, 4
      %v421 = vrot.slane %v409, 5
      %v422 = vsel %vm338, %v420, %v421
      %v423 = vrot.slane %v298, 5
      %v424 = vrot.slane %v423, 4
      %v425 = vrot.slane %v410, 5
      %v426 = vsel %vm338, %v424, %v425
      %v431 = vcombine.high %v299, %v299
      %v432 = vcombine.high %v300, %v300
      %v433 = vcombine.high %v301, %v301
      %v434 = vcombine.high %v302, %v302
      %v435 = vrot.slane %v299, 5
      %v436 = vrot.slane %v435, 4
      %v437 = vrot.slane %v431, 5
      %v438 = vsel %vm338, %v436, %v437
      %v439 = vrot.slane %v300, 5
      %v440 = vrot.slane %v439, 4
      %v441 = vrot.slane %v432, 5
      %v442 = vsel %vm338, %v440, %v441
      %v443 = vrot.slane %v301, 5
      %v444 = vrot.slane %v443, 4
      %v445 = vrot.slane %v433, 5
      %v446 = vsel %vm338, %v444, %v445
      %v447 = vrot.slane %v302, 5
      %v448 = vrot.slane %v447, 4
      %v449 = vrot.slane %v434, 5
      %v450 = vsel %vm338, %v448, %v449
      %v452 = vcombine.high %v303, %v303
      %v453 = vrot.slane %v303, 5
      %v454 = vrot.slane %v453, 4
      %v455 = vrot.slane %v452, 5
      %v456 = vsel %vm338, %v454, %v455
      %v457 = vcombine.low %v279, %v280
      %v458 = vcombine.low %v281, %v282
      %v459 = vcombine.low %v284, %v285
      %v460 = vcombine.low %v286, %v287
      %v461 = vcombine.low %v289, %v290
      %v462 = vcombine.low %v291, %v292
      %v463 = vcombine.low %v294, %v295
      %v464 = vcombine.low %v296, %v297
      %v473 = vcombine.low %v342, %v346
      %v474 = vcombine.low %v350, %v354
      %v475 = vcombine.low %v358, %v362
      %v476 = vcombine.low %v366, %v370
      %v477 = vcombine.low %v374, %v378
      %v478 = vcombine.low %v382, %v386
      %v479 = vcombine.low %v390, %v394
      %v480 = vcombine.low %v398, %v402
      %481 = vrot.lane.b32.xlu0 %v473, 40
      %v482 = vpop.permute.xlu0 %481
      %483 = vrot.lane.b32.xlu0 %v474, 40
      %v484 = vpop.permute.xlu0 %483
      %485 = vrot.lane.b32.xlu0 %v475, 40
      %v486 = vpop.permute.xlu0 %485
      %487 = vrot.lane.b32.xlu0 %v476, 40
      %v488 = vpop.permute.xlu0 %487
      %489 = vrot.lane.b32.xlu0 %v477, 40
      %v490 = vpop.permute.xlu0 %489
      %491 = vrot.lane.b32.xlu0 %v478, 40
      %v492 = vpop.permute.xlu0 %491
      %493 = vrot.lane.b32.xlu0 %v479, 40
      %v494 = vpop.permute.xlu0 %493
      %495 = vrot.lane.b32.xlu0 %v480, 40
      %v496 = vpop.permute.xlu0 %495
      %v505 = vcombine.low %v280, %v281
      %v506 = vcombine.low %v282, %v283
      %v507 = vcombine.low %v285, %v286
      %v508 = vcombine.low %v287, %v288
      %v509 = vcombine.low %v290, %v291
      %v510 = vcombine.low %v292, %v293
      %v511 = vcombine.low %v295, %v296
      %v512 = vcombine.low %v297, %v298
      %513 = vrot.lane.b32.xlu0 %v505, 80
      %v514 = vpop.permute.xlu0 %513
      %515 = vrot.lane.b32.xlu0 %v506, 80
      %v516 = vpop.permute.xlu0 %515
      %517 = vrot.lane.b32.xlu0 %v507, 80
      %v518 = vpop.permute.xlu0 %517
      %519 = vrot.lane.b32.xlu0 %v508, 80
      %v520 = vpop.permute.xlu0 %519
      %521 = vrot.lane.b32.xlu0 %v509, 80
      %v522 = vpop.permute.xlu0 %521
      %523 = vrot.lane.b32.xlu0 %v510, 80
      %v524 = vpop.permute.xlu0 %523
      %525 = vrot.lane.b32.xlu0 %v511, 80
      %v526 = vpop.permute.xlu0 %525
      %527 = vrot.lane.b32.xlu0 %v512, 80
      %v528 = vpop.permute.xlu0 %527
      %v537 = vcombine.low %v346, %v350
      %v538 = vcombine.low %v354, %v414
      %v539 = vcombine.low %v362, %v366
      %v540 = vcombine.low %v370, %v418
      %v541 = vcombine.low %v378, %v382
      %v542 = vcombine.low %v386, %v422
      %v543 = vcombine.low %v394, %v398
      %v544 = vcombine.low %v402, %v426
      %545 = vrot.lane.b32.xlu0 %v537, 120
      %v546 = vpop.permute.xlu0 %545
      %547 = vrot.lane.b32.xlu0 %v538, 120
      %v548 = vpop.permute.xlu0 %547
      %549 = vrot.lane.b32.xlu0 %v539, 120
      %v550 = vpop.permute.xlu0 %549
      %551 = vrot.lane.b32.xlu0 %v540, 120
      %v552 = vpop.permute.xlu0 %551
      %553 = vrot.lane.b32.xlu0 %v541, 120
      %v554 = vpop.permute.xlu0 %553
      %555 = vrot.lane.b32.xlu0 %v542, 120
      %v556 = vpop.permute.xlu0 %555
      %557 = vrot.lane.b32.xlu0 %v543, 120
      %v558 = vpop.permute.xlu0 %557
      %559 = vrot.lane.b32.xlu0 %v544, 120
      %v560 = vpop.permute.xlu0 %559
      %v569 = vcombine.low %v299, %v300
      %v570 = vcombine.low %v301, %v302
      %571 = vrot.lane.b32.xlu0 %v459, 32
      %v572 = vpop.permute.xlu0 %571
      %573 = vrot.lane.b32.xlu0 %v460, 32
      %v574 = vpop.permute.xlu0 %573
      %575 = vrot.lane.b32.xlu0 %v461, 32
      %v576 = vpop.permute.xlu0 %575
      %577 = vrot.lane.b32.xlu0 %v462, 32
      %v578 = vpop.permute.xlu0 %577
      %579 = vrot.lane.b32.xlu0 %v463, 32
      %v580 = vpop.permute.xlu0 %579
      %581 = vrot.lane.b32.xlu0 %v464, 32
      %v582 = vpop.permute.xlu0 %581
      %583 = vrot.lane.b32.xlu0 %v569, 32
      %v584 = vpop.permute.xlu0 %583
      %585 = vrot.lane.b32.xlu0 %v570, 32
      %v586 = vpop.permute.xlu0 %585
      %v595 = vcombine.low %v438, %v442
      %v596 = vcombine.low %v446, %v450
      %597 = vrot.lane.b32.xlu0 %v475, 72
      %v598 = vpop.permute.xlu0 %597
      %599 = vrot.lane.b32.xlu0 %v476, 72
      %v600 = vpop.permute.xlu0 %599
      %601 = vrot.lane.b32.xlu0 %v477, 72
      %v602 = vpop.permute.xlu0 %601
      %603 = vrot.lane.b32.xlu0 %v478, 72
      %v604 = vpop.permute.xlu0 %603
      %605 = vrot.lane.b32.xlu0 %v479, 72
      %v606 = vpop.permute.xlu0 %605
      %607 = vrot.lane.b32.xlu0 %v480, 72
      %v608 = vpop.permute.xlu0 %607
      %609 = vrot.lane.b32.xlu0 %v595, 72
      %v610 = vpop.permute.xlu0 %609
      %611 = vrot.lane.b32.xlu0 %v596, 72
      %v612 = vpop.permute.xlu0 %611
      %v621 = vcombine.low %v300, %v301
      %v622 = vcombine.low %v302, %v303
      %623 = vrot.lane.b32.xlu0 %v507, 112
      %v624 = vpop.permute.xlu0 %623
      %625 = vrot.lane.b32.xlu0 %v508, 112
      %v626 = vpop.permute.xlu0 %625
      %627 = vrot.lane.b32.xlu0 %v509, 112
      %v628 = vpop.permute.xlu0 %627
      %629 = vrot.lane.b32.xlu0 %v510, 112
      %v630 = vpop.permute.xlu0 %629
      %631 = vrot.lane.b32.xlu0 %v511, 112
      %v632 = vpop.permute.xlu0 %631
      %633 = vrot.lane.b32.xlu0 %v512, 112
      %v634 = vpop.permute.xlu0 %633
      %635 = vrot.lane.b32.xlu0 %v621, 112
      %v636 = vpop.permute.xlu0 %635
      %637 = vrot.lane.b32.xlu0 %v622, 112
      %v638 = vpop.permute.xlu0 %637
      %v647 = vcombine.low %v442, %v446
      %v648 = vcombine.low %v450, %v456
      %649 = vrot.lane.b32.xlu0 %v539, 24
      %v650 = vpop.permute.xlu0 %649
      %651 = vrot.lane.b32.xlu0 %v540, 24
      %v652 = vpop.permute.xlu0 %651
      %653 = vrot.lane.b32.xlu0 %v541, 24
      %v654 = vpop.permute.xlu0 %653
      %655 = vrot.lane.b32.xlu0 %v542, 24
      %v656 = vpop.permute.xlu0 %655
      %657 = vrot.lane.b32.xlu0 %v543, 24
      %v658 = vpop.permute.xlu0 %657
      %659 = vrot.lane.b32.xlu0 %v544, 24
      %v660 = vpop.permute.xlu0 %659
      %661 = vrot.lane.b32.xlu0 %v647, 24
      %v662 = vpop.permute.xlu0 %661
      %663 = vrot.lane.b32.xlu0 %v648, 24
      %v664 = vpop.permute.xlu0 %663
      %vm673 = vcmask 326656
      %v674 = vsel %vm673, %v457, %v482
      %v675 = vsel %vm673, %v458, %v484
      %v676 = vsel %vm673, %v459, %v486
      %v677 = vsel %vm673, %v460, %v488
      %v678 = vsel %vm673, %v461, %v490
      %v679 = vsel %vm673, %v462, %v492
      %v680 = vsel %vm673, %v463, %v494
      %v681 = vsel %vm673, %v464, %v496
      %vm682 = vcmask 654336
      %v683 = vsel %vm682, %v674, %v514
      %v684 = vsel %vm682, %v675, %v516
      %v685 = vsel %vm682, %v676, %v518
      %v686 = vsel %vm682, %v677, %v520
      %v687 = vsel %vm682, %v678, %v522
      %v688 = vsel %vm682, %v679, %v524
      %v689 = vsel %vm682, %v680, %v526
      %v690 = vsel %vm682, %v681, %v528
      %vm691 = vcmask 982016
      %v692 = vsel %vm691, %v683, %v546
      %v693 = vsel %vm691, %v684, %v548
      %v694 = vsel %vm691, %v685, %v550
      %v695 = vsel %vm691, %v686, %v552
      %v696 = vsel %vm691, %v687, %v554
      %v697 = vsel %vm691, %v688, %v556
      %v698 = vsel %vm691, %v689, %v558
      %v699 = vsel %vm691, %v690, %v560
      %vm700 = vcmask 261120
      %v701 = vsel %vm700, %v546, %v572
      %v702 = vsel %vm700, %v548, %v574
      %v703 = vsel %vm700, %v550, %v576
      %v704 = vsel %vm700, %v552, %v578
      %v705 = vsel %vm700, %v554, %v580
      %v706 = vsel %vm700, %v556, %v582
      %v707 = vsel %vm700, %v558, %v584
      %v708 = vsel %vm700, %v560, %v586
      %vm709 = vcmask 588800
      %v710 = vsel %vm709, %v701, %v598
      %v711 = vsel %vm709, %v702, %v600
      %v712 = vsel %vm709, %v703, %v602
      %v713 = vsel %vm709, %v704, %v604
      %v714 = vsel %vm709, %v705, %v606
      %v715 = vsel %vm709, %v706, %v608
      %v716 = vsel %vm709, %v707, %v610
      %v717 = vsel %vm709, %v708, %v612
      %vm718 = vcmask 916480
      %v719 = vsel %vm718, %v710, %v624
      %v720 = vsel %vm718, %v711, %v626
      %v721 = vsel %vm718, %v712, %v628
      %v722 = vsel %vm718, %v713, %v630
      %v723 = vsel %vm718, %v714, %v632
      %v724 = vsel %vm718, %v715, %v634
      %v725 = vsel %vm718, %v716, %v636
      %v726 = vsel %vm718, %v717, %v638
      %vm727 = vcmask 195584
      %v728 = vsel %vm727, %v624, %v650
      %v729 = vsel %vm727, %v626, %v652
      %v730 = vsel %vm727, %v628, %v654
      %v731 = vsel %vm727, %v630, %v656
      %v732 = vsel %vm727, %v632, %v658
      %v733 = vsel %vm727, %v634, %v660
      %v734 = vsel %vm727, %v636, %v662
      %v735 = vsel %vm727, %v638, %v664
      %v736 = vld [vmem:[%s1] sm:$0xff]
      %v737 = vld [vmem:[%s1 + $0x8] sm:$0xff]
      %v738 = vld [vmem:[%s1 + $0x10] sm:$0xff]
      %v739 = vld [vmem:[%s1 + $0x18] sm:$0xff]
      %v740 = vld [vmem:[%s1 + $0x20] sm:$0xff]
      %v741 = vld [vmem:[%s1 + $0x28] sm:$0xff]
      %v742 = vld [vmem:[%s1 + $0x30] sm:$0xff]
      %v743 = vld [vmem:[%s1 + $0x38] sm:$0xff]
      %v744 = vld [vmem:[%s1 + $0x40] sm:$0xff]
      %v745 = vld [vmem:[%s1 + $0x48] sm:$0xff]
      %v746 = vld [vmem:[%s1 + $0x50] sm:$0xff]
      %v747 = vld [vmem:[%s1 + $0x58] sm:$0xff]
      %v748 = vld [vmem:[%s1 + $0x60] sm:$0xff]
      %v749 = vld [vmem:[%s1 + $0x68] sm:$0xff]
      %v750 = vld [vmem:[%s1 + $0x70] sm:$0xff]
      %v751 = vld [vmem:[%s1 + $0x78] sm:$0xff]
      %v752 = vld [vmem:[%s1 + $0x80] sm:$0xff]
      %v753 = vld [vmem:[%s1 + $0x88] sm:$0xff]
      %v754 = vld [vmem:[%s1 + $0x90] sm:$0xff]
      %v755 = vld [vmem:[%s1 + $0x98] sm:$0xff]
      %v756 = vld [vmem:[%s1 + $0xa0] sm:$0xff]
      %v757 = vld [vmem:[%s1 + $0xa8] sm:$0xff]
      %v758 = vld [vmem:[%s1 + $0xb0] sm:$0xff]
      %v759 = vld [vmem:[%s1 + $0xb8] sm:$0xff]
      %v760 = vld [vmem:[%s1 + $0xc0] sm:$0xff]
      %v761 = vld [vmem:[%s1 + $0xc8] sm:$0xff]
      %v762 = vld [vmem:[%s1 + $0xd0] sm:$0xff]
      %v763 = vld [vmem:[%s1 + $0xd8] sm:$0xff]
      %v764 = vld [vmem:[%s1 + $0xe0] sm:$0xff]
      %v765 = vld [vmem:[%s1 + $0xe8] sm:$0xff]
      %v766 = vld [vmem:[%s1 + $0xf0] sm:$0xff]
      %v767 = vld [vmem:[%s1 + $0xf8] sm:$0xff]
      %v768 = vld [vmem:[%s1 + $0x100] sm:$0xff]
      %v769 = vld [vmem:[%s1 + $0x108] sm:$0xff]
      %v770 = vld [vmem:[%s1 + $0x110] sm:$0xff]
      %v771 = vld [vmem:[%s1 + $0x118] sm:$0xff]
      %v772 = vld [vmem:[%s1 + $0x120] sm:$0xff]
      %v773 = vld [vmem:[%s1 + $0x128] sm:$0xff]
      %v774 = vld [vmem:[%s1 + $0x130] sm:$0xff]
      %v775 = vld [vmem:[%s1 + $0x138] sm:$0xff]
      %v776 = vld [vmem:[%s1 + $0x140] sm:$0xff]
      %v777 = vld [vmem:[%s1 + $0x148] sm:$0xff]
      %v778 = vld [vmem:[%s1 + $0x150] sm:$0xff]
      %v779 = vld [vmem:[%s1 + $0x158] sm:$0xff]
      %v780 = vld [vmem:[%s1 + $0x160] sm:$0xff]
      %v781 = vld [vmem:[%s1 + $0x168] sm:$0xff]
      %v782 = vld [vmem:[%s1 + $0x170] sm:$0xff]
      %v783 = vld [vmem:[%s1 + $0x178] sm:$0xff]
      %v784 = vld [vmem:[%s1 + $0x180] sm:$0xff]
      %v785 = vld [vmem:[%s1 + $0x188] sm:$0xff]
      %v786 = vld [vmem:[%s1 + $0x190] sm:$0xff]
      %v787 = vld [vmem:[%s1 + $0x198] sm:$0xff]
      %v788 = vld [vmem:[%s1 + $0x1a0] sm:$0xff]
      %v789 = vld [vmem:[%s1 + $0x1a8] sm:$0xff]
      %v790 = vld [vmem:[%s1 + $0x1b0] sm:$0xff]
      %v791 = vld [vmem:[%s1 + $0x1b8] sm:$0xff]
      %v792 = vld [vmem:[%s1 + $0x1c0] sm:$0xff]
      %v793 = vld [vmem:[%s1 + $0x1c8] sm:$0xff]
      %v794 = vld [vmem:[%s1 + $0x1d0] sm:$0xff]
      %v795 = vld [vmem:[%s1 + $0x1d8] sm:$0xff]
      %v796 = vld [vmem:[%s1 + $0x1e0] sm:$0xff]
      %v797 = vld [vmem:[%s1 + $0x1e8] sm:$0xff]
      %v798 = vld [vmem:[%s1 + $0x1f0] sm:$0xff]
      %v799 = vld [vmem:[%s1 + $0x1f8] sm:$0xff]
      %v800 = vld [vmem:[%s1 + $0x200] sm:$0xff]
      %v801 = vld [vmem:[%s1 + $0x208] sm:$0xff]
      %v802 = vld [vmem:[%s1 + $0x210] sm:$0xff]
      %v803 = vld [vmem:[%s1 + $0x218] sm:$0xff]
      %v804 = vld [vmem:[%s1 + $0x220] sm:$0xff]
      %v805 = vld [vmem:[%s1 + $0x228] sm:$0xff]
      %v806 = vld [vmem:[%s1 + $0x230] sm:$0xff]
      %v807 = vld [vmem:[%s1 + $0x238] sm:$0xff]
      %v808 = vld [vmem:[%s1 + $0x240] sm:$0xff]
      %v809 = vld [vmem:[%s1 + $0x248] sm:$0xff]
      %v810 = vld [vmem:[%s1 + $0x250] sm:$0xff]
      %v811 = vld [vmem:[%s1 + $0x258] sm:$0xff]
      %v812 = vld [vmem:[%s1 + $0x260] sm:$0xff]
      %v813 = vld [vmem:[%s1 + $0x268] sm:$0xff]
      %v814 = vld [vmem:[%s1 + $0x270] sm:$0xff]
      %v815 = vld [vmem:[%s1 + $0x278] sm:$0xff]
      %v816 = vld [vmem:[%s1 + $0x280] sm:$0xff]
      %v817 = vld [vmem:[%s1 + $0x288] sm:$0xff]
      %v818 = vld [vmem:[%s1 + $0x290] sm:$0xff]
      %v819 = vld [vmem:[%s1 + $0x298] sm:$0xff]
      %v820 = vld [vmem:[%s1 + $0x2a0] sm:$0xff]
      %v821 = vld [vmem:[%s1 + $0x2a8] sm:$0xff]
      %v822 = vld [vmem:[%s1 + $0x2b0] sm:$0xff]
      %v823 = vld [vmem:[%s1 + $0x2b8] sm:$0xff]
      %v824 = vld [vmem:[%s1 + $0x2c0] sm:$0xff]
      %v825 = vld [vmem:[%s1 + $0x2c8] sm:$0xff]
      %v826 = vld [vmem:[%s1 + $0x2d0] sm:$0xff]
      %v827 = vld [vmem:[%s1 + $0x2d8] sm:$0xff]
      %v828 = vld [vmem:[%s1 + $0x2e0] sm:$0xff]
      %v829 = vld [vmem:[%s1 + $0x2e8] sm:$0xff]
      %v830 = vld [vmem:[%s1 + $0x2f0] sm:$0xff]
      %v831 = vld [vmem:[%s1 + $0x2f8] sm:$0xff]
      %v832 = vld [vmem:[%s1 + $0x300] sm:$0xff]
      %v833 = vld [vmem:[%s1 + $0x308] sm:$0xff]
      %v834 = vld [vmem:[%s1 + $0x310] sm:$0xff]
      %v835 = vld [vmem:[%s1 + $0x318] sm:$0xff]
      %v836 = vld [vmem:[%s1 + $0x320] sm:$0xff]
      %v837 = vld [vmem:[%s1 + $0x328] sm:$0xff]
      %v838 = vld [vmem:[%s1 + $0x330] sm:$0xff]
      %v839 = vld [vmem:[%s1 + $0x338] sm:$0xff]
      %v840 = vld [vmem:[%s1 + $0x340] sm:$0xff]
      %v841 = vld [vmem:[%s1 + $0x348] sm:$0xff]
      %v842 = vld [vmem:[%s1 + $0x350] sm:$0xff]
      %v843 = vld [vmem:[%s1 + $0x358] sm:$0xff]
      %v844 = vld [vmem:[%s1 + $0x360] sm:$0xff]
      %v845 = vld [vmem:[%s1 + $0x368] sm:$0xff]
      %v846 = vld [vmem:[%s1 + $0x370] sm:$0xff]
      %v847 = vld [vmem:[%s1 + $0x378] sm:$0xff]
      %v848 = vld [vmem:[%s1 + $0x380] sm:$0xff]
      %v849 = vld [vmem:[%s1 + $0x388] sm:$0xff]
      %v850 = vld [vmem:[%s1 + $0x390] sm:$0xff]
      %v851 = vld [vmem:[%s1 + $0x398] sm:$0xff]
      %v852 = vld [vmem:[%s1 + $0x3a0] sm:$0xff]
      %v853 = vld [vmem:[%s1 + $0x3a8] sm:$0xff]
      %v854 = vld [vmem:[%s1 + $0x3b0] sm:$0xff]
      %v855 = vld [vmem:[%s1 + $0x3b8] sm:$0xff]
      %v856 = vld [vmem:[%s1 + $0x3c0] sm:$0xff]
      %v857 = vld [vmem:[%s1 + $0x3c8] sm:$0xff]
      %v858 = vld [vmem:[%s1 + $0x3d0] sm:$0xff]
      %v859 = vld [vmem:[%s1 + $0x3d8] sm:$0xff]
      %v860 = vld [vmem:[%s1 + $0x3e0] sm:$0xff]
      %v861 = vld [vmem:[%s1 + $0x3e8] sm:$0xff]
      %v862 = vld [vmem:[%s1 + $0x3f0] sm:$0xff]
      %v863 = vld [vmem:[%s1 + $0x3f8] sm:$0xff]
      %v864 = vld [vmem:[%s1 + $0x400] sm:$0xff]
      %v865 = vld [vmem:[%s1 + $0x408] sm:$0xff]
      %v866 = vld [vmem:[%s1 + $0x410] sm:$0xff]
      %v867 = vld [vmem:[%s1 + $0x418] sm:$0xff]
      %v868 = vld [vmem:[%s1 + $0x420] sm:$0xff]
      %v869 = vld [vmem:[%s1 + $0x428] sm:$0xff]
      %v870 = vld [vmem:[%s1 + $0x430] sm:$0xff]
      %v871 = vld [vmem:[%s1 + $0x438] sm:$0xff]
      %v872 = vld [vmem:[%s1 + $0x440] sm:$0xff]
      %v873 = vld [vmem:[%s1 + $0x448] sm:$0xff]
      %v874 = vld [vmem:[%s1 + $0x450] sm:$0xff]
      %v875 = vld [vmem:[%s1 + $0x458] sm:$0xff]
      %v876 = vld [vmem:[%s1 + $0x460] sm:$0xff]
      %v877 = vld [vmem:[%s1 + $0x468] sm:$0xff]
      %v878 = vld [vmem:[%s1 + $0x470] sm:$0xff]
      %v879 = vld [vmem:[%s1 + $0x478] sm:$0xff]
      %v880 = vld [vmem:[%s1 + $0x480] sm:$0xff]
      %v881 = vld [vmem:[%s1 + $0x488] sm:$0xff]
      %v882 = vld [vmem:[%s1 + $0x490] sm:$0xff]
      %v883 = vld [vmem:[%s1 + $0x498] sm:$0xff]
      %v884 = vld [vmem:[%s1 + $0x4a0] sm:$0xff]
      %v885 = vld [vmem:[%s1 + $0x4a8] sm:$0xff]
      %v886 = vld [vmem:[%s1 + $0x4b0] sm:$0xff]
      %v887 = vld [vmem:[%s1 + $0x4b8] sm:$0xff]
      %v888 = vld [vmem:[%s1 + $0x4c0] sm:$0xff]
      %v889 = vld [vmem:[%s1 + $0x4c8] sm:$0xff]
      %v890 = vld [vmem:[%s1 + $0x4d0] sm:$0xff]
      %v891 = vld [vmem:[%s1 + $0x4d8] sm:$0xff]
      %v892 = vld [vmem:[%s1 + $0x4e0] sm:$0xff]
      %v893 = vld [vmem:[%s1 + $0x4e8] sm:$0xff]
      %v894 = vld [vmem:[%s1 + $0x4f0] sm:$0xff]
      %v895 = vld [vmem:[%s1 + $0x4f8] sm:$0xff]
      %v896 = vld [vmem:[%s2] sm:$0xf]
      %v898 = vlaneseq
      %v899 = vshrl.u32 %v898, 7
      %v900 = vsub.s32 0, %v899
      %v901 = vrot.slane %v896, %v900
      %v902 = vlaneseq
      %v903 = vshrl.u32 %v902, 7
      %v904 = vsub.s32 1, %v903
      %v905 = vrot.slane %v896, %v904
      %v906 = vlaneseq
      %v907 = vshrl.u32 %v906, 7
      %v908 = vsub.s32 2, %v907
      %v909 = vrot.slane %v896, %v908
      %v910 = vlaneseq
      %v911 = vshrl.u32 %v910, 7
      %v912 = vsub.s32 3, %v911
      %v913 = vrot.slane %v896, %v912
      %vm918 = vcmask 523264
      %v920 = vsel %vm918, %v728, 0
      %v923 = vsel %vm918, %v729, 0
      %v926 = vsel %vm918, %v730, 0
      %v929 = vsel %vm918, %v731, 0
      %v932 = vsel %vm918, %v732, 0
      %v935 = vsel %vm918, %v733, 0
      %v938 = vsel %vm918, %v734, 0
      %v941 = vsel %vm918, %v735, 0
      %943 = vmatprep.subr.mxu0 %v737
      %944 = vmatpush1.msra.mxu0 %v736
      %945 = vmatprep.subr.mxu0 %v741
      %946 = vmatpush1.msra.mxu0 %v740
      %947 = vmatprep.subr.mxu0 %v745
      %948 = vmatpush1.msra.mxu0 %v744
      %949 = vmatprep.subr.mxu0 %v749
      %950 = vmatpush1.msra.mxu0 %v748
      %951 = vmatprep.subr.mxu0 %v753
      %952 = vmatpush1.msra.mxu0 %v752
      %953 = vmatprep.subr.mxu0 %v757
      %954 = vmatpush1.msra.mxu0 %v756
      %955 = vmatprep.subr.mxu0 %v761
      %956 = vmatpush1.msra.mxu0 %v760
      %957 = vmatprep.subr.mxu0 %v765
      %958 = vmatpush1.msra.mxu0 %v764
      %959 = vmatprep.subr.mxu0 %v769
      %960 = vmatpush1.msra.mxu0 %v768
      %961 = vmatprep.subr.mxu0 %v773
      %962 = vmatpush1.msra.mxu0 %v772
      %963 = vmatprep.subr.mxu0 %v777
      %964 = vmatpush1.msra.mxu0 %v776
      %965 = vmatprep.subr.mxu0 %v781
      %966 = vmatpush1.msra.mxu0 %v780
      %967 = vmatprep.subr.mxu0 %v785
      %968 = vmatpush1.msra.mxu0 %v784
      %969 = vmatprep.subr.mxu0 %v789
      %970 = vmatpush1.msra.mxu0 %v788
      %971 = vmatprep.subr.mxu0 %v793
      %972 = vmatpush1.msra.mxu0 %v792
      %973 = vmatprep.subr.mxu0 %v797
      %974 = vmatpush1.msra.mxu0 %v796
      %975 = vmatprep.subr.mxu0 %v801
      %976 = vmatpush1.msra.mxu0 %v800
      %977 = vmatprep.subr.mxu0 %v805
      %978 = vmatpush1.msra.mxu0 %v804
      %979 = vmatprep.subr.mxu0 %v809
      %980 = vmatpush1.msra.mxu0 %v808
      %981 = vmatprep.subr.mxu0 %v813
      %982 = vmatpush1.msra.mxu0 %v812
      %983 = vmatprep.subr.mxu0 %v817
      %984 = vmatpush1.msra.mxu0 %v816
      %985 = vmatprep.subr.mxu0 %v821
      %986 = vmatpush1.msra.mxu0 %v820
      %987 = vmatprep.subr.mxu0 %v825
      %988 = vmatpush1.msra.mxu0 %v824
      %989 = vmatprep.subr.mxu0 %v829
      %990 = vmatpush1.msra.mxu0 %v828
      %991 = vmatprep.subr.mxu0 %v833
      %992 = vmatpush1.msra.mxu0 %v832
      %993 = vmatprep.subr.mxu0 %v837
      %994 = vmatpush1.msra.mxu0 %v836
      %995 = vmatprep.subr.mxu0 %v841
      %996 = vmatpush1.msra.mxu0 %v840
      %997 = vmatprep.subr.mxu0 %v845
      %998 = vmatpush1.msra.mxu0 %v844
      %999 = vmatprep.subr.mxu0 %v849
      %1000 = vmatpush1.msra.mxu0 %v848
      %1001 = vmatprep.subr.mxu0 %v853
      %1002 = vmatpush1.msra.mxu0 %v852
      %1003 = vmatprep.subr.mxu0 %v857
      %1004 = vmatpush1.msra.mxu0 %v856
      %1005 = vmatprep.subr.mxu0 %v861
      %1006 = vmatpush1.msra.mxu0 %v860
      %1007 = vmatprep.mubr.f32.mxu0 %v719
      %1008 = vmatmul.mubr.f32.gmra.mrb[0].mxu0 %v692
      %v1009 = vpop.f32.mrb[0].mxu0
      %v1010 = vadd.f32 %v901, %v1009
      %v1011 = vpop.f32.mrb[0].mxu0
      %v1012 = vadd.f32 %v905, %v1011
      %1013 = vmatprep.mubr.f32.mxu0 %v720
      %1014 = vmatmul.mubr.f32.gmra.mrb[0].mxu0 %v693
      %v1015 = vpop.f32.mrb[0].mxu0
      %v1016 = vadd.f32 %v901, %v1015
      %v1017 = vpop.f32.mrb[0].mxu0
      %v1018 = vadd.f32 %v905, %v1017
      %1019 = vmatprep.mubr.f32.mxu0 %v721
      %1020 = vmatmul.mubr.f32.gmra.mrb[0].mxu0 %v694
      %v1021 = vpop.f32.mrb[0].mxu0
      %v1022 = vadd.f32 %v901, %v1021
      %v1023 = vpop.f32.mrb[0].mxu0
      %v1024 = vadd.f32 %v905, %v1023
      %1025 = vmatprep.mubr.f32.mxu0 %v722
      %1026 = vmatmul.mubr.f32.gmra.mrb[0].mxu0 %v695
      %v1027 = vpop.f32.mrb[0].mxu0
      %v1028 = vadd.f32 %v901, %v1027
      %v1029 = vpop.f32.mrb[0].mxu0
      %v1030 = vadd.f32 %v905, %v1029
      %1031 = vmatprep.mubr.f32.mxu0 %v723
      %1032 = vmatmul.mubr.f32.gmra.mrb[0].mxu0 %v696
      %v1033 = vpop.f32.mrb[0].mxu0
      %v1034 = vadd.f32 %v901, %v1033
      %v1035 = vpop.f32.mrb[0].mxu0
      %v1036 = vadd.f32 %v905, %v1035
      %1037 = vmatprep.mubr.f32.mxu0 %v724
      %1038 = vmatmul.mubr.f32.gmra.mrb[0].mxu0 %v697
      %v1039 = vpop.f32.mrb[0].mxu0
      %v1040 = vadd.f32 %v901, %v1039
      %v1041 = vpop.f32.mrb[0].mxu0
      %v1042 = vadd.f32 %v905, %v1041
      %1043 = vmatprep.mubr.f32.mxu0 %v725
      %1044 = vmatmul.mubr.f32.gmra.mrb[0].mxu0 %v698
      %v1045 = vpop.f32.mrb[0].mxu0
      %v1046 = vadd.f32 %v901, %v1045
      %v1047 = vpop.f32.mrb[0].mxu0
      %v1048 = vadd.f32 %v905, %v1047
      %1049 = vmatprep.mubr.f32.mxu0 %v726
      %1050 = vmatmul.mubr.f32.gmra.mrb[0].mxu0 %v699
      %v1051 = vpop.f32.mrb[0].mxu0
      %v1052 = vadd.f32 %v901, %v1051
      %v1053 = vpop.f32.mrb[0].mxu0
      %v1054 = vadd.f32 %v905, %v1053
      %1055 = vdwg.mxu0
      %1056 = vmatprep.subr.mxu0 %v865
      %1057 = vmatpush1.msra.mxu0 %v864
      %1058 = vmatprep.subr.mxu0 %v869
      %1059 = vmatpush1.msra.mxu0 %v868
      %1060 = vmatprep.subr.mxu0 %v873
      %1061 = vmatpush1.msra.mxu0 %v872
      %1062 = vmatprep.subr.mxu0 %v877
      %1063 = vmatpush1.msra.mxu0 %v876
      %1064 = vmatprep.subr.mxu0 %v881
      %1065 = vmatpush1.msra.mxu0 %v880
      %1066 = vmatprep.subr.mxu0 %v885
      %1067 = vmatpush1.msra.mxu0 %v884
      %1068 = vmatprep.subr.mxu0 %v889
      %1069 = vmatpush1.msra.mxu0 %v888
      %1070 = vmatprep.subr.mxu0 %v893
      %1071 = vmatpush1.msra.mxu0 %v892
      %1072 = vmatprep.subr.mxu0 0.0
      %1073 = vmatpush1.msra.mxu0 0.0
      %1074 = vmatprep.subr.mxu0 0.0
      %1075 = vmatpush1.msra.mxu0 0.0
      %1076 = vmatprep.subr.mxu0 0.0
      %1077 = vmatpush1.msra.mxu0 0.0
      %1078 = vmatprep.subr.mxu0 0.0
      %1079 = vmatpush1.msra.mxu0 0.0
      %1080 = vmatprep.subr.mxu0 0.0
      %1081 = vmatpush1.msra.mxu0 0.0
      %1082 = vmatprep.subr.mxu0 0.0
      %1083 = vmatpush1.msra.mxu0 0.0
      %1084 = vmatprep.subr.mxu0 0.0
      %1085 = vmatpush1.msra.mxu0 0.0
      %1086 = vmatprep.subr.mxu0 0.0
      %1087 = vmatpush1.msra.mxu0 0.0
      %1088 = vmatprep.subr.mxu0 0.0
      %1089 = vmatpush1.msra.mxu0 0.0
      %1090 = vmatprep.subr.mxu0 0.0
      %1091 = vmatpush1.msra.mxu0 0.0
      %1092 = vmatprep.subr.mxu0 0.0
      %1093 = vmatpush1.msra.mxu0 0.0
      %1094 = vmatprep.subr.mxu0 0.0
      %1095 = vmatpush1.msra.mxu0 0.0
      %1096 = vmatprep.subr.mxu0 0.0
      %1097 = vmatpush1.msra.mxu0 0.0
      %1098 = vmatprep.subr.mxu0 0.0
      %1099 = vmatpush1.msra.mxu0 0.0
      %1100 = vmatprep.subr.mxu0 0.0
      %1101 = vmatpush1.msra.mxu0 0.0
      %1102 = vmatprep.subr.mxu0 0.0
      %1103 = vmatpush1.msra.mxu0 0.0
      %1104 = vmatprep.subr.mxu0 0.0
      %1105 = vmatpush1.msra.mxu0 0.0
      %1106 = vmatprep.subr.mxu0 0.0
      %1107 = vmatpush1.msra.mxu0 0.0
      %1108 = vmatprep.subr.mxu0 0.0
      %1109 = vmatpush1.msra.mxu0 0.0
      %1110 = vmatprep.subr.mxu0 0.0
      %1111 = vmatpush1.msra.mxu0 0.0
      %1112 = vmatprep.subr.mxu0 0.0
      %1113 = vmatpush1.msra.mxu0 0.0
      %1114 = vmatprep.subr.mxu0 0.0
      %1115 = vmatpush1.msra.mxu0 0.0
      %1116 = vmatprep.subr.mxu0 0.0
      %1117 = vmatpush1.msra.mxu0 0.0
      %1118 = vmatprep.subr.mxu0 0.0
      %1119 = vmatpush1.msra.mxu0 0.0
      %1120 = vmatprep.mubr.f32.mxu0 0.0
      %1121 = vmatmul.mubr.f32.gmra.mrb[0].mxu0 %v920
      %v1122 = vpop.f32.mrb[0].mxu0
      %v1123 = vadd.f32 %v1010, %v1122
      %v1124 = vpop.f32.mrb[0].mxu0
      %v1125 = vadd.f32 %v1012, %v1124
      %1126 = vmatprep.mubr.f32.mxu0 0.0
      %1127 = vmatmul.mubr.f32.gmra.mrb[0].mxu0 %v923
      %v1128 = vpop.f32.mrb[0].mxu0
      %v1129 = vadd.f32 %v1016, %v1128
      %v1130 = vpop.f32.mrb[0].mxu0
      %v1131 = vadd.f32 %v1018, %v1130
      %1132 = vmatprep.mubr.f32.mxu0 0.0
      %1133 = vmatmul.mubr.f32.gmra.mrb[0].mxu0 %v926
      %v1134 = vpop.f32.mrb[0].mxu0
      %v1135 = vadd.f32 %v1022, %v1134
      %v1136 = vpop.f32.mrb[0].mxu0
      %v1137 = vadd.f32 %v1024, %v1136
      %1138 = vmatprep.mubr.f32.mxu0 0.0
      %1139 = vmatmul.mubr.f32.gmra.mrb[0].mxu0 %v929
      %v1140 = vpop.f32.mrb[0].mxu0
      %v1141 = vadd.f32 %v1028, %v1140
      %v1142 = vpop.f32.mrb[0].mxu0
      %v1143 = vadd.f32 %v1030, %v1142
      %1144 = vmatprep.mubr.f32.mxu0 0.0
      %1145 = vmatmul.mubr.f32.gmra.mrb[0].mxu0 %v932
      %v1146 = vpop.f32.mrb[0].mxu0
      %v1147 = vadd.f32 %v1034, %v1146
      %v1148 = vpop.f32.mrb[0].mxu0
      %v1149 = vadd.f32 %v1036, %v1148
      %1150 = vmatprep.mubr.f32.mxu0 0.0
      %1151 = vmatmul.mubr.f32.gmra.mrb[0].mxu0 %v935
      %v1152 = vpop.f32.mrb[0].mxu0
      %v1153 = vadd.f32 %v1040, %v1152
      %v1154 = vpop.f32.mrb[0].mxu0
      %v1155 = vadd.f32 %v1042, %v1154
      %1156 = vmatprep.mubr.f32.mxu0 0.0
      %1157 = vmatmul.mubr.f32.gmra.mrb[0].mxu0 %v938
      %v1158 = vpop.f32.mrb[0].mxu0
      %v1159 = vadd.f32 %v1046, %v1158
      %v1160 = vpop.f32.mrb[0].mxu0
      %v1161 = vadd.f32 %v1048, %v1160
      %1162 = vmatprep.mubr.f32.mxu0 0.0
      %1163 = vmatmul.mubr.f32.gmra.mrb[0].mxu0 %v941
      %v1164 = vpop.f32.mrb[0].mxu0
      %v1165 = vadd.f32 %v1052, %v1164
      %v1166 = vpop.f32.mrb[0].mxu0
      %v1167 = vadd.f32 %v1054, %v1166
      %1168 = vdwg.mxu0
      %1169 = vmatprep.subr.mxu0 %v739
      %1170 = vmatpush1.msra.mxu0 %v738
      %1171 = vmatprep.subr.mxu0 %v743
      %1172 = vmatpush1.msra.mxu0 %v742
      %1173 = vmatprep.subr.mxu0 %v747
      %1174 = vmatpush1.msra.mxu0 %v746
      %1175 = vmatprep.subr.mxu0 %v751
      %1176 = vmatpush1.msra.mxu0 %v750
      %1177 = vmatprep.subr.mxu0 %v755
      %1178 = vmatpush1.msra.mxu0 %v754
      %1179 = vmatprep.subr.mxu0 %v759
      %1180 = vmatpush1.msra.mxu0 %v758
      %1181 = vmatprep.subr.mxu0 %v763
      %1182 = vmatpush1.msra.mxu0 %v762
      %1183 = vmatprep.subr.mxu0 %v767
      %1184 = vmatpush1.msra.mxu0 %v766
      %1185 = vmatprep.subr.mxu0 %v771
      %1186 = vmatpush1.msra.mxu0 %v770
      %1187 = vmatprep.subr.mxu0 %v775
      %1188 = vmatpush1.msra.mxu0 %v774
      %1189 = vmatprep.subr.mxu0 %v779
      %1190 = vmatpush1.msra.mxu0 %v778
      %1191 = vmatprep.subr.mxu0 %v783
      %1192 = vmatpush1.msra.mxu0 %v782
      %1193 = vmatprep.subr.mxu0 %v787
      %1194 = vmatpush1.msra.mxu0 %v786
      %1195 = vmatprep.subr.mxu0 %v791
      %1196 = vmatpush1.msra.mxu0 %v790
      %1197 = vmatprep.subr.mxu0 %v795
      %1198 = vmatpush1.msra.mxu0 %v794
      %1199 = vmatprep.subr.mxu0 %v799
      %1200 = vmatpush1.msra.mxu0 %v798
      %1201 = vmatprep.subr.mxu0 %v803
      %1202 = vmatpush1.msra.mxu0 %v802
      %1203 = vmatprep.subr.mxu0 %v807
      %1204 = vmatpush1.msra.mxu0 %v806
      %1205 = vmatprep.subr.mxu0 %v811
      %1206 = vmatpush1.msra.mxu0 %v810
      %1207 = vmatprep.subr.mxu0 %v815
      %1208 = vmatpush1.msra.mxu0 %v814
      %1209 = vmatprep.subr.mxu0 %v819
      %1210 = vmatpush1.msra.mxu0 %v818
      %1211 = vmatprep.subr.mxu0 %v823
      %1212 = vmatpush1.msra.mxu0 %v822
      %1213 = vmatprep.subr.mxu0 %v827
      %1214 = vmatpush1.msra.mxu0 %v826
      %1215 = vmatprep.subr.mxu0 %v831
      %1216 = vmatpush1.msra.mxu0 %v830
      %1217 = vmatprep.subr.mxu0 %v835
      %1218 = vmatpush1.msra.mxu0 %v834
      %1219 = vmatprep.subr.mxu0 %v839
      %1220 = vmatpush1.msra.mxu0 %v838
      %1221 = vmatprep.subr.mxu0 %v843
      %1222 = vmatpush1.msra.mxu0 %v842
      %1223 = vmatprep.subr.mxu0 %v847
      %1224 = vmatpush1.msra.mxu0 %v846
      %1225 = vmatprep.subr.mxu0 %v851
      %1226 = vmatpush1.msra.mxu0 %v850
      %1227 = vmatprep.subr.mxu0 %v855
      %1228 = vmatpush1.msra.mxu0 %v854
      %1229 = vmatprep.subr.mxu0 %v859
      %1230 = vmatpush1.msra.mxu0 %v858
      %1231 = vmatprep.subr.mxu0 %v863
      %1232 = vmatpush1.msra.mxu0 %v862
      %1233 = vmatprep.mubr.f32.mxu0 %v719
      %1234 = vmatmul.mubr.f32.gmra.mrb[0].mxu0 %v692
      %v1235 = vpop.f32.mrb[0].mxu0
      %v1236 = vadd.f32 %v909, %v1235
      %v1237 = vpop.f32.mrb[0].mxu0
      %v1238 = vadd.f32 %v913, %v1237
      %1239 = vmatprep.mubr.f32.mxu0 %v720
      %1240 = vmatmul.mubr.f32.gmra.mrb[0].mxu0 %v693
      %v1241 = vpop.f32.mrb[0].mxu0
      %v1242 = vadd.f32 %v909, %v1241
      %v1243 = vpop.f32.mrb[0].mxu0
      %v1244 = vadd.f32 %v913, %v1243
      %1245 = vmatprep.mubr.f32.mxu0 %v721
      %1246 = vmatmul.mubr.f32.gmra.mrb[0].mxu0 %v694
      %v1247 = vpop.f32.mrb[0].mxu0
      %v1248 = vadd.f32 %v909, %v1247
      %v1249 = vpop.f32.mrb[0].mxu0
      %v1250 = vadd.f32 %v913, %v1249
      %1251 = vmatprep.mubr.f32.mxu0 %v722
      %1252 = vmatmul.mubr.f32.gmra.mrb[0].mxu0 %v695
      %v1253 = vpop.f32.mrb[0].mxu0
      %v1254 = vadd.f32 %v909, %v1253
      %v1255 = vpop.f32.mrb[0].mxu0
      %v1256 = vadd.f32 %v913, %v1255
      %1257 = vmatprep.mubr.f32.mxu0 %v723
      %1258 = vmatmul.mubr.f32.gmra.mrb[0].mxu0 %v696
      %v1259 = vpop.f32.mrb[0].mxu0
      %v1260 = vadd.f32 %v909, %v1259
      %v1261 = vpop.f32.mrb[0].mxu0
      %v1262 = vadd.f32 %v913, %v1261
      %1263 = vmatprep.mubr.f32.mxu0 %v724
      %1264 = vmatmul.mubr.f32.gmra.mrb[0].mxu0 %v697
      %v1265 = vpop.f32.mrb[0].mxu0
      %v1266 = vadd.f32 %v909, %v1265
      %v1267 = vpop.f32.mrb[0].mxu0
      %v1268 = vadd.f32 %v913, %v1267
      %1269 = vmatprep.mubr.f32.mxu0 %v725
      %1270 = vmatmul.mubr.f32.gmra.mrb[0].mxu0 %v698
      %v1271 = vpop.f32.mrb[0].mxu0
      %v1272 = vadd.f32 %v909, %v1271
      %v1273 = vpop.f32.mrb[0].mxu0
      %v1274 = vadd.f32 %v913, %v1273
      %1275 = vmatprep.mubr.f32.mxu0 %v726
      %1276 = vmatmul.mubr.f32.gmra.mrb[0].mxu0 %v699
      %v1277 = vpop.f32.mrb[0].mxu0
      %v1278 = vadd.f32 %v909, %v1277
      %v1279 = vpop.f32.mrb[0].mxu0
      %v1280 = vadd.f32 %v913, %v1279
      %1281 = vdwg.mxu0
      %1282 = vmatprep.subr.mxu0 %v867
      %1283 = vmatpush1.msra.mxu0 %v866
      %1284 = vmatprep.subr.mxu0 %v871
      %1285 = vmatpush1.msra.mxu0 %v870
      %1286 = vmatprep.subr.mxu0 %v875
      %1287 = vmatpush1.msra.mxu0 %v874
      %1288 = vmatprep.subr.mxu0 %v879
      %1289 = vmatpush1.msra.mxu0 %v878
      %1290 = vmatprep.subr.mxu0 %v883
      %1291 = vmatpush1.msra.mxu0 %v882
      %1292 = vmatprep.subr.mxu0 %v887
      %1293 = vmatpush1.msra.mxu0 %v886
      %1294 = vmatprep.subr.mxu0 %v891
      %1295 = vmatpush1.msra.mxu0 %v890
      %1296 = vmatprep.subr.mxu0 %v895
      %1297 = vmatpush1.msra.mxu0 %v894
      %1298 = vmatprep.subr.mxu0 0.0
      %1299 = vmatpush1.msra.mxu0 0.0
      %1300 = vmatprep.subr.mxu0 0.0
      %1301 = vmatpush1.msra.mxu0 0.0
      %1302 = vmatprep.subr.mxu0 0.0
      %1303 = vmatpush1.msra.mxu0 0.0
      %1304 = vmatprep.subr.mxu0 0.0
      %1305 = vmatpush1.msra.mxu0 0.0
      %1306 = vmatprep.subr.mxu0 0.0
      %1307 = vmatpush1.msra.mxu0 0.0
      %1308 = vmatprep.subr.mxu0 0.0
      %1309 = vmatpush1.msra.mxu0 0.0
      %1310 = vmatprep.subr.mxu0 0.0
      %1311 = vmatpush1.msra.mxu0 0.0
      %1312 = vmatprep.subr.mxu0 0.0
      %1313 = vmatpush1.msra.mxu0 0.0
      %1314 = vmatprep.subr.mxu0 0.0
      %1315 = vmatpush1.msra.mxu0 0.0
      %1316 = vmatprep.subr.mxu0 0.0
      %1317 = vmatpush1.msra.mxu0 0.0
      %1318 = vmatprep.subr.mxu0 0.0
      %1319 = vmatpush1.msra.mxu0 0.0
      %1320 = vmatprep.subr.mxu0 0.0
      %1321 = vmatpush1.msra.mxu0 0.0
      %1322 = vmatprep.subr.mxu0 0.0
      %1323 = vmatpush1.msra.mxu0 0.0
      %1324 = vmatprep.subr.mxu0 0.0
      %1325 = vmatpush1.msra.mxu0 0.0
      %1326 = vmatprep.subr.mxu0 0.0
      %1327 = vmatpush1.msra.mxu0 0.0
      %1328 = vmatprep.subr.mxu0 0.0
      %1329 = vmatpush1.msra.mxu0 0.0
      %1330 = vmatprep.subr.mxu0 0.0
      %1331 = vmatpush1.msra.mxu0 0.0
      %1332 = vmatprep.subr.mxu0 0.0
      %1333 = vmatpush1.msra.mxu0 0.0
      %1334 = vmatprep.subr.mxu0 0.0
      %1335 = vmatpush1.msra.mxu0 0.0
      %1336 = vmatprep.subr.mxu0 0.0
      %1337 = vmatpush1.msra.mxu0 0.0
      %1338 = vmatprep.subr.mxu0 0.0
      %1339 = vmatpush1.msra.mxu0 0.0
      %1340 = vmatprep.subr.mxu0 0.0
      %1341 = vmatpush1.msra.mxu0 0.0
      %1342 = vmatprep.subr.mxu0 0.0
      %1343 = vmatpush1.msra.mxu0 0.0
      %1344 = vmatprep.subr.mxu0 0.0
      %1345 = vmatpush1.msra.mxu0 0.0
      %1346 = vmatprep.mubr.f32.mxu0 0.0
      %1347 = vmatmul.mubr.f32.gmra.mrb[0].mxu0 %v920
      %v1348 = vpop.f32.mrb[0].mxu0
      %v1349 = vadd.f32 %v1236, %v1348
      %v1350 = vpop.f32.mrb[0].mxu0
      %v1351 = vadd.f32 %v1238, %v1350
      %1352 = vmatprep.mubr.f32.mxu0 0.0
      %1353 = vmatmul.mubr.f32.gmra.mrb[0].mxu0 %v923
      %v1354 = vpop.f32.mrb[0].mxu0
      %v1355 = vadd.f32 %v1242, %v1354
      %v1356 = vpop.f32.mrb[0].mxu0
      %v1357 = vadd.f32 %v1244, %v1356
      %1358 = vmatprep.mubr.f32.mxu0 0.0
      %1359 = vmatmul.mubr.f32.gmra.mrb[0].mxu0 %v926
      %v1360 = vpop.f32.mrb[0].mxu0
      %v1361 = vadd.f32 %v1248, %v1360
      %v1362 = vpop.f32.mrb[0].mxu0
      %v1363 = vadd.f32 %v1250, %v1362
      %1364 = vmatprep.mubr.f32.mxu0 0.0
      %1365 = vmatmul.mubr.f32.gmra.mrb[0].mxu0 %v929
      %v1366 = vpop.f32.mrb[0].mxu0
      %v1367 = vadd.f32 %v1254, %v1366
      %v1368 = vpop.f32.mrb[0].mxu0
      %v1369 = vadd.f32 %v1256, %v1368
      %1370 = vmatprep.mubr.f32.mxu0 0.0
      %1371 = vmatmul.mubr.f32.gmra.mrb[0].mxu0 %v932
      %v1372 = vpop.f32.mrb[0].mxu0
      %v1373 = vadd.f32 %v1260, %v1372
      %v1374 = vpop.f32.mrb[0].mxu0
      %v1375 = vadd.f32 %v1262, %v1374
      %1376 = vmatprep.mubr.f32.mxu0 0.0
      %1377 = vmatmul.mubr.f32.gmra.mrb[0].mxu0 %v935
      %v1378 = vpop.f32.mrb[0].mxu0
      %v1379 = vadd.f32 %v1266, %v1378
      %v1380 = vpop.f32.mrb[0].mxu0
      %v1381 = vadd.f32 %v1268, %v1380
      %1382 = vmatprep.mubr.f32.mxu0 0.0
      %1383 = vmatmul.mubr.f32.gmra.mrb[0].mxu0 %v938
      %v1384 = vpop.f32.mrb[0].mxu0
      %v1385 = vadd.f32 %v1272, %v1384
      %v1386 = vpop.f32.mrb[0].mxu0
      %v1387 = vadd.f32 %v1274, %v1386
      %1388 = vmatprep.mubr.f32.mxu0 0.0
      %1389 = vmatmul.mubr.f32.gmra.mrb[0].mxu0 %v941
      %v1390 = vpop.f32.mrb[0].mxu0
      %v1391 = vadd.f32 %v1278, %v1390
      %v1392 = vpop.f32.mrb[0].mxu0
      %v1393 = vadd.f32 %v1280, %v1392
      %1394 = vdwg.mxu0
      %v1395 = vmax.f32 %v1123, 0.0
      %v1396 = vmax.f32 %v1125, 0.0
      %v1397 = vmax.f32 %v1349, 0.0
      %v1398 = vmax.f32 %v1351, 0.0
      %v1399 = vmax.f32 %v1129, 0.0
      %v1400 = vmax.f32 %v1131, 0.0
      %v1401 = vmax.f32 %v1355, 0.0
      %v1402 = vmax.f32 %v1357, 0.0
      %v1403 = vmax.f32 %v1135, 0.0
      %v1404 = vmax.f32 %v1137, 0.0
      %v1405 = vmax.f32 %v1361, 0.0
      %v1406 = vmax.f32 %v1363, 0.0
      %v1407 = vmax.f32 %v1141, 0.0
      %v1408 = vmax.f32 %v1143, 0.0
      %v1409 = vmax.f32 %v1367, 0.0
      %v1410 = vmax.f32 %v1369, 0.0
      %v1411 = vmax.f32 %v1147, 0.0
      %v1412 = vmax.f32 %v1149, 0.0
      %v1413 = vmax.f32 %v1373, 0.0
      %v1414 = vmax.f32 %v1375, 0.0
      %v1415 = vmax.f32 %v1153, 0.0
      %v1416 = vmax.f32 %v1155, 0.0
      %v1417 = vmax.f32 %v1379, 0.0
      %v1418 = vmax.f32 %v1381, 0.0
      %v1419 = vmax.f32 %v1159, 0.0
      %v1420 = vmax.f32 %v1161, 0.0
      %v1421 = vmax.f32 %v1385, 0.0
      %v1422 = vmax.f32 %v1387, 0.0
      %v1423 = vmax.f32 %v1165, 0.0
      %v1424 = vmax.f32 %v1167, 0.0
      %v1425 = vmax.f32 %v1391, 0.0
      %v1426 = vmax.f32 %v1393, 0.0
      %1427 = vst [vmem:[#allocation2] sm:$0x1f] 0.0
      %1428 = vst [vmem:[#allocation2 + $0x8] sm:$0x1f] 0.0
      %1429 = vst [vmem:[#allocation2 + $0x10] sm:$0x1f] 0.0
      %1430 = vst [vmem:[#allocation2 + $0x18] sm:$0x1f] 0.0
      %1431 = vst [vmem:[#allocation2 + $0x20] sm:$0x1f] 0.0
      %1432 = vst [vmem:[#allocation2 + $0x28] sm:$0x1f] 0.0
      %1433 = vst [vmem:[#allocation2 + $0x30] sm:$0x1f] 0.0
      %1434 = vst [vmem:[#allocation2 + $0x38] sm:$0x1f] 0.0
      %1435 = vst [vmem:[#allocation2 + $0x40] sm:$0x1f] 0.0
      %1436 = vst [vmem:[#allocation2 + $0x48] sm:$0x1f] 0.0
      %1437 = vst [vmem:[#allocation2 + $0x50] sm:$0x1f] 0.0
      %1438 = vst [vmem:[#allocation2 + $0x58] sm:$0x1f] 0.0
      %1439 = vst [vmem:[#allocation2 + $0x60] sm:$0x1f] 0.0
      %1440 = vst [vmem:[#allocation2 + $0x68] sm:$0x1f] 0.0
      %1441 = vst [vmem:[#allocation2 + $0x70] sm:$0x1f] 0.0
      %1442 = vst [vmem:[#allocation2 + $0x78] sm:$0x1f] 0.0
      %1443 = vst [vmem:[#allocation2 + $0x80] sm:$0x1f] 0.0
      %1444 = vst [vmem:[#allocation2 + $0x88] sm:$0x1f] 0.0
      %1445 = vst [vmem:[#allocation2 + $0x90] sm:$0x1f] 0.0
      %1446 = vst [vmem:[#allocation2 + $0x98] sm:$0x1f] 0.0
      %1447 = vst [vmem:[#allocation2 + $0xa0] sm:$0x1f] 0.0
      %1448 = vst [vmem:[#allocation2 + $0xa8] sm:$0x1f] 0.0
      %1449 = vst [vmem:[#allocation2 + $0xb0] sm:$0x1f] 0.0
      %1450 = vst [vmem:[#allocation2 + $0xb8] sm:$0x1f] 0.0
      %1451 = vst [vmem:[#allocation2 + $0xc0] sm:$0x1f] 0.0
      %1452 = vst [vmem:[#allocation2 + $0xc8] sm:$0x1f] 0.0
      %1453 = vst [vmem:[#allocation2 + $0xd0] sm:$0x1f] 0.0
      %1454 = vst [vmem:[#allocation2 + $0xd8] sm:$0x1f] 0.0
      %1455 = vst [vmem:[#allocation2 + $0xe0] sm:$0x1f] 0.0
      %1456 = vst [vmem:[#allocation2 + $0xe8] sm:$0x1f] 0.0
      %1457 = vst [vmem:[#allocation2 + $0xf0] sm:$0x1f] 0.0
      %1458 = vst [vmem:[#allocation2 + $0xf8] sm:$0x1f] 0.0
      %1459 = vst [vmem:[#allocation2 + $0x100] sm:$0x1f] 0.0
      %1460 = vst [vmem:[#allocation2 + $0x108] sm:$0x1f] 0.0
      %1461 = vst [vmem:[#allocation2 + $0x110] sm:$0x1f] 0.0
      %1462 = vst [vmem:[#allocation2 + $0x118] sm:$0x1f] 0.0
      %1463 = vst [vmem:[#allocation2 + $0x120] sm:$0x1f] 0.0
      %1464 = vst [vmem:[#allocation2 + $0x128] sm:$0x1f] 0.0
      %1465 = vst [vmem:[#allocation2 + $0x130] sm:$0x1f] 0.0
      %1466 = vst [vmem:[#allocation2 + $0x138] sm:$0x1f] 0.0
      %1467 = vst [vmem:[#allocation2 + $0x140] sm:$0x1f] 0.0
      %1468 = vst [vmem:[#allocation2 + $0x148] sm:$0x1f] 0.0
      %1469 = vst [vmem:[#allocation2 + $0x150] sm:$0x1f] 0.0
      %1470 = vst [vmem:[#allocation2 + $0x158] sm:$0x1f] 0.0
      %1471 = vst [vmem:[#allocation2 + $0x160] sm:$0x1f] 0.0
      %1472 = vst [vmem:[#allocation2 + $0x168] sm:$0x1f] 0.0
      %1473 = vst [vmem:[#allocation2 + $0x170] sm:$0x1f] 0.0
      %1474 = vst [vmem:[#allocation2 + $0x178] sm:$0x1f] 0.0
      %1475 = vst [vmem:[#allocation2 + $0x180] sm:$0x1f] 0.0
      %1476 = vst [vmem:[#allocation2 + $0x188] sm:$0x1f] 0.0
      %1477 = vst [vmem:[#allocation2 + $0x190] sm:$0x1f] 0.0
      %1478 = vst [vmem:[#allocation2 + $0x198] sm:$0x1f] 0.0
      %1479 = vst [vmem:[#allocation2 + $0x1a0] sm:$0x1f] 0.0
      %1480 = vst [vmem:[#allocation2 + $0x1a8] sm:$0x1f] 0.0
      %1481 = vst [vmem:[#allocation2 + $0x1b0] sm:$0x1f] 0.0
      %1482 = vst [vmem:[#allocation2 + $0x1b8] sm:$0x1f] 0.0
      %1483 = vst [vmem:[#allocation2 + $0x1c0] sm:$0x1f] 0.0
      %1484 = vst [vmem:[#allocation2 + $0x1c8] sm:$0x1f] 0.0
      %1485 = vst [vmem:[#allocation2 + $0x1d0] sm:$0x1f] 0.0
      %1486 = vst [vmem:[#allocation2 + $0x1d8] sm:$0x1f] 0.0
      %1487 = vst [vmem:[#allocation2 + $0x1e0] sm:$0x1f] 0.0
      %1488 = vst [vmem:[#allocation2 + $0x1e8] sm:$0x1f] 0.0
      %1489 = vst [vmem:[#allocation2 + $0x1f0] sm:$0x1f] 0.0
      %1490 = vst [vmem:[#allocation2 + $0x1f8] sm:$0x1f] 0.0
      %1491 = vst [vmem:[#allocation2 + $0x200] sm:$0x1f] 0.0
      %1492 = vst [vmem:[#allocation2 + $0x208] sm:$0x1f] 0.0
      %1493 = vst [vmem:[#allocation2 + $0x210] sm:$0x1f] 0.0
      %1494 = vst [vmem:[#allocation2 + $0x218] sm:$0x1f] 0.0
      %1495 = vst [vmem:[#allocation2 + $0x220] sm:$0x1f] 0.0
      %1496 = vst [vmem:[#allocation2 + $0x228] sm:$0x1f] 0.0
      %1497 = vst [vmem:[#allocation2 + $0x230] sm:$0x1f] 0.0
      %1498 = vst [vmem:[#allocation2 + $0x238] sm:$0x1f] 0.0
      %1499 = vst [vmem:[#allocation2 + $0x240] sm:$0x1f] 0.0
      %1500 = vst [vmem:[#allocation2 + $0x248] sm:$0x1f] 0.0
      %1501 = vst [vmem:[#allocation2 + $0x250] sm:$0x1f] 0.0
      %1502 = vst [vmem:[#allocation2 + $0x258] sm:$0x1f] 0.0
      %1503 = vst [vmem:[#allocation2 + $0x260] sm:$0x1f] 0.0
      %1504 = vst [vmem:[#allocation2 + $0x268] sm:$0x1f] 0.0
      %1505 = vst [vmem:[#allocation2 + $0x270] sm:$0x1f] 0.0
      %1506 = vst [vmem:[#allocation2 + $0x278] sm:$0x1f] 0.0
      %1507 = vst [vmem:[#allocation2 + $0x280] sm:$0x1f] 0.0
      %1508 = vst [vmem:[#allocation2 + $0x288] sm:$0x1f] 0.0
      %1509 = vst [vmem:[#allocation2 + $0x290] sm:$0x1f] 0.0
      %1510 = vst [vmem:[#allocation2 + $0x298] sm:$0x1f] 0.0
      %1511 = vst [vmem:[#allocation2 + $0x2a0] sm:$0x1f] 0.0
      %1512 = vst [vmem:[#allocation2 + $0x2a8] sm:$0x1f] 0.0
      %1513 = vst [vmem:[#allocation2 + $0x2b0] sm:$0x1f] 0.0
      %1514 = vst [vmem:[#allocation2 + $0x2b8] sm:$0x1f] 0.0
      %1515 = vst [vmem:[#allocation2 + $0x2c0] sm:$0x1f] 0.0
      %1516 = vst [vmem:[#allocation2 + $0x2c8] sm:$0x1f] 0.0
      %1517 = vst [vmem:[#allocation2 + $0x2d0] sm:$0x1f] 0.0
      %1518 = vst [vmem:[#allocation2 + $0x2d8] sm:$0x1f] 0.0
      %1519 = vst [vmem:[#allocation2 + $0x2e0] sm:$0x1f] 0.0
      %1520 = vst [vmem:[#allocation2 + $0x2e8] sm:$0x1f] 0.0
      %1521 = vst [vmem:[#allocation2 + $0x2f0] sm:$0x1f] 0.0
      %1522 = vst [vmem:[#allocation2 + $0x2f8] sm:$0x1f] 0.0
      %1523 = vst [vmem:[#allocation2 + $0x300] sm:$0x1f] 0.0
      %1524 = vst [vmem:[#allocation2 + $0x308] sm:$0x1f] 0.0
      %1525 = vst [vmem:[#allocation2 + $0x310] sm:$0x1f] 0.0
      %1526 = vst [vmem:[#allocation2 + $0x318] sm:$0x1f] 0.0
      %v1559 = vcombine.low %v1395, %v1396
      %v1560 = vcombine.high %v1395, %v1396
      %v1561 = vcombine.low %v1397, %v1398
      %v1562 = vcombine.high %v1397, %v1398
      %v1563 = vcombine.low %v1399, %v1400
      %v1564 = vcombine.high %v1399, %v1400
      %v1565 = vcombine.low %v1401, %v1402
      %v1566 = vcombine.high %v1401, %v1402
      %v1567 = vcombine.low %v1403, %v1404
      %v1568 = vcombine.high %v1403, %v1404
      %v1569 = vcombine.low %v1405, %v1406
      %v1570 = vcombine.high %v1405, %v1406
      %v1571 = vcombine.low %v1407, %v1408
      %v1572 = vcombine.high %v1407, %v1408
      %v1573 = vcombine.low %v1409, %v1410
      %v1574 = vcombine.high %v1409, %v1410
      %v1575 = vcombine.low %v1411, %v1412
      %v1576 = vcombine.high %v1411, %v1412
      %v1577 = vcombine.low %v1413, %v1414
      %v1578 = vcombine.high %v1413, %v1414
      %v1579 = vcombine.low %v1415, %v1416
      %v1580 = vcombine.high %v1415, %v1416
      %v1581 = vcombine.low %v1417, %v1418
      %v1582 = vcombine.high %v1417, %v1418
      %v1583 = vcombine.low %v1419, %v1420
      %v1584 = vcombine.high %v1419, %v1420
      %v1585 = vcombine.low %v1421, %v1422
      %v1586 = vcombine.high %v1421, %v1422
      %v1587 = vcombine.low %v1423, %v1424
      %v1588 = vcombine.high %v1423, %v1424
      %v1589 = vcombine.low %v1425, %v1426
      %v1590 = vcombine.high %v1425, %v1426
      %v1623 = vcombine.high %v1559, %v1559
      %v1624 = vcombine.high %v1561, %v1561
      %v1625 = vcombine.high %v1560, %v1560
      %v1626 = vcombine.high %v1562, %v1562
      %v1627 = vcombine.high %v1563, %v1563
      %v1628 = vcombine.high %v1565, %v1565
      %v1629 = vcombine.high %v1564, %v1564
      %v1630 = vcombine.high %v1566, %v1566
      %v1631 = vcombine.high %v1567, %v1567
      %v1632 = vcombine.high %v1569, %v1569
      %v1633 = vcombine.high %v1568, %v1568
      %v1634 = vcombine.high %v1570, %v1570
      %v1635 = vcombine.high %v1571, %v1571
      %v1636 = vcombine.high %v1573, %v1573
      %v1637 = vcombine.high %v1572, %v1572
      %v1638 = vcombine.high %v1574, %v1574
      %v1639 = vcombine.high %v1575, %v1575
      %v1640 = vcombine.high %v1577, %v1577
      %v1641 = vcombine.high %v1576, %v1576
      %v1642 = vcombine.high %v1578, %v1578
      %v1643 = vcombine.high %v1579, %v1579
      %v1644 = vcombine.high %v1581, %v1581
      %v1645 = vcombine.high %v1580, %v1580
      %v1646 = vcombine.high %v1582, %v1582
      %v1647 = vcombine.high %v1583, %v1583
      %v1648 = vcombine.high %v1585, %v1585
      %v1649 = vcombine.high %v1584, %v1584
      %v1650 = vcombine.high %v1586, %v1586
      %v1651 = vcombine.high %v1587, %v1587
      %v1652 = vcombine.high %v1589, %v1589
      %v1653 = vcombine.high %v1588, %v1588
      %v1654 = vcombine.high %v1590, %v1590
      %1687 = vst [vmem:[#allocation2] sm:$0xf] %v1559
      %1688 = vst [vmem:[#allocation2 + $0x8] sm:$0xf] %v1623
      %1689 = vst [vmem:[#allocation2 + $0x10] sm:$0xf] %v1561
      %1690 = vst [vmem:[#allocation2 + $0x18] sm:$0xf] %v1624
      %1691 = vst [vmem:[#allocation2 + $0x20] sm:$0xf] %v1560
      %1692 = vst [vmem:[#allocation2 + $0x28] sm:$0xf] %v1625
      %1693 = vst [vmem:[#allocation2 + $0x30] sm:$0xf] %v1562
      %1694 = vst [vmem:[#allocation2 + $0x38] sm:$0xf] %v1626
      %1695 = vst [vmem:[#allocation2 + $0x40] sm:$0xf] %v1563
      %1696 = vst [vmem:[#allocation2 + $0x48] sm:$0xf] %v1627
      %1697 = vst [vmem:[#allocation2 + $0x50] sm:$0xf] %v1565
      %1698 = vst [vmem:[#allocation2 + $0x58] sm:$0xf] %v1628
      %1699 = vst [vmem:[#allocation2 + $0x60] sm:$0xf] %v1564
      %1700 = vst [vmem:[#allocation2 + $0x68] sm:$0xf] %v1629
      %1701 = vst [vmem:[#allocation2 + $0x70] sm:$0xf] %v1566
      %1702 = vst [vmem:[#allocation2 + $0x78] sm:$0xf] %v1630
      %1703 = vst [vmem:[#allocation2 + $0xa0] sm:$0xf] %v1567
      %1704 = vst [vmem:[#allocation2 + $0xa8] sm:$0xf] %v1631
      %1705 = vst [vmem:[#allocation2 + $0xb0] sm:$0xf] %v1569
      %1706 = vst [vmem:[#allocation2 + $0xb8] sm:$0xf] %v1632
      %1707 = vst [vmem:[#allocation2 + $0xc0] sm:$0xf] %v1568
      %1708 = vst [vmem:[#allocation2 + $0xc8] sm:$0xf] %v1633
      %1709 = vst [vmem:[#allocation2 + $0xd0] sm:$0xf] %v1570
      %1710 = vst [vmem:[#allocation2 + $0xd8] sm:$0xf] %v1634
      %1711 = vst [vmem:[#allocation2 + $0xe0] sm:$0xf] %v1571
      %1712 = vst [vmem:[#allocation2 + $0xe8] sm:$0xf] %v1635
      %1713 = vst [vmem:[#allocation2 + $0xf0] sm:$0xf] %v1573
      %1714 = vst [vmem:[#allocation2 + $0xf8] sm:$0xf] %v1636
      %1715 = vst [vmem:[#allocation2 + $0x100] sm:$0xf] %v1572
      %1716 = vst [vmem:[#allocation2 + $0x108] sm:$0xf] %v1637
      %1717 = vst [vmem:[#allocation2 + $0x110] sm:$0xf] %v1574
      %1718 = vst [vmem:[#allocation2 + $0x118] sm:$0xf] %v1638
      %1719 = vst [vmem:[#allocation2 + $0x140] sm:$0xf] %v1575
      %1720 = vst [vmem:[#allocation2 + $0x148] sm:$0xf] %v1639
      %1721 = vst [vmem:[#allocation2 + $0x150] sm:$0xf] %v1577
      %1722 = vst [vmem:[#allocation2 + $0x158] sm:$0xf] %v1640
      %1723 = vst [vmem:[#allocation2 + $0x160] sm:$0xf] %v1576
      %1724 = vst [vmem:[#allocation2 + $0x168] sm:$0xf] %v1641
      %1725 = vst [vmem:[#allocation2 + $0x170] sm:$0xf] %v1578
      %1726 = vst [vmem:[#allocation2 + $0x178] sm:$0xf] %v1642
      %1727 = vst [vmem:[#allocation2 + $0x180] sm:$0xf] %v1579
      %1728 = vst [vmem:[#allocation2 + $0x188] sm:$0xf] %v1643
      %1729 = vst [vmem:[#allocation2 + $0x190] sm:$0xf] %v1581
      %1730 = vst [vmem:[#allocation2 + $0x198] sm:$0xf] %v1644
      %1731 = vst [vmem:[#allocation2 + $0x1a0] sm:$0xf] %v1580
      %1732 = vst [vmem:[#allocation2 + $0x1a8] sm:$0xf] %v1645
      %1733 = vst [vmem:[#allocation2 + $0x1b0] sm:$0xf] %v1582
      %1734 = vst [vmem:[#allocation2 + $0x1b8] sm:$0xf] %v1646
      %1735 = vst [vmem:[#allocation2 + $0x1e0] sm:$0xf] %v1583
      %1736 = vst [vmem:[#allocation2 + $0x1e8] sm:$0xf] %v1647
      %1737 = vst [vmem:[#allocation2 + $0x1f0] sm:$0xf] %v1585
      %1738 = vst [vmem:[#allocation2 + $0x1f8] sm:$0xf] %v1648
      %1739 = vst [vmem:[#allocation2 + $0x200] sm:$0xf] %v1584
      %1740 = vst [vmem:[#allocation2 + $0x208] sm:$0xf] %v1649
      %1741 = vst [vmem:[#allocation2 + $0x210] sm:$0xf] %v1586
      %1742 = vst [vmem:[#allocation2 + $0x218] sm:$0xf] %v1650
      %1743 = vst [vmem:[#allocation2 + $0x220] sm:$0xf] %v1587
      %1744 = vst [vmem:[#allocation2 + $0x228] sm:$0xf] %v1651
      %1745 = vst [vmem:[#allocation2 + $0x230] sm:$0xf] %v1589
      %1746 = vst [vmem:[#allocation2 + $0x238] sm:$0xf] %v1652
      %1747 = vst [vmem:[#allocation2 + $0x240] sm:$0xf] %v1588
      %1748 = vst [vmem:[#allocation2 + $0x248] sm:$0xf] %v1653
      %1749 = vst [vmem:[#allocation2 + $0x250] sm:$0xf] %v1590
      %1750 = vst [vmem:[#allocation2 + $0x258] sm:$0xf] %v1654
      %v1751 = vld [vmem:[#allocation2] sm:$0xf]
      %v1752 = vld [vmem:[#allocation2 + $0x20] sm:$0xf]
      %v1753 = vld [vmem:[#allocation2 + $0x40] sm:$0xf]
      %v1754 = vld [vmem:[#allocation2 + $0x60] sm:$0xf]
      %v1755 = vld [vmem:[#allocation2 + $0xa0] sm:$0xf]
      %v1756 = vld [vmem:[#allocation2 + $0xc0] sm:$0xf]
      %v1757 = vld [vmem:[#allocation2 + $0xe0] sm:$0xf]
      %v1758 = vld [vmem:[#allocation2 + $0x100] sm:$0xf]
      %v1759 = vld [vmem:[#allocation2 + $0x140] sm:$0xf]
      %v1760 = vld [vmem:[#allocation2 + $0x160] sm:$0xf]
      %v1761 = vld [vmem:[#allocation2 + $0x180] sm:$0xf]
      %v1762 = vld [vmem:[#allocation2 + $0x1a0] sm:$0xf]
      %v1763 = vld [vmem:[#allocation2 + $0x1e0] sm:$0xf]
      %v1764 = vld [vmem:[#allocation2 + $0x200] sm:$0xf]
      %v1765 = vld [vmem:[#allocation2 + $0x220] sm:$0xf]
      %v1766 = vld [vmem:[#allocation2 + $0x240] sm:$0xf]
      %v1767 = vld [vmem:[#allocation2 + $0x8] sm:$0xf]
      %v1768 = vld [vmem:[#allocation2 + $0x28] sm:$0xf]
      %v1769 = vld [vmem:[#allocation2 + $0x48] sm:$0xf]
      %v1770 = vld [vmem:[#allocation2 + $0x68] sm:$0xf]
      %v1771 = vld [vmem:[#allocation2 + $0xa8] sm:$0xf]
      %v1772 = vld [vmem:[#allocation2 + $0xc8] sm:$0xf]
      %v1773 = vld [vmem:[#allocation2 + $0xe8] sm:$0xf]
      %v1774 = vld [vmem:[#allocation2 + $0x108] sm:$0xf]
      %v1775 = vld [vmem:[#allocation2 + $0x148] sm:$0xf]
      %v1776 = vld [vmem:[#allocation2 + $0x168] sm:$0xf]
      %v1777 = vld [vmem:[#allocation2 + $0x188] sm:$0xf]
      %v1778 = vld [vmem:[#allocation2 + $0x1a8] sm:$0xf]
      %v1779 = vld [vmem:[#allocation2 + $0x1e8] sm:$0xf]
      %v1780 = vld [vmem:[#allocation2 + $0x208] sm:$0xf]
      %v1781 = vld [vmem:[#allocation2 + $0x228] sm:$0xf]
      %v1782 = vld [vmem:[#allocation2 + $0x248] sm:$0xf]
      %v1783 = vld [vmem:[#allocation2 + $0x10] sm:$0xf]
      %v1784 = vld [vmem:[#allocation2 + $0x30] sm:$0xf]
      %v1785 = vld [vmem:[#allocation2 + $0x50] sm:$0xf]
      %v1786 = vld [vmem:[#allocation2 + $0x70] sm:$0xf]
      %v1787 = vld [vmem:[#allocation2 + $0xb0] sm:$0xf]
      %v1788 = vld [vmem:[#allocation2 + $0xd0] sm:$0xf]
      %v1789 = vld [vmem:[#allocation2 + $0xf0] sm:$0xf]
      %v1790 = vld [vmem:[#allocation2 + $0x110] sm:$0xf]
      %v1791 = vld [vmem:[#allocation2 + $0x150] sm:$0xf]
      %v1792 = vld [vmem:[#allocation2 + $0x170] sm:$0xf]
      %v1793 = vld [vmem:[#allocation2 + $0x190] sm:$0xf]
      %v1794 = vld [vmem:[#allocation2 + $0x1b0] sm:$0xf]
      %v1795 = vld [vmem:[#allocation2 + $0x1f0] sm:$0xf]
      %v1796 = vld [vmem:[#allocation2 + $0x210] sm:$0xf]
      %v1797 = vld [vmem:[#allocation2 + $0x230] sm:$0xf]
      %v1798 = vld [vmem:[#allocation2 + $0x250] sm:$0xf]
      %v1799 = vld [vmem:[#allocation2 + $0x18] sm:$0xf]
      %v1800 = vld [vmem:[#allocation2 + $0x38] sm:$0xf]
      %v1801 = vld [vmem:[#allocation2 + $0x58] sm:$0xf]
      %v1802 = vld [vmem:[#allocation2 + $0x78] sm:$0xf]
      %v1803 = vld [vmem:[#allocation2 + $0xb8] sm:$0xf]
      %v1804 = vld [vmem:[#allocation2 + $0xd8] sm:$0xf]
      %v1805 = vld [vmem:[#allocation2 + $0xf8] sm:$0xf]
      %v1806 = vld [vmem:[#allocation2 + $0x118] sm:$0xf]
      %v1807 = vld [vmem:[#allocation2 + $0x158] sm:$0xf]
      %v1808 = vld [vmem:[#allocation2 + $0x178] sm:$0xf]
      %v1809 = vld [vmem:[#allocation2 + $0x198] sm:$0xf]
      %v1810 = vld [vmem:[#allocation2 + $0x1b8] sm:$0xf]
      %v1811 = vld [vmem:[#allocation2 + $0x1f8] sm:$0xf]
      %v1812 = vld [vmem:[#allocation2 + $0x218] sm:$0xf]
      %v1813 = vld [vmem:[#allocation2 + $0x238] sm:$0xf]
      %v1814 = vld [vmem:[#allocation2 + $0x258] sm:$0xf]
      %v1831 = vcombine.low %v1751, %v1752
      %v1832 = vcombine.low %v1753, %v1754
      %v1833 = vcombine.low %v1755, %v1756
      %v1834 = vcombine.low %v1757, %v1758
      %v1835 = vcombine.low %v1759, %v1760
      %v1836 = vcombine.low %v1761, %v1762
      %v1837 = vcombine.low %v1763, %v1764
      %v1838 = vcombine.low %v1765, %v1766
      %v1863 = vcombine.low %v1767, %v1768
      %v1864 = vcombine.low %v1769, %v1770
      %v1865 = vcombine.low %v1771, %v1772
      %v1866 = vcombine.low %v1773, %v1774
      %v1867 = vcombine.low %v1775, %v1776
      %v1868 = vcombine.low %v1777, %v1778
      %v1869 = vcombine.low %v1779, %v1780
      %v1870 = vcombine.low %v1781, %v1782
      %v1895 = vcombine.low %v1783, %v1784
      %v1896 = vcombine.low %v1785, %v1786
      %v1897 = vcombine.low %v1787, %v1788
      %v1898 = vcombine.low %v1789, %v1790
      %v1899 = vcombine.low %v1791, %v1792
      %v1900 = vcombine.low %v1793, %v1794
      %v1901 = vcombine.low %v1795, %v1796
      %v1902 = vcombine.low %v1797, %v1798
      %v1927 = vcombine.low %v1799, %v1800
      %v1928 = vcombine.low %v1801, %v1802
      %v1929 = vcombine.low %v1803, %v1804
      %v1930 = vcombine.low %v1805, %v1806
      %v1931 = vcombine.low %v1807, %v1808
      %v1932 = vcombine.low %v1809, %v1810
      %v1933 = vcombine.low %v1811, %v1812
      %v1934 = vcombine.low %v1813, %v1814
      %v1943 = vsel %vm918, %v1831, %v1831
      %v1944 = vsel %vm918, %v1832, %v1832
      %v1945 = vsel %vm918, %v1833, %v1833
      %v1946 = vsel %vm918, %v1834, %v1834
      %v1947 = vsel %vm918, %v1835, %v1835
      %v1948 = vsel %vm918, %v1836, %v1836
      %v1949 = vsel %vm918, %v1837, %v1837
      %v1950 = vsel %vm918, %v1838, %v1838
      %v1951 = vsel %vm918, %v1863, %v1863
      %v1952 = vsel %vm918, %v1864, %v1864
      %v1953 = vsel %vm918, %v1865, %v1865
      %v1954 = vsel %vm918, %v1866, %v1866
      %v1955 = vsel %vm918, %v1867, %v1867
      %v1956 = vsel %vm918, %v1868, %v1868
      %v1957 = vsel %vm918, %v1869, %v1869
      %v1958 = vsel %vm918, %v1870, %v1870
      %v1959 = vsel %vm918, %v1895, %v1895
      %v1960 = vsel %vm918, %v1896, %v1896
      %v1961 = vsel %vm918, %v1897, %v1897
      %v1962 = vsel %vm918, %v1898, %v1898
      %v1963 = vsel %vm918, %v1899, %v1899
      %v1964 = vsel %vm918, %v1900, %v1900
      %v1965 = vsel %vm918, %v1901, %v1901
      %v1966 = vsel %vm918, %v1902, %v1902
      %v1967 = vsel %vm918, %v1927, %v1927
      %v1968 = vsel %vm918, %v1928, %v1928
      %v1969 = vsel %vm918, %v1929, %v1929
      %v1970 = vsel %vm918, %v1930, %v1930
      %v1971 = vsel %vm918, %v1931, %v1931
      %v1972 = vsel %vm918, %v1932, %v1932
      %v1973 = vsel %vm918, %v1933, %v1933
      %v1974 = vsel %vm918, %v1934, %v1934
      %v1975 = vld [vmem:[#allocation2] sm:$0x1e]
      %v1976 = vld [vmem:[#allocation2 + $0x20] sm:$0x1e]
      %v1977 = vld [vmem:[#allocation2 + $0x40] sm:$0x1e]
      %v1978 = vld [vmem:[#allocation2 + $0x60] sm:$0x1e]
      %v1979 = vld [vmem:[#allocation2 + $0xa0] sm:$0x1e]
      %v1980 = vld [vmem:[#allocation2 + $0xc0] sm:$0x1e]
      %v1981 = vld [vmem:[#allocation2 + $0xe0] sm:$0x1e]
      %v1982 = vld [vmem:[#allocation2 + $0x100] sm:$0x1e]
      %v1983 = vld [vmem:[#allocation2 + $0x140] sm:$0x1e]
      %v1984 = vld [vmem:[#allocation2 + $0x160] sm:$0x1e]
      %v1985 = vld [vmem:[#allocation2 + $0x180] sm:$0x1e]
      %v1986 = vld [vmem:[#allocation2 + $0x1a0] sm:$0x1e]
      %v1987 = vld [vmem:[#allocation2 + $0x1e0] sm:$0x1e]
      %v1988 = vld [vmem:[#allocation2 + $0x200] sm:$0x1e]
      %v1989 = vld [vmem:[#allocation2 + $0x220] sm:$0x1e]
      %v1990 = vld [vmem:[#allocation2 + $0x240] sm:$0x1e]
      %v2007 = vcombine.high %v1975, %v1975
      %v2008 = vcombine.high %v1976, %v1976
      %v2009 = vcombine.high %v1977, %v1977
      %v2010 = vcombine.high %v1978, %v1978
      %v2011 = vcombine.high %v1979, %v1979
      %v2012 = vcombine.high %v1980, %v1980
      %v2013 = vcombine.high %v1981, %v1981
      %v2014 = vcombine.high %v1982, %v1982
      %v2015 = vcombine.high %v1983, %v1983
      %v2016 = vcombine.high %v1984, %v1984
      %v2017 = vcombine.high %v1985, %v1985
      %v2018 = vcombine.high %v1986, %v1986
      %v2019 = vcombine.high %v1987, %v1987
      %v2020 = vcombine.high %v1988, %v1988
      %v2021 = vcombine.high %v1989, %v1989
      %v2022 = vcombine.high %v1990, %v1990
      %v2023 = vrot.slane %v1975, 5
      %v2024 = vrot.slane %v2023, 4
      %v2025 = vrot.slane %v2007, 5
      %v2026 = vsel %vm338, %v2024, %v2025
      %v2027 = vrot.slane %v1976, 5
      %v2028 = vrot.slane %v2027, 4
      %v2029 = vrot.slane %v2008, 5
      %v2030 = vsel %vm338, %v2028, %v2029
      %v2031 = vrot.slane %v1977, 5
      %v2032 = vrot.slane %v2031, 4
      %v2033 = vrot.slane %v2009, 5
      %v2034 = vsel %vm338, %v2032, %v2033
      %v2035 = vrot.slane %v1978, 5
      %v2036 = vrot.slane %v2035, 4
      %v2037 = vrot.slane %v2010, 5
      %v2038 = vsel %vm338, %v2036, %v2037
      %v2039 = vrot.slane %v1979, 5
      %v2040 = vrot.slane %v2039, 4
      %v2041 = vrot.slane %v2011, 5
      %v2042 = vsel %vm338, %v2040, %v2041
      %v2043 = vrot.slane %v1980, 5
      %v2044 = vrot.slane %v2043, 4
      %v2045 = vrot.slane %v2012, 5
      %v2046 = vsel %vm338, %v2044, %v2045
      %v2047 = vrot.slane %v1981, 5
      %v2048 = vrot.slane %v2047, 4
      %v2049 = vrot.slane %v2013, 5
      %v2050 = vsel %vm338, %v2048, %v2049
      %v2051 = vrot.slane %v1982, 5
      %v2052 = vrot.slane %v2051, 4
      %v2053 = vrot.slane %v2014, 5
      %v2054 = vsel %vm338, %v2052, %v2053
      %v2055 = vrot.slane %v1983, 5
      %v2056 = vrot.slane %v2055, 4
      %v2057 = vrot.slane %v2015, 5
      %v2058 = vsel %vm338, %v2056, %v2057
      %v2059 = vrot.slane %v1984, 5
      %v2060 = vrot.slane %v2059, 4
      %v2061 = vrot.slane %v2016, 5
      %v2062 = vsel %vm338, %v2060, %v2061
      %v2063 = vrot.slane %v1985, 5
      %v2064 = vrot.slane %v2063, 4
      %v2065 = vrot.slane %v2017, 5
      %v2066 = vsel %vm338, %v2064, %v2065
      %v2067 = vrot.slane %v1986, 5
      %v2068 = vrot.slane %v2067, 4
      %v2069 = vrot.slane %v2018, 5
      %v2070 = vsel %vm338, %v2068, %v2069
      %v2071 = vrot.slane %v1987, 5
      %v2072 = vrot.slane %v2071, 4
      %v2073 = vrot.slane %v2019, 5
      %v2074 = vsel %vm338, %v2072, %v2073
      %v2075 = vrot.slane %v1988, 5
      %v2076 = vrot.slane %v2075, 4
      %v2077 = vrot.slane %v2020, 5
      %v2078 = vsel %vm338, %v2076, %v2077
      %v2079 = vrot.slane %v1989, 5
      %v2080 = vrot.slane %v2079, 4
      %v2081 = vrot.slane %v2021, 5
      %v2082 = vsel %vm338, %v2080, %v2081
      %v2083 = vrot.slane %v1990, 5
      %v2084 = vrot.slane %v2083, 4
      %v2085 = vrot.slane %v2022, 5
      %v2086 = vsel %vm338, %v2084, %v2085
      %v2087 = vld [vmem:[#allocation2 + $0x8] sm:$0x1e]
      %v2088 = vld [vmem:[#allocation2 + $0x28] sm:$0x1e]
      %v2089 = vld [vmem:[#allocation2 + $0x48] sm:$0x1e]
      %v2090 = vld [vmem:[#allocation2 + $0x68] sm:$0x1e]
      %v2091 = vld [vmem:[#allocation2 + $0xa8] sm:$0x1e]
      %v2092 = vld [vmem:[#allocation2 + $0xc8] sm:$0x1e]
      %v2093 = vld [vmem:[#allocation2 + $0xe8] sm:$0x1e]
      %v2094 = vld [vmem:[#allocation2 + $0x108] sm:$0x1e]
      %v2095 = vld [vmem:[#allocation2 + $0x148] sm:$0x1e]
      %v2096 = vld [vmem:[#allocation2 + $0x168] sm:$0x1e]
      %v2097 = vld [vmem:[#allocation2 + $0x188] sm:$0x1e]
      %v2098 = vld [vmem:[#allocation2 + $0x1a8] sm:$0x1e]
      %v2099 = vld [vmem:[#allocation2 + $0x1e8] sm:$0x1e]
      %v2100 = vld [vmem:[#allocation2 + $0x208] sm:$0x1e]
      %v2101 = vld [vmem:[#allocation2 + $0x228] sm:$0x1e]
      %v2102 = vld [vmem:[#allocation2 + $0x248] sm:$0x1e]
      %v2119 = vcombine.high %v2087, %v2087
      %v2120 = vcombine.high %v2088, %v2088
      %v2121 = vcombine.high %v2089, %v2089
      %v2122 = vcombine.high %v2090, %v2090
      %v2123 = vcombine.high %v2091, %v2091
      %v2124 = vcombine.high %v2092, %v2092
      %v2125 = vcombine.high %v2093, %v2093
      %v2126 = vcombine.high %v2094, %v2094
      %v2127 = vcombine.high %v2095, %v2095
      %v2128 = vcombine.high %v2096, %v2096
      %v2129 = vcombine.high %v2097, %v2097
      %v2130 = vcombine.high %v2098, %v2098
      %v2131 = vcombine.high %v2099, %v2099
      %v2132 = vcombine.high %v2100, %v2100
      %v2133 = vcombine.high %v2101, %v2101
      %v2134 = vcombine.high %v2102, %v2102
      %v2135 = vrot.slane %v2087, 5
      %v2136 = vrot.slane %v2135, 4
      %v2137 = vrot.slane %v2119, 5
      %v2138 = vsel %vm338, %v2136, %v2137
      %v2139 = vrot.slane %v2088, 5
      %v2140 = vrot.slane %v2139, 4
      %v2141 = vrot.slane %v2120, 5
      %v2142 = vsel %vm338, %v2140, %v2141
      %v2143 = vrot.slane %v2089, 5
      %v2144 = vrot.slane %v2143, 4
      %v2145 = vrot.slane %v2121, 5
      %v2146 = vsel %vm338, %v2144, %v2145
      %v2147 = vrot.slane %v2090, 5
      %v2148 = vrot.slane %v2147, 4
      %v2149 = vrot.slane %v2122, 5
      %v2150 = vsel %vm338, %v2148, %v2149
      %v2151 = vrot.slane %v2091, 5
      %v2152 = vrot.slane %v2151, 4
      %v2153 = vrot.slane %v2123, 5
      %v2154 = vsel %vm338, %v2152, %v2153
      %v2155 = vrot.slane %v2092, 5
      %v2156 = vrot.slane %v2155, 4
      %v2157 = vrot.slane %v2124, 5
      %v2158 = vsel %vm338, %v2156, %v2157
      %v2159 = vrot.slane %v2093, 5
      %v2160 = vrot.slane %v2159, 4
      %v2161 = vrot.slane %v2125, 5
      %v2162 = vsel %vm338, %v2160, %v2161
      %v2163 = vrot.slane %v2094, 5
      %v2164 = vrot.slane %v2163, 4
      %v2165 = vrot.slane %v2126, 5
      %v2166 = vsel %vm338, %v2164, %v2165
      %v2167 = vrot.slane %v2095, 5
      %v2168 = vrot.slane %v2167, 4
      %v2169 = vrot.slane %v2127, 5
      %v2170 = vsel %vm338, %v2168, %v2169
      %v2171 = vrot.slane %v2096, 5
      %v2172 = vrot.slane %v2171, 4
      %v2173 = vrot.slane %v2128, 5
      %v2174 = vsel %vm338, %v2172, %v2173
      %v2175 = vrot.slane %v2097, 5
      %v2176 = vrot.slane %v2175, 4
      %v2177 = vrot.slane %v2129, 5
      %v2178 = vsel %vm338, %v2176, %v2177
      %v2179 = vrot.slane %v2098, 5
      %v2180 = vrot.slane %v2179, 4
      %v2181 = vrot.slane %v2130, 5
      %v2182 = vsel %vm338, %v2180, %v2181
      %v2183 = vrot.slane %v2099, 5
      %v2184 = vrot.slane %v2183, 4
      %v2185 = vrot.slane %v2131, 5
      %v2186 = vsel %vm338, %v2184, %v2185
      %v2187 = vrot.slane %v2100, 5
      %v2188 = vrot.slane %v2187, 4
      %v2189 = vrot.slane %v2132, 5
      %v2190 = vsel %vm338, %v2188, %v2189
      %v2191 = vrot.slane %v2101, 5
      %v2192 = vrot.slane %v2191, 4
      %v2193 = vrot.slane %v2133, 5
      %v2194 = vsel %vm338, %v2192, %v2193
      %v2195 = vrot.slane %v2102, 5
      %v2196 = vrot.slane %v2195, 4
      %v2197 = vrot.slane %v2134, 5
      %v2198 = vsel %vm338, %v2196, %v2197
      %v2199 = vld [vmem:[#allocation2 + $0x10] sm:$0x1e]
      %v2200 = vld [vmem:[#allocation2 + $0x30] sm:$0x1e]
      %v2201 = vld [vmem:[#allocation2 + $0x50] sm:$0x1e]
      %v2202 = vld [vmem:[#allocation2 + $0x70] sm:$0x1e]
      %v2203 = vld [vmem:[#allocation2 + $0xb0] sm:$0x1e]
      %v2204 = vld [vmem:[#allocation2 + $0xd0] sm:$0x1e]
      %v2205 = vld [vmem:[#allocation2 + $0xf0] sm:$0x1e]
      %v2206 = vld [vmem:[#allocation2 + $0x110] sm:$0x1e]
      %v2207 = vld [vmem:[#allocation2 + $0x150] sm:$0x1e]
      %v2208 = vld [vmem:[#allocation2 + $0x170] sm:$0x1e]
      %v2209 = vld [vmem:[#allocation2 + $0x190] sm:$0x1e]
      %v2210 = vld [vmem:[#allocation2 + $0x1b0] sm:$0x1e]
      %v2211 = vld [vmem:[#allocation2 + $0x1f0] sm:$0x1e]
      %v2212 = vld [vmem:[#allocation2 + $0x210] sm:$0x1e]
      %v2213 = vld [vmem:[#allocation2 + $0x230] sm:$0x1e]
      %v2214 = vld [vmem:[#allocation2 + $0x250] sm:$0x1e]
      %v2231 = vcombine.high %v2199, %v2199
      %v2232 = vcombine.high %v2200, %v2200
      %v2233 = vcombine.high %v2201, %v2201
      %v2234 = vcombine.high %v2202, %v2202
      %v2235 = vcombine.high %v2203, %v2203
      %v2236 = vcombine.high %v2204, %v2204
      %v2237 = vcombine.high %v2205, %v2205
      %v2238 = vcombine.high %v2206, %v2206
      %v2239 = vcombine.high %v2207, %v2207
      %v2240 = vcombine.high %v2208, %v2208
      %v2241 = vcombine.high %v2209, %v2209
      %v2242 = vcombine.high %v2210, %v2210
      %v2243 = vcombine.high %v2211, %v2211
      %v2244 = vcombine.high %v2212, %v2212
      %v2245 = vcombine.high %v2213, %v2213
      %v2246 = vcombine.high %v2214, %v2214
      %v2247 = vrot.slane %v2199, 5
      %v2248 = vrot.slane %v2247, 4
      %v2249 = vrot.slane %v2231, 5
      %v2250 = vsel %vm338, %v2248, %v2249
      %v2251 = vrot.slane %v2200, 5
      %v2252 = vrot.slane %v2251, 4
      %v2253 = vrot.slane %v2232, 5
      %v2254 = vsel %vm338, %v2252, %v2253
      %v2255 = vrot.slane %v2201, 5
      %v2256 = vrot.slane %v2255, 4
      %v2257 = vrot.slane %v2233, 5
      %v2258 = vsel %vm338, %v2256, %v2257
      %v2259 = vrot.slane %v2202, 5
      %v2260 = vrot.slane %v2259, 4
      %v2261 = vrot.slane %v2234, 5
      %v2262 = vsel %vm338, %v2260, %v2261
      %v2263 = vrot.slane %v2203, 5
      %v2264 = vrot.slane %v2263, 4
      %v2265 = vrot.slane %v2235, 5
      %v2266 = vsel %vm338, %v2264, %v2265
      %v2267 = vrot.slane %v2204, 5
      %v2268 = vrot.slane %v2267, 4
      %v2269 = vrot.slane %v2236, 5
      %v2270 = vsel %vm338, %v2268, %v2269
      %v2271 = vrot.slane %v2205, 5
      %v2272 = vrot.slane %v2271, 4
      %v2273 = vrot.slane %v2237, 5
      %v2274 = vsel %vm338, %v2272, %v2273
      %v2275 = vrot.slane %v2206, 5
      %v2276 = vrot.slane %v2275, 4
      %v2277 = vrot.slane %v2238, 5
      %v2278 = vsel %vm338, %v2276, %v2277
      %v2279 = vrot.slane %v2207, 5
      %v2280 = vrot.slane %v2279, 4
      %v2281 = vrot.slane %v2239, 5
      %v2282 = vsel %vm338, %v2280, %v2281
      %v2283 = vrot.slane %v2208, 5
      %v2284 = vrot.slane %v2283, 4
      %v2285 = vrot.slane %v2240, 5
      %v2286 = vsel %vm338, %v2284, %v2285
      %v2287 = vrot.slane %v2209, 5
      %v2288 = vrot.slane %v2287, 4
      %v2289 = vrot.slane %v2241, 5
      %v2290 = vsel %vm338, %v2288, %v2289
      %v2291 = vrot.slane %v2210, 5
      %v2292 = vrot.slane %v2291, 4
      %v2293 = vrot.slane %v2242, 5
      %v2294 = vsel %vm338, %v2292, %v2293
      %v2295 = vrot.slane %v2211, 5
      %v2296 = vrot.slane %v2295, 4
      %v2297 = vrot.slane %v2243, 5
      %v2298 = vsel %vm338, %v2296, %v2297
      %v2299 = vrot.slane %v2212, 5
      %v2300 = vrot.slane %v2299, 4
      %v2301 = vrot.slane %v2244, 5
      %v2302 = vsel %vm338, %v2300, %v2301
      %v2303 = vrot.slane %v2213, 5
      %v2304 = vrot.slane %v2303, 4
      %v2305 = vrot.slane %v2245, 5
      %v2306 = vsel %vm338, %v2304, %v2305
      %v2307 = vrot.slane %v2214, 5
      %v2308 = vrot.slane %v2307, 4
      %v2309 = vrot.slane %v2246, 5
      %v2310 = vsel %vm338, %v2308, %v2309
      %v2311 = vld [vmem:[#allocation2 + $0x18] sm:$0x1e]
      %v2312 = vld [vmem:[#allocation2 + $0x38] sm:$0x1e]
      %v2313 = vld [vmem:[#allocation2 + $0x58] sm:$0x1e]
      %v2314 = vld [vmem:[#allocation2 + $0x78] sm:$0x1e]
      %v2315 = vld [vmem:[#allocation2 + $0xb8] sm:$0x1e]
      %v2316 = vld [vmem:[#allocation2 + $0xd8] sm:$0x1e]
      %v2317 = vld [vmem:[#allocation2 + $0xf8] sm:$0x1e]
      %v2318 = vld [vmem:[#allocation2 + $0x118] sm:$0x1e]
      %v2319 = vld [vmem:[#allocation2 + $0x158] sm:$0x1e]
      %v2320 = vld [vmem:[#allocation2 + $0x178] sm:$0x1e]
      %v2321 = vld [vmem:[#allocation2 + $0x198] sm:$0x1e]
      %v2322 = vld [vmem:[#allocation2 + $0x1b8] sm:$0x1e]
      %v2323 = vld [vmem:[#allocation2 + $0x1f8] sm:$0x1e]
      %v2324 = vld [vmem:[#allocation2 + $0x218] sm:$0x1e]
      %v2325 = vld [vmem:[#allocation2 + $0x238] sm:$0x1e]
      %v2326 = vld [vmem:[#allocation2 + $0x258] sm:$0x1e]
      %v2343 = vcombine.high %v2311, %v2311
      %v2344 = vcombine.high %v2312, %v2312
      %v2345 = vcombine.high %v2313, %v2313
      %v2346 = vcombine.high %v2314, %v2314
      %v2347 = vcombine.high %v2315, %v2315
      %v2348 = vcombine.high %v2316, %v2316
      %v2349 = vcombine.high %v2317, %v2317
      %v2350 = vcombine.high %v2318, %v2318
      %v2351 = vcombine.high %v2319, %v2319
      %v2352 = vcombine.high %v2320, %v2320
      %v2353 = vcombine.high %v2321, %v2321
      %v2354 = vcombine.high %v2322, %v2322
      %v2355 = vcombine.high %v2323, %v2323
      %v2356 = vcombine.high %v2324, %v2324
      %v2357 = vcombine.high %v2325, %v2325
      %v2358 = vcombine.high %v2326, %v2326
      %v2359 = vrot.slane %v2311, 5
      %v2360 = vrot.slane %v2359, 4
      %v2361 = vrot.slane %v2343, 5
      %v2362 = vsel %vm338, %v2360, %v2361
      %v2363 = vrot.slane %v2312, 5
      %v2364 = vrot.slane %v2363, 4
      %v2365 = vrot.slane %v2344, 5
      %v2366 = vsel %vm338, %v2364, %v2365
      %v2367 = vrot.slane %v2313, 5
      %v2368 = vrot.slane %v2367, 4
      %v2369 = vrot.slane %v2345, 5
      %v2370 = vsel %vm338, %v2368, %v2369
      %v2371 = vrot.slane %v2314, 5
      %v2372 = vrot.slane %v2371, 4
      %v2373 = vrot.slane %v2346, 5
      %v2374 = vsel %vm338, %v2372, %v2373
      %v2375 = vrot.slane %v2315, 5
      %v2376 = vrot.slane %v2375, 4
      %v2377 = vrot.slane %v2347, 5
      %v2378 = vsel %vm338, %v2376, %v2377
      %v2379 = vrot.slane %v2316, 5
      %v2380 = vrot.slane %v2379, 4
      %v2381 = vrot.slane %v2348, 5
      %v2382 = vsel %vm338, %v2380, %v2381
      %v2383 = vrot.slane %v2317, 5
      %v2384 = vrot.slane %v2383, 4
      %v2385 = vrot.slane %v2349, 5
      %v2386 = vsel %vm338, %v2384, %v2385
      %v2387 = vrot.slane %v2318, 5
      %v2388 = vrot.slane %v2387, 4
      %v2389 = vrot.slane %v2350, 5
      %v2390 = vsel %vm338, %v2388, %v2389
      %v2391 = vrot.slane %v2319, 5
      %v2392 = vrot.slane %v2391, 4
      %v2393 = vrot.slane %v2351, 5
      %v2394 = vsel %vm338, %v2392, %v2393
      %v2395 = vrot.slane %v2320, 5
      %v2396 = vrot.slane %v2395, 4
      %v2397 = vrot.slane %v2352, 5
      %v2398 = vsel %vm338, %v2396, %v2397
      %v2399 = vrot.slane %v2321, 5
      %v2400 = vrot.slane %v2399, 4
      %v2401 = vrot.slane %v2353, 5
      %v2402 = vsel %vm338, %v2400, %v2401
      %v2403 = vrot.slane %v2322, 5
      %v2404 = vrot.slane %v2403, 4
      %v2405 = vrot.slane %v2354, 5
      %v2406 = vsel %vm338, %v2404, %v2405
      %v2407 = vrot.slane %v2323, 5
      %v2408 = vrot.slane %v2407, 4
      %v2409 = vrot.slane %v2355, 5
      %v2410 = vsel %vm338, %v2408, %v2409
      %v2411 = vrot.slane %v2324, 5
      %v2412 = vrot.slane %v2411, 4
      %v2413 = vrot.slane %v2356, 5
      %v2414 = vsel %vm338, %v2412, %v2413
      %v2415 = vrot.slane %v2325, 5
      %v2416 = vrot.slane %v2415, 4
      %v2417 = vrot.slane %v2357, 5
      %v2418 = vsel %vm338, %v2416, %v2417
      %v2419 = vrot.slane %v2326, 5
      %v2420 = vrot.slane %v2419, 4
      %v2421 = vrot.slane %v2358, 5
      %v2422 = vsel %vm338, %v2420, %v2421
      %2423 = vrot.lane.b32.xlu0 %v1831, 64
      %v2424 = vpop.permute.xlu0 %2423
      %2425 = vrot.lane.b32.xlu0 %v1832, 64
      %v2426 = vpop.permute.xlu0 %2425
      %2427 = vrot.lane.b32.xlu0 %v1833, 64
      %v2428 = vpop.permute.xlu0 %2427
      %2429 = vrot.lane.b32.xlu0 %v1834, 64
      %v2430 = vpop.permute.xlu0 %2429
      %2431 = vrot.lane.b32.xlu0 %v1835, 64
      %v2432 = vpop.permute.xlu0 %2431
      %2433 = vrot.lane.b32.xlu0 %v1836, 64
      %v2434 = vpop.permute.xlu0 %2433
      %2435 = vrot.lane.b32.xlu0 %v1837, 64
      %v2436 = vpop.permute.xlu0 %2435
      %2437 = vrot.lane.b32.xlu0 %v1838, 64
      %v2438 = vpop.permute.xlu0 %2437
      %v2447 = vcombine.low %v2026, %v2030
      %v2448 = vcombine.low %v2034, %v2038
      %v2449 = vcombine.low %v2042, %v2046
      %v2450 = vcombine.low %v2050, %v2054
      %v2451 = vcombine.low %v2058, %v2062
      %v2452 = vcombine.low %v2066, %v2070
      %v2453 = vcombine.low %v2074, %v2078
      %v2454 = vcombine.low %v2082, %v2086
      %2455 = vrot.lane.b32.xlu0 %v2447, 64
      %v2456 = vpop.permute.xlu0 %2455
      %2457 = vrot.lane.b32.xlu0 %v2448, 64
      %v2458 = vpop.permute.xlu0 %2457
      %2459 = vrot.lane.b32.xlu0 %v2449, 64
      %v2460 = vpop.permute.xlu0 %2459
      %2461 = vrot.lane.b32.xlu0 %v2450, 64
      %v2462 = vpop.permute.xlu0 %2461
      %2463 = vrot.lane.b32.xlu0 %v2451, 64
      %v2464 = vpop.permute.xlu0 %2463
      %2465 = vrot.lane.b32.xlu0 %v2452, 64
      %v2466 = vpop.permute.xlu0 %2465
      %2467 = vrot.lane.b32.xlu0 %v2453, 64
      %v2468 = vpop.permute.xlu0 %2467
      %2469 = vrot.lane.b32.xlu0 %v2454, 64
      %v2470 = vpop.permute.xlu0 %2469
      %2479 = vrot.lane.b32.xlu0 %v1863, 64
      %v2480 = vpop.permute.xlu0 %2479
      %2481 = vrot.lane.b32.xlu0 %v1864, 64
      %v2482 = vpop.permute.xlu0 %2481
      %2483 = vrot.lane.b32.xlu0 %v1865, 64
      %v2484 = vpop.permute.xlu0 %2483
      %2485 = vrot.lane.b32.xlu0 %v1866, 64
      %v2486 = vpop.permute.xlu0 %2485
      %2487 = vrot.lane.b32.xlu0 %v1867, 64
      %v2488 = vpop.permute.xlu0 %2487
      %2489 = vrot.lane.b32.xlu0 %v1868, 64
      %v2490 = vpop.permute.xlu0 %2489
      %2491 = vrot.lane.b32.xlu0 %v1869, 64
      %v2492 = vpop.permute.xlu0 %2491
      %2493 = vrot.lane.b32.xlu0 %v1870, 64
      %v2494 = vpop.permute.xlu0 %2493
      %v2503 = vcombine.low %v2138, %v2142
      %v2504 = vcombine.low %v2146, %v2150
      %v2505 = vcombine.low %v2154, %v2158
      %v2506 = vcombine.low %v2162, %v2166
      %v2507 = vcombine.low %v2170, %v2174
      %v2508 = vcombine.low %v2178, %v2182
      %v2509 = vcombine.low %v2186, %v2190
      %v2510 = vcombine.low %v2194, %v2198
      %2511 = vrot.lane.b32.xlu0 %v2503, 64
      %v2512 = vpop.permute.xlu0 %2511
      %2513 = vrot.lane.b32.xlu0 %v2504, 64
      %v2514 = vpop.permute.xlu0 %2513
      %2515 = vrot.lane.b32.xlu0 %v2505, 64
      %v2516 = vpop.permute.xlu0 %2515
      %2517 = vrot.lane.b32.xlu0 %v2506, 64
      %v2518 = vpop.permute.xlu0 %2517
      %2519 = vrot.lane.b32.xlu0 %v2507, 64
      %v2520 = vpop.permute.xlu0 %2519
      %2521 = vrot.lane.b32.xlu0 %v2508, 64
      %v2522 = vpop.permute.xlu0 %2521
      %2523 = vrot.lane.b32.xlu0 %v2509, 64
      %v2524 = vpop.permute.xlu0 %2523
      %2525 = vrot.lane.b32.xlu0 %v2510, 64
      %v2526 = vpop.permute.xlu0 %2525
      %2535 = vrot.lane.b32.xlu0 %v1895, 64
      %v2536 = vpop.permute.xlu0 %2535
      %2537 = vrot.lane.b32.xlu0 %v1896, 64
      %v2538 = vpop.permute.xlu0 %2537
      %2539 = vrot.lane.b32.xlu0 %v1897, 64
      %v2540 = vpop.permute.xlu0 %2539
      %2541 = vrot.lane.b32.xlu0 %v1898, 64
      %v2542 = vpop.permute.xlu0 %2541
      %2543 = vrot.lane.b32.xlu0 %v1899, 64
      %v2544 = vpop.permute.xlu0 %2543
      %2545 = vrot.lane.b32.xlu0 %v1900, 64
      %v2546 = vpop.permute.xlu0 %2545
      %2547 = vrot.lane.b32.xlu0 %v1901, 64
      %v2548 = vpop.permute.xlu0 %2547
      %2549 = vrot.lane.b32.xlu0 %v1902, 64
      %v2550 = vpop.permute.xlu0 %2549
      %v2559 = vcombine.low %v2250, %v2254
      %v2560 = vcombine.low %v2258, %v2262
      %v2561 = vcombine.low %v2266, %v2270
      %v2562 = vcombine.low %v2274, %v2278
      %v2563 = vcombine.low %v2282, %v2286
      %v2564 = vcombine.low %v2290, %v2294
      %v2565 = vcombine.low %v2298, %v2302
      %v2566 = vcombine.low %v2306, %v2310
      %2567 = vrot.lane.b32.xlu0 %v2559, 64
      %v2568 = vpop.permute.xlu0 %2567
      %2569 = vrot.lane.b32.xlu0 %v2560, 64
      %v2570 = vpop.permute.xlu0 %2569
      %2571 = vrot.lane.b32.xlu0 %v2561, 64
      %v2572 = vpop.permute.xlu0 %2571
      %2573 = vrot.lane.b32.xlu0 %v2562, 64
      %v2574 = vpop.permute.xlu0 %2573
      %2575 = vrot.lane.b32.xlu0 %v2563, 64
      %v2576 = vpop.permute.xlu0 %2575
      %2577 = vrot.lane.b32.xlu0 %v2564, 64
      %v2578 = vpop.permute.xlu0 %2577
      %2579 = vrot.lane.b32.xlu0 %v2565, 64
      %v2580 = vpop.permute.xlu0 %2579
      %2581 = vrot.lane.b32.xlu0 %v2566, 64
      %v2582 = vpop.permute.xlu0 %2581
      %2591 = vrot.lane.b32.xlu0 %v1927, 64
      %v2592 = vpop.permute.xlu0 %2591
      %2593 = vrot.lane.b32.xlu0 %v1928, 64
      %v2594 = vpop.permute.xlu0 %2593
      %2595 = vrot.lane.b32.xlu0 %v1929, 64
      %v2596 = vpop.permute.xlu0 %2595
      %2597 = vrot.lane.b32.xlu0 %v1930, 64
      %v2598 = vpop.permute.xlu0 %2597
      %2599 = vrot.lane.b32.xlu0 %v1931, 64
      %v2600 = vpop.permute.xlu0 %2599
      %2601 = vrot.lane.b32.xlu0 %v1932, 64
      %v2602 = vpop.permute.xlu0 %2601
      %2603 = vrot.lane.b32.xlu0 %v1933, 64
      %v2604 = vpop.permute.xlu0 %2603
      %2605 = vrot.lane.b32.xlu0 %v1934, 64
      %v2606 = vpop.permute.xlu0 %2605
      %v2615 = vcombine.low %v2362, %v2366
      %v2616 = vcombine.low %v2370, %v2374
      %v2617 = vcombine.low %v2378, %v2382
      %v2618 = vcombine.low %v2386, %v2390
      %v2619 = vcombine.low %v2394, %v2398
      %v2620 = vcombine.low %v2402, %v2406
      %v2621 = vcombine.low %v2410, %v2414
      %v2622 = vcombine.low %v2418, %v2422
      %2623 = vrot.lane.b32.xlu0 %v2615, 64
      %v2624 = vpop.permute.xlu0 %2623
      %2625 = vrot.lane.b32.xlu0 %v2616, 64
      %v2626 = vpop.permute.xlu0 %2625
      %2627 = vrot.lane.b32.xlu0 %v2617, 64
      %v2628 = vpop.permute.xlu0 %2627
      %2629 = vrot.lane.b32.xlu0 %v2618, 64
      %v2630 = vpop.permute.xlu0 %2629
      %2631 = vrot.lane.b32.xlu0 %v2619, 64
      %v2632 = vpop.permute.xlu0 %2631
      %2633 = vrot.lane.b32.xlu0 %v2620, 64
      %v2634 = vpop.permute.xlu0 %2633
      %2635 = vrot.lane.b32.xlu0 %v2621, 64
      %v2636 = vpop.permute.xlu0 %2635
      %2637 = vrot.lane.b32.xlu0 %v2622, 64
      %v2638 = vpop.permute.xlu0 %2637
      %v2647 = vsel %vm918, %v2424, %v2456
      %v2648 = vsel %vm918, %v2426, %v2458
      %v2649 = vsel %vm918, %v2428, %v2460
      %v2650 = vsel %vm918, %v2430, %v2462
      %v2651 = vsel %vm918, %v2432, %v2464
      %v2652 = vsel %vm918, %v2434, %v2466
      %v2653 = vsel %vm918, %v2436, %v2468
      %v2654 = vsel %vm918, %v2438, %v2470
      %v2655 = vsel %vm918, %v2480, %v2512
      %v2656 = vsel %vm918, %v2482, %v2514
      %v2657 = vsel %vm918, %v2484, %v2516
      %v2658 = vsel %vm918, %v2486, %v2518
      %v2659 = vsel %vm918, %v2488, %v2520
      %v2660 = vsel %vm918, %v2490, %v2522
      %v2661 = vsel %vm918, %v2492, %v2524
      %v2662 = vsel %vm918, %v2494, %v2526
      %v2663 = vsel %vm918, %v2536, %v2568
      %v2664 = vsel %vm918, %v2538, %v2570
      %v2665 = vsel %vm918, %v2540, %v2572
      %v2666 = vsel %vm918, %v2542, %v2574
      %v2667 = vsel %vm918, %v2544, %v2576
      %v2668 = vsel %vm918, %v2546, %v2578
      %v2669 = vsel %vm918, %v2548, %v2580
      %v2670 = vsel %vm918, %v2550, %v2582
      %v2671 = vsel %vm918, %v2592, %v2624
      %v2672 = vsel %vm918, %v2594, %v2626
      %v2673 = vsel %vm918, %v2596, %v2628
      %v2674 = vsel %vm918, %v2598, %v2630
      %v2675 = vsel %vm918, %v2600, %v2632
      %v2676 = vsel %vm918, %v2602, %v2634
      %v2677 = vsel %vm918, %v2604, %v2636
      %v2678 = vsel %vm918, %v2606, %v2638
      %s2679 = scalar_lea.vmem [#allocation2], 32
      %v2680 = vld [vmem:[%s2679] sm:$0xf]
      %v2681 = vld [vmem:[%s2679 + $0x20] sm:$0xf]
      %v2682 = vld [vmem:[%s2679 + $0x40] sm:$0xf]
      %v2683 = vld [vmem:[%s2679 + $0x60] sm:$0xf]
      %v2684 = vld [vmem:[%s2679 + $0xa0] sm:$0xf]
      %v2685 = vld [vmem:[%s2679 + $0xc0] sm:$0xf]
      %v2686 = vld [vmem:[%s2679 + $0xe0] sm:$0xf]
      %v2687 = vld [vmem:[%s2679 + $0x100] sm:$0xf]
      %v2688 = vld [vmem:[%s2679 + $0x140] sm:$0xf]
      %v2689 = vld [vmem:[%s2679 + $0x160] sm:$0xf]
      %v2690 = vld [vmem:[%s2679 + $0x180] sm:$0xf]
      %v2691 = vld [vmem:[%s2679 + $0x1a0] sm:$0xf]
      %v2692 = vld [vmem:[%s2679 + $0x1e0] sm:$0xf]
      %v2693 = vld [vmem:[%s2679 + $0x200] sm:$0xf]
      %v2694 = vld [vmem:[%s2679 + $0x220] sm:$0xf]
      %v2695 = vld [vmem:[%s2679 + $0x240] sm:$0xf]
      %v2696 = vld [vmem:[%s2679 + $0x10] sm:$0xf]
      %v2697 = vld [vmem:[%s2679 + $0x30] sm:$0xf]
      %v2698 = vld [vmem:[%s2679 + $0x50] sm:$0xf]
      %v2699 = vld [vmem:[%s2679 + $0x70] sm:$0xf]
      %v2700 = vld [vmem:[%s2679 + $0xb0] sm:$0xf]
      %v2701 = vld [vmem:[%s2679 + $0xd0] sm:$0xf]
      %v2702 = vld [vmem:[%s2679 + $0xf0] sm:$0xf]
      %v2703 = vld [vmem:[%s2679 + $0x110] sm:$0xf]
      %v2704 = vld [vmem:[%s2679 + $0x150] sm:$0xf]
      %v2705 = vld [vmem:[%s2679 + $0x170] sm:$0xf]
      %v2706 = vld [vmem:[%s2679 + $0x190] sm:$0xf]
      %v2707 = vld [vmem:[%s2679 + $0x1b0] sm:$0xf]
      %v2708 = vld [vmem:[%s2679 + $0x1f0] sm:$0xf]
      %v2709 = vld [vmem:[%s2679 + $0x210] sm:$0xf]
      %v2710 = vld [vmem:[%s2679 + $0x230] sm:$0xf]
      %v2711 = vld [vmem:[%s2679 + $0x250] sm:$0xf]
      %v2728 = vcombine.low %v2680, %v2681
      %v2729 = vcombine.low %v2682, %v2683
      %v2730 = vcombine.low %v2684, %v2685
      %v2731 = vcombine.low %v2686, %v2687
      %v2732 = vcombine.low %v2688, %v2689
      %v2733 = vcombine.low %v2690, %v2691
      %v2734 = vcombine.low %v2692, %v2693
      %v2735 = vcombine.low %v2694, %v2695
      %v2760 = vcombine.low %v2696, %v2697
      %v2761 = vcombine.low %v2698, %v2699
      %v2762 = vcombine.low %v2700, %v2701
      %v2763 = vcombine.low %v2702, %v2703
      %v2764 = vcombine.low %v2704, %v2705
      %v2765 = vcombine.low %v2706, %v2707
      %v2766 = vcombine.low %v2708, %v2709
      %v2767 = vcombine.low %v2710, %v2711
      %v2776 = vsel %vm918, %v2728, %v2728
      %v2777 = vsel %vm918, %v2729, %v2729
      %v2778 = vsel %vm918, %v2730, %v2730
      %v2779 = vsel %vm918, %v2731, %v2731
      %v2780 = vsel %vm918, %v2732, %v2732
      %v2781 = vsel %vm918, %v2733, %v2733
      %v2782 = vsel %vm918, %v2734, %v2734
      %v2783 = vsel %vm918, %v2735, %v2735
      %v2784 = vsel %vm918, %v2760, %v2760
      %v2785 = vsel %vm918, %v2761, %v2761
      %v2786 = vsel %vm918, %v2762, %v2762
      %v2787 = vsel %vm918, %v2763, %v2763
      %v2788 = vsel %vm918, %v2764, %v2764
      %v2789 = vsel %vm918, %v2765, %v2765
      %v2790 = vsel %vm918, %v2766, %v2766
      %v2791 = vsel %vm918, %v2767, %v2767
      %v2792 = vld [vmem:[%s2679] sm:$0x1e]
      %v2793 = vld [vmem:[%s2679 + $0x20] sm:$0x1e]
      %v2794 = vld [vmem:[%s2679 + $0x40] sm:$0x1e]
      %v2795 = vld [vmem:[%s2679 + $0x60] sm:$0x1e]
      %v2796 = vld [vmem:[%s2679 + $0xa0] sm:$0x1e]
      %v2797 = vld [vmem:[%s2679 + $0xc0] sm:$0x1e]
      %v2798 = vld [vmem:[%s2679 + $0xe0] sm:$0x1e]
      %v2799 = vld [vmem:[%s2679 + $0x100] sm:$0x1e]
      %v2800 = vld [vmem:[%s2679 + $0x140] sm:$0x1e]
      %v2801 = vld [vmem:[%s2679 + $0x160] sm:$0x1e]
      %v2802 = vld [vmem:[%s2679 + $0x180] sm:$0x1e]
      %v2803 = vld [vmem:[%s2679 + $0x1a0] sm:$0x1e]
      %v2804 = vld [vmem:[%s2679 + $0x1e0] sm:$0x1e]
      %v2805 = vld [vmem:[%s2679 + $0x200] sm:$0x1e]
      %v2806 = vld [vmem:[%s2679 + $0x220] sm:$0x1e]
      %v2807 = vld [vmem:[%s2679 + $0x240] sm:$0x1e]
      %v2824 = vcombine.high %v2792, %v2792
      %v2825 = vcombine.high %v2793, %v2793
      %v2826 = vcombine.high %v2794, %v2794
      %v2827 = vcombine.high %v2795, %v2795
      %v2828 = vcombine.high %v2796, %v2796
      %v2829 = vcombine.high %v2797, %v2797
      %v2830 = vcombine.high %v2798, %v2798
      %v2831 = vcombine.high %v2799, %v2799
      %v2832 = vcombine.high %v2800, %v2800
      %v2833 = vcombine.high %v2801, %v2801
      %v2834 = vcombine.high %v2802, %v2802
      %v2835 = vcombine.high %v2803, %v2803
      %v2836 = vcombine.high %v2804, %v2804
      %v2837 = vcombine.high %v2805, %v2805
      %v2838 = vcombine.high %v2806, %v2806
      %v2839 = vcombine.high %v2807, %v2807
      %v2840 = vrot.slane %v2792, 5
      %v2841 = vrot.slane %v2840, 4
      %v2842 = vrot.slane %v2824, 5
      %v2843 = vsel %vm338, %v2841, %v2842
      %v2844 = vrot.slane %v2793, 5
      %v2845 = vrot.slane %v2844, 4
      %v2846 = vrot.slane %v2825, 5
      %v2847 = vsel %vm338, %v2845, %v2846
      %v2848 = vrot.slane %v2794, 5
      %v2849 = vrot.slane %v2848, 4
      %v2850 = vrot.slane %v2826, 5
      %v2851 = vsel %vm338, %v2849, %v2850
      %v2852 = vrot.slane %v2795, 5
      %v2853 = vrot.slane %v2852, 4
      %v2854 = vrot.slane %v2827, 5
      %v2855 = vsel %vm338, %v2853, %v2854
      %v2856 = vrot.slane %v2796, 5
      %v2857 = vrot.slane %v2856, 4
      %v2858 = vrot.slane %v2828, 5
      %v2859 = vsel %vm338, %v2857, %v2858
      %v2860 = vrot.slane %v2797, 5
      %v2861 = vrot.slane %v2860, 4
      %v2862 = vrot.slane %v2829, 5
      %v2863 = vsel %vm338, %v2861, %v2862
      %v2864 = vrot.slane %v2798, 5
      %v2865 = vrot.slane %v2864, 4
      %v2866 = vrot.slane %v2830, 5
      %v2867 = vsel %vm338, %v2865, %v2866
      %v2868 = vrot.slane %v2799, 5
      %v2869 = vrot.slane %v2868, 4
      %v2870 = vrot.slane %v2831, 5
      %v2871 = vsel %vm338, %v2869, %v2870
      %v2872 = vrot.slane %v2800, 5
      %v2873 = vrot.slane %v2872, 4
      %v2874 = vrot.slane %v2832, 5
      %v2875 = vsel %vm338, %v2873, %v2874
      %v2876 = vrot.slane %v2801, 5
      %v2877 = vrot.slane %v2876, 4
      %v2878 = vrot.slane %v2833, 5
      %v2879 = vsel %vm338, %v2877, %v2878
      %v2880 = vrot.slane %v2802, 5
      %v2881 = vrot.slane %v2880, 4
      %v2882 = vrot.slane %v2834, 5
      %v2883 = vsel %vm338, %v2881, %v2882
      %v2884 = vrot.slane %v2803, 5
      %v2885 = vrot.slane %v2884, 4
      %v2886 = vrot.slane %v2835, 5
      %v2887 = vsel %vm338, %v2885, %v2886
      %v2888 = vrot.slane %v2804, 5
      %v2889 = vrot.slane %v2888, 4
      %v2890 = vrot.slane %v2836, 5
      %v2891 = vsel %vm338, %v2889, %v2890
      %v2892 = vrot.slane %v2805, 5
      %v2893 = vrot.slane %v2892, 4
      %v2894 = vrot.slane %v2837, 5
      %v2895 = vsel %vm338, %v2893, %v2894
      %v2896 = vrot.slane %v2806, 5
      %v2897 = vrot.slane %v2896, 4
      %v2898 = vrot.slane %v2838, 5
      %v2899 = vsel %vm338, %v2897, %v2898
      %v2900 = vrot.slane %v2807, 5
      %v2901 = vrot.slane %v2900, 4
      %v2902 = vrot.slane %v2839, 5
      %v2903 = vsel %vm338, %v2901, %v2902
      %v2904 = vld [vmem:[%s2679 + $0x10] sm:$0x1e]
      %v2905 = vld [vmem:[%s2679 + $0x30] sm:$0x1e]
      %v2906 = vld [vmem:[%s2679 + $0x50] sm:$0x1e]
      %v2907 = vld [vmem:[%s2679 + $0x70] sm:$0x1e]
      %v2908 = vld [vmem:[%s2679 + $0xb0] sm:$0x1e]
      %v2909 = vld [vmem:[%s2679 + $0xd0] sm:$0x1e]
      %v2910 = vld [vmem:[%s2679 + $0xf0] sm:$0x1e]
      %v2911 = vld [vmem:[%s2679 + $0x110] sm:$0x1e]
      %v2912 = vld [vmem:[%s2679 + $0x150] sm:$0x1e]
      %v2913 = vld [vmem:[%s2679 + $0x170] sm:$0x1e]
      %v2914 = vld [vmem:[%s2679 + $0x190] sm:$0x1e]
      %v2915 = vld [vmem:[%s2679 + $0x1b0] sm:$0x1e]
      %v2916 = vld [vmem:[%s2679 + $0x1f0] sm:$0x1e]
      %v2917 = vld [vmem:[%s2679 + $0x210] sm:$0x1e]
      %v2918 = vld [vmem:[%s2679 + $0x230] sm:$0x1e]
      %v2919 = vld [vmem:[%s2679 + $0x250] sm:$0x1e]
      %v2936 = vcombine.high %v2904, %v2904
      %v2937 = vcombine.high %v2905, %v2905
      %v2938 = vcombine.high %v2906, %v2906
      %v2939 = vcombine.high %v2907, %v2907
      %v2940 = vcombine.high %v2908, %v2908
      %v2941 = vcombine.high %v2909, %v2909
      %v2942 = vcombine.high %v2910, %v2910
      %v2943 = vcombine.high %v2911, %v2911
      %v2944 = vcombine.high %v2912, %v2912
      %v2945 = vcombine.high %v2913, %v2913
      %v2946 = vcombine.high %v2914, %v2914
      %v2947 = vcombine.high %v2915, %v2915
      %v2948 = vcombine.high %v2916, %v2916
      %v2949 = vcombine.high %v2917, %v2917
      %v2950 = vcombine.high %v2918, %v2918
      %v2951 = vcombine.high %v2919, %v2919
      %v2952 = vrot.slane %v2904, 5
      %v2953 = vrot.slane %v2952, 4
      %v2954 = vrot.slane %v2936, 5
      %v2955 = vsel %vm338, %v2953, %v2954
      %v2956 = vrot.slane %v2905, 5
      %v2957 = vrot.slane %v2956, 4
      %v2958 = vrot.slane %v2937, 5
      %v2959 = vsel %vm338, %v2957, %v2958
      %v2960 = vrot.slane %v2906, 5
      %v2961 = vrot.slane %v2960, 4
      %v2962 = vrot.slane %v2938, 5
      %v2963 = vsel %vm338, %v2961, %v2962
      %v2964 = vrot.slane %v2907, 5
      %v2965 = vrot.slane %v2964, 4
      %v2966 = vrot.slane %v2939, 5
      %v2967 = vsel %vm338, %v2965, %v2966
      %v2968 = vrot.slane %v2908, 5
      %v2969 = vrot.slane %v2968, 4
      %v2970 = vrot.slane %v2940, 5
      %v2971 = vsel %vm338, %v2969, %v2970
      %v2972 = vrot.slane %v2909, 5
      %v2973 = vrot.slane %v2972, 4
      %v2974 = vrot.slane %v2941, 5
      %v2975 = vsel %vm338, %v2973, %v2974
      %v2976 = vrot.slane %v2910, 5
      %v2977 = vrot.slane %v2976, 4
      %v2978 = vrot.slane %v2942, 5
      %v2979 = vsel %vm338, %v2977, %v2978
      %v2980 = vrot.slane %v2911, 5
      %v2981 = vrot.slane %v2980, 4
      %v2982 = vrot.slane %v2943, 5
      %v2983 = vsel %vm338, %v2981, %v2982
      %v2984 = vrot.slane %v2912, 5
      %v2985 = vrot.slane %v2984, 4
      %v2986 = vrot.slane %v2944, 5
      %v2987 = vsel %vm338, %v2985, %v2986
      %v2988 = vrot.slane %v2913, 5
      %v2989 = vrot.slane %v2988, 4
      %v2990 = vrot.slane %v2945, 5
      %v2991 = vsel %vm338, %v2989, %v2990
      %v2992 = vrot.slane %v2914, 5
      %v2993 = vrot.slane %v2992, 4
      %v2994 = vrot.slane %v2946, 5
      %v2995 = vsel %vm338, %v2993, %v2994
      %v2996 = vrot.slane %v2915, 5
      %v2997 = vrot.slane %v2996, 4
      %v2998 = vrot.slane %v2947, 5
      %v2999 = vsel %vm338, %v2997, %v2998
      %v3000 = vrot.slane %v2916, 5
      %v3001 = vrot.slane %v3000, 4
      %v3002 = vrot.slane %v2948, 5
      %v3003 = vsel %vm338, %v3001, %v3002
      %v3004 = vrot.slane %v2917, 5
      %v3005 = vrot.slane %v3004, 4
      %v3006 = vrot.slane %v2949, 5
      %v3007 = vsel %vm338, %v3005, %v3006
      %v3008 = vrot.slane %v2918, 5
      %v3009 = vrot.slane %v3008, 4
      %v3010 = vrot.slane %v2950, 5
      %v3011 = vsel %vm338, %v3009, %v3010
      %v3012 = vrot.slane %v2919, 5
      %v3013 = vrot.slane %v3012, 4
      %v3014 = vrot.slane %v2951, 5
      %v3015 = vsel %vm338, %v3013, %v3014
      %3016 = vrot.lane.b32.xlu0 %v2728, 64
      %v3017 = vpop.permute.xlu0 %3016
      %3018 = vrot.lane.b32.xlu0 %v2729, 64
      %v3019 = vpop.permute.xlu0 %3018
      %3020 = vrot.lane.b32.xlu0 %v2730, 64
      %v3021 = vpop.permute.xlu0 %3020
      %3022 = vrot.lane.b32.xlu0 %v2731, 64
      %v3023 = vpop.permute.xlu0 %3022
      %3024 = vrot.lane.b32.xlu0 %v2732, 64
      %v3025 = vpop.permute.xlu0 %3024
      %3026 = vrot.lane.b32.xlu0 %v2733, 64
      %v3027 = vpop.permute.xlu0 %3026
      %3028 = vrot.lane.b32.xlu0 %v2734, 64
      %v3029 = vpop.permute.xlu0 %3028
      %3030 = vrot.lane.b32.xlu0 %v2735, 64
      %v3031 = vpop.permute.xlu0 %3030
      %v3040 = vcombine.low %v2843, %v2847
      %v3041 = vcombine.low %v2851, %v2855
      %v3042 = vcombine.low %v2859, %v2863
      %v3043 = vcombine.low %v2867, %v2871
      %v3044 = vcombine.low %v2875, %v2879
      %v3045 = vcombine.low %v2883, %v2887
      %v3046 = vcombine.low %v2891, %v2895
      %v3047 = vcombine.low %v2899, %v2903
      %3048 = vrot.lane.b32.xlu0 %v3040, 64
      %v3049 = vpop.permute.xlu0 %3048
      %3050 = vrot.lane.b32.xlu0 %v3041, 64
      %v3051 = vpop.permute.xlu0 %3050
      %3052 = vrot.lane.b32.xlu0 %v3042, 64
      %v3053 = vpop.permute.xlu0 %3052
      %3054 = vrot.lane.b32.xlu0 %v3043, 64
      %v3055 = vpop.permute.xlu0 %3054
      %3056 = vrot.lane.b32.xlu0 %v3044, 64
      %v3057 = vpop.permute.xlu0 %3056
      %3058 = vrot.lane.b32.xlu0 %v3045, 64
      %v3059 = vpop.permute.xlu0 %3058
      %3060 = vrot.lane.b32.xlu0 %v3046, 64
      %v3061 = vpop.permute.xlu0 %3060
      %3062 = vrot.lane.b32.xlu0 %v3047, 64
      %v3063 = vpop.permute.xlu0 %3062
      %3072 = vrot.lane.b32.xlu0 %v2760, 64
      %v3073 = vpop.permute.xlu0 %3072
      %3074 = vrot.lane.b32.xlu0 %v2761, 64
      %v3075 = vpop.permute.xlu0 %3074
      %3076 = vrot.lane.b32.xlu0 %v2762, 64
      %v3077 = vpop.permute.xlu0 %3076
      %3078 = vrot.lane.b32.xlu0 %v2763, 64
      %v3079 = vpop.permute.xlu0 %3078
      %3080 = vrot.lane.b32.xlu0 %v2764, 64
      %v3081 = vpop.permute.xlu0 %3080
      %3082 = vrot.lane.b32.xlu0 %v2765, 64
      %v3083 = vpop.permute.xlu0 %3082
      %3084 = vrot.lane.b32.xlu0 %v2766, 64
      %v3085 = vpop.permute.xlu0 %3084
      %3086 = vrot.lane.b32.xlu0 %v2767, 64
      %v3087 = vpop.permute.xlu0 %3086
      %v3096 = vcombine.low %v2955, %v2959
      %v3097 = vcombine.low %v2963, %v2967
      %v3098 = vcombine.low %v2971, %v2975
      %v3099 = vcombine.low %v2979, %v2983
      %v3100 = vcombine.low %v2987, %v2991
      %v3101 = vcombine.low %v2995, %v2999
      %v3102 = vcombine.low %v3003, %v3007
      %v3103 = vcombine.low %v3011, %v3015
      %3104 = vrot.lane.b32.xlu0 %v3096, 64
      %v3105 = vpop.permute.xlu0 %3104
      %3106 = vrot.lane.b32.xlu0 %v3097, 64
      %v3107 = vpop.permute.xlu0 %3106
      %3108 = vrot.lane.b32.xlu0 %v3098, 64
      %v3109 = vpop.permute.xlu0 %3108
      %3110 = vrot.lane.b32.xlu0 %v3099, 64
      %v3111 = vpop.permute.xlu0 %3110
      %3112 = vrot.lane.b32.xlu0 %v3100, 64
      %v3113 = vpop.permute.xlu0 %3112
      %3114 = vrot.lane.b32.xlu0 %v3101, 64
      %v3115 = vpop.permute.xlu0 %3114
      %3116 = vrot.lane.b32.xlu0 %v3102, 64
      %v3117 = vpop.permute.xlu0 %3116
      %3118 = vrot.lane.b32.xlu0 %v3103, 64
      %v3119 = vpop.permute.xlu0 %3118
      %v3128 = vsel %vm918, %v3017, %v3049
      %v3129 = vsel %vm918, %v3019, %v3051
      %v3130 = vsel %vm918, %v3021, %v3053
      %v3131 = vsel %vm918, %v3023, %v3055
      %v3132 = vsel %vm918, %v3025, %v3057
      %v3133 = vsel %vm918, %v3027, %v3059
      %v3134 = vsel %vm918, %v3029, %v3061
      %v3135 = vsel %vm918, %v3031, %v3063
      %v3136 = vsel %vm918, %v3073, %v3105
      %v3137 = vsel %vm918, %v3075, %v3107
      %v3138 = vsel %vm918, %v3077, %v3109
      %v3139 = vsel %vm918, %v3079, %v3111
      %v3140 = vsel %vm918, %v3081, %v3113
      %v3141 = vsel %vm918, %v3083, %v3115
      %v3142 = vsel %vm918, %v3085, %v3117
      %v3143 = vsel %vm918, %v3087, %v3119
      %s3144 = scalar_lea.vmem [#allocation2], 160
      %v3145 = vld [vmem:[%s3144] sm:$0xf]
      %v3146 = vld [vmem:[%s3144 + $0x20] sm:$0xf]
      %v3147 = vld [vmem:[%s3144 + $0x40] sm:$0xf]
      %v3148 = vld [vmem:[%s3144 + $0x60] sm:$0xf]
      %v3149 = vld [vmem:[%s3144 + $0xa0] sm:$0xf]
      %v3150 = vld [vmem:[%s3144 + $0xc0] sm:$0xf]
      %v3151 = vld [vmem:[%s3144 + $0xe0] sm:$0xf]
      %v3152 = vld [vmem:[%s3144 + $0x100] sm:$0xf]
      %v3153 = vld [vmem:[%s3144 + $0x140] sm:$0xf]
      %v3154 = vld [vmem:[%s3144 + $0x160] sm:$0xf]
      %v3155 = vld [vmem:[%s3144 + $0x180] sm:$0xf]
      %v3156 = vld [vmem:[%s3144 + $0x1a0] sm:$0xf]
      %v3157 = vld [vmem:[%s3144 + $0x1e0] sm:$0xf]
      %v3158 = vld [vmem:[%s3144 + $0x200] sm:$0xf]
      %v3159 = vld [vmem:[%s3144 + $0x220] sm:$0xf]
      %v3160 = vld [vmem:[%s3144 + $0x240] sm:$0xf]
      %v3161 = vld [vmem:[%s3144 + $0x8] sm:$0xf]
      %v3162 = vld [vmem:[%s3144 + $0x28] sm:$0xf]
      %v3163 = vld [vmem:[%s3144 + $0x48] sm:$0xf]
      %v3164 = vld [vmem:[%s3144 + $0x68] sm:$0xf]
      %v3165 = vld [vmem:[%s3144 + $0xa8] sm:$0xf]
      %v3166 = vld [vmem:[%s3144 + $0xc8] sm:$0xf]
      %v3167 = vld [vmem:[%s3144 + $0xe8] sm:$0xf]
      %v3168 = vld [vmem:[%s3144 + $0x108] sm:$0xf]
      %v3169 = vld [vmem:[%s3144 + $0x148] sm:$0xf]
      %v3170 = vld [vmem:[%s3144 + $0x168] sm:$0xf]
      %v3171 = vld [vmem:[%s3144 + $0x188] sm:$0xf]
      %v3172 = vld [vmem:[%s3144 + $0x1a8] sm:$0xf]
      %v3173 = vld [vmem:[%s3144 + $0x1e8] sm:$0xf]
      %v3174 = vld [vmem:[%s3144 + $0x208] sm:$0xf]
      %v3175 = vld [vmem:[%s3144 + $0x228] sm:$0xf]
      %v3176 = vld [vmem:[%s3144 + $0x248] sm:$0xf]
      %v3193 = vcombine.low %v3145, %v3146
      %v3194 = vcombine.low %v3147, %v3148
      %v3195 = vcombine.low %v3149, %v3150
      %v3196 = vcombine.low %v3151, %v3152
      %v3197 = vcombine.low %v3153, %v3154
      %v3198 = vcombine.low %v3155, %v3156
      %v3199 = vcombine.low %v3157, %v3158
      %v3200 = vcombine.low %v3159, %v3160
      %v3225 = vcombine.low %v3161, %v3162
      %v3226 = vcombine.low %v3163, %v3164
      %v3227 = vcombine.low %v3165, %v3166
      %v3228 = vcombine.low %v3167, %v3168
      %v3229 = vcombine.low %v3169, %v3170
      %v3230 = vcombine.low %v3171, %v3172
      %v3231 = vcombine.low %v3173, %v3174
      %v3232 = vcombine.low %v3175, %v3176
      %v3241 = vsel %vm918, %v3193, %v3193
      %v3242 = vsel %vm918, %v3194, %v3194
      %v3243 = vsel %vm918, %v3195, %v3195
      %v3244 = vsel %vm918, %v3196, %v3196
      %v3245 = vsel %vm918, %v3197, %v3197
      %v3246 = vsel %vm918, %v3198, %v3198
      %v3247 = vsel %vm918, %v3199, %v3199
      %v3248 = vsel %vm918, %v3200, %v3200
      %v3249 = vsel %vm918, %v3225, %v3225
      %v3250 = vsel %vm918, %v3226, %v3226
      %v3251 = vsel %vm918, %v3227, %v3227
      %v3252 = vsel %vm918, %v3228, %v3228
      %v3253 = vsel %vm918, %v3229, %v3229
      %v3254 = vsel %vm918, %v3230, %v3230
      %v3255 = vsel %vm918, %v3231, %v3231
      %v3256 = vsel %vm918, %v3232, %v3232
      %v3257 = vld [vmem:[%s3144] sm:$0x1e]
      %v3258 = vld [vmem:[%s3144 + $0x20] sm:$0x1e]
      %v3259 = vld [vmem:[%s3144 + $0x40] sm:$0x1e]
      %v3260 = vld [vmem:[%s3144 + $0x60] sm:$0x1e]
      %v3261 = vld [vmem:[%s3144 + $0xa0] sm:$0x1e]
      %v3262 = vld [vmem:[%s3144 + $0xc0] sm:$0x1e]
      %v3263 = vld [vmem:[%s3144 + $0xe0] sm:$0x1e]
      %v3264 = vld [vmem:[%s3144 + $0x100] sm:$0x1e]
      %v3265 = vld [vmem:[%s3144 + $0x140] sm:$0x1e]
      %v3266 = vld [vmem:[%s3144 + $0x160] sm:$0x1e]
      %v3267 = vld [vmem:[%s3144 + $0x180] sm:$0x1e]
      %v3268 = vld [vmem:[%s3144 + $0x1a0] sm:$0x1e]
      %v3269 = vld [vmem:[%s3144 + $0x1e0] sm:$0x1e]
      %v3270 = vld [vmem:[%s3144 + $0x200] sm:$0x1e]
      %v3271 = vld [vmem:[%s3144 + $0x220] sm:$0x1e]
      %v3272 = vld [vmem:[%s3144 + $0x240] sm:$0x1e]
      %v3289 = vcombine.high %v3257, %v3257
      %v3290 = vcombine.high %v3258, %v3258
      %v3291 = vcombine.high %v3259, %v3259
      %v3292 = vcombine.high %v3260, %v3260
      %v3293 = vcombine.high %v3261, %v3261
      %v3294 = vcombine.high %v3262, %v3262
      %v3295 = vcombine.high %v3263, %v3263
      %v3296 = vcombine.high %v3264, %v3264
      %v3297 = vcombine.high %v3265, %v3265
      %v3298 = vcombine.high %v3266, %v3266
      %v3299 = vcombine.high %v3267, %v3267
      %v3300 = vcombine.high %v3268, %v3268
      %v3301 = vcombine.high %v3269, %v3269
      %v3302 = vcombine.high %v3270, %v3270
      %v3303 = vcombine.high %v3271, %v3271
      %v3304 = vcombine.high %v3272, %v3272
      %v3305 = vrot.slane %v3257, 5
      %v3306 = vrot.slane %v3305, 4
      %v3307 = vrot.slane %v3289, 5
      %v3308 = vsel %vm338, %v3306, %v3307
      %v3309 = vrot.slane %v3258, 5
      %v3310 = vrot.slane %v3309, 4
      %v3311 = vrot.slane %v3290, 5
      %v3312 = vsel %vm338, %v3310, %v3311
      %v3313 = vrot.slane %v3259, 5
      %v3314 = vrot.slane %v3313, 4
      %v3315 = vrot.slane %v3291, 5
      %v3316 = vsel %vm338, %v3314, %v3315
      %v3317 = vrot.slane %v3260, 5
      %v3318 = vrot.slane %v3317, 4
      %v3319 = vrot.slane %v3292, 5
      %v3320 = vsel %vm338, %v3318, %v3319
      %v3321 = vrot.slane %v3261, 5
      %v3322 = vrot.slane %v3321, 4
      %v3323 = vrot.slane %v3293, 5
      %v3324 = vsel %vm338, %v3322, %v3323
      %v3325 = vrot.slane %v3262, 5
      %v3326 = vrot.slane %v3325, 4
      %v3327 = vrot.slane %v3294, 5
      %v3328 = vsel %vm338, %v3326, %v3327
      %v3329 = vrot.slane %v3263, 5
      %v3330 = vrot.slane %v3329, 4
      %v3331 = vrot.slane %v3295, 5
      %v3332 = vsel %vm338, %v3330, %v3331
      %v3333 = vrot.slane %v3264, 5
      %v3334 = vrot.slane %v3333, 4
      %v3335 = vrot.slane %v3296, 5
      %v3336 = vsel %vm338, %v3334, %v3335
      %v3337 = vrot.slane %v3265, 5
      %v3338 = vrot.slane %v3337, 4
      %v3339 = vrot.slane %v3297, 5
      %v3340 = vsel %vm338, %v3338, %v3339
      %v3341 = vrot.slane %v3266, 5
      %v3342 = vrot.slane %v3341, 4
      %v3343 = vrot.slane %v3298, 5
      %v3344 = vsel %vm338, %v3342, %v3343
      %v3345 = vrot.slane %v3267, 5
      %v3346 = vrot.slane %v3345, 4
      %v3347 = vrot.slane %v3299, 5
      %v3348 = vsel %vm338, %v3346, %v3347
      %v3349 = vrot.slane %v3268, 5
      %v3350 = vrot.slane %v3349, 4
      %v3351 = vrot.slane %v3300, 5
      %v3352 = vsel %vm338, %v3350, %v3351
      %v3353 = vrot.slane %v3269, 5
      %v3354 = vrot.slane %v3353, 4
      %v3355 = vrot.slane %v3301, 5
      %v3356 = vsel %vm338, %v3354, %v3355
      %v3357 = vrot.slane %v3270, 5
      %v3358 = vrot.slane %v3357, 4
      %v3359 = vrot.slane %v3302, 5
      %v3360 = vsel %vm338, %v3358, %v3359
      %v3361 = vrot.slane %v3271, 5
      %v3362 = vrot.slane %v3361, 4
      %v3363 = vrot.slane %v3303, 5
      %v3364 = vsel %vm338, %v3362, %v3363
      %v3365 = vrot.slane %v3272, 5
      %v3366 = vrot.slane %v3365, 4
      %v3367 = vrot.slane %v3304, 5
      %v3368 = vsel %vm338, %v3366, %v3367
      %v3369 = vld [vmem:[%s3144 + $0x8] sm:$0x1e]
      %v3370 = vld [vmem:[%s3144 + $0x28] sm:$0x1e]
      %v3371 = vld [vmem:[%s3144 + $0x48] sm:$0x1e]
      %v3372 = vld [vmem:[%s3144 + $0x68] sm:$0x1e]
      %v3373 = vld [vmem:[%s3144 + $0xa8] sm:$0x1e]
      %v3374 = vld [vmem:[%s3144 + $0xc8] sm:$0x1e]
      %v3375 = vld [vmem:[%s3144 + $0xe8] sm:$0x1e]
      %v3376 = vld [vmem:[%s3144 + $0x108] sm:$0x1e]
      %v3377 = vld [vmem:[%s3144 + $0x148] sm:$0x1e]
      %v3378 = vld [vmem:[%s3144 + $0x168] sm:$0x1e]
      %v3379 = vld [vmem:[%s3144 + $0x188] sm:$0x1e]
      %v3380 = vld [vmem:[%s3144 + $0x1a8] sm:$0x1e]
      %v3381 = vld [vmem:[%s3144 + $0x1e8] sm:$0x1e]
      %v3382 = vld [vmem:[%s3144 + $0x208] sm:$0x1e]
      %v3383 = vld [vmem:[%s3144 + $0x228] sm:$0x1e]
      %v3384 = vld [vmem:[%s3144 + $0x248] sm:$0x1e]
      %v3401 = vcombine.high %v3369, %v3369
      %v3402 = vcombine.high %v3370, %v3370
      %v3403 = vcombine.high %v3371, %v3371
      %v3404 = vcombine.high %v3372, %v3372
      %v3405 = vcombine.high %v3373, %v3373
      %v3406 = vcombine.high %v3374, %v3374
      %v3407 = vcombine.high %v3375, %v3375
      %v3408 = vcombine.high %v3376, %v3376
      %v3409 = vcombine.high %v3377, %v3377
      %v3410 = vcombine.high %v3378, %v3378
      %v3411 = vcombine.high %v3379, %v3379
      %v3412 = vcombine.high %v3380, %v3380
      %v3413 = vcombine.high %v3381, %v3381
      %v3414 = vcombine.high %v3382, %v3382
      %v3415 = vcombine.high %v3383, %v3383
      %v3416 = vcombine.high %v3384, %v3384
      %v3417 = vrot.slane %v3369, 5
      %v3418 = vrot.slane %v3417, 4
      %v3419 = vrot.slane %v3401, 5
      %v3420 = vsel %vm338, %v3418, %v3419
      %v3421 = vrot.slane %v3370, 5
      %v3422 = vrot.slane %v3421, 4
      %v3423 = vrot.slane %v3402, 5
      %v3424 = vsel %vm338, %v3422, %v3423
      %v3425 = vrot.slane %v3371, 5
      %v3426 = vrot.slane %v3425, 4
      %v3427 = vrot.slane %v3403, 5
      %v3428 = vsel %vm338, %v3426, %v3427
      %v3429 = vrot.slane %v3372, 5
      %v3430 = vrot.slane %v3429, 4
      %v3431 = vrot.slane %v3404, 5
      %v3432 = vsel %vm338, %v3430, %v3431
      %v3433 = vrot.slane %v3373, 5
      %v3434 = vrot.slane %v3433, 4
      %v3435 = vrot.slane %v3405, 5
      %v3436 = vsel %vm338, %v3434, %v3435
      %v3437 = vrot.slane %v3374, 5
      %v3438 = vrot.slane %v3437, 4
      %v3439 = vrot.slane %v3406, 5
      %v3440 = vsel %vm338, %v3438, %v3439
      %v3441 = vrot.slane %v3375, 5
      %v3442 = vrot.slane %v3441, 4
      %v3443 = vrot.slane %v3407, 5
      %v3444 = vsel %vm338, %v3442, %v3443
      %v3445 = vrot.slane %v3376, 5
      %v3446 = vrot.slane %v3445, 4
      %v3447 = vrot.slane %v3408, 5
      %v3448 = vsel %vm338, %v3446, %v3447
      %v3449 = vrot.slane %v3377, 5
      %v3450 = vrot.slane %v3449, 4
      %v3451 = vrot.slane %v3409, 5
      %v3452 = vsel %vm338, %v3450, %v3451
      %v3453 = vrot.slane %v3378, 5
      %v3454 = vrot.slane %v3453, 4
      %v3455 = vrot.slane %v3410, 5
      %v3456 = vsel %vm338, %v3454, %v3455
      %v3457 = vrot.slane %v3379, 5
      %v3458 = vrot.slane %v3457, 4
      %v3459 = vrot.slane %v3411, 5
      %v3460 = vsel %vm338, %v3458, %v3459
      %v3461 = vrot.slane %v3380, 5
      %v3462 = vrot.slane %v3461, 4
      %v3463 = vrot.slane %v3412, 5
      %v3464 = vsel %vm338, %v3462, %v3463
      %v3465 = vrot.slane %v3381, 5
      %v3466 = vrot.slane %v3465, 4
      %v3467 = vrot.slane %v3413, 5
      %v3468 = vsel %vm338, %v3466, %v3467
      %v3469 = vrot.slane %v3382, 5
      %v3470 = vrot.slane %v3469, 4
      %v3471 = vrot.slane %v3414, 5
      %v3472 = vsel %vm338, %v3470, %v3471
      %v3473 = vrot.slane %v3383, 5
      %v3474 = vrot.slane %v3473, 4
      %v3475 = vrot.slane %v3415, 5
      %v3476 = vsel %vm338, %v3474, %v3475
      %v3477 = vrot.slane %v3384, 5
      %v3478 = vrot.slane %v3477, 4
      %v3479 = vrot.slane %v3416, 5
      %v3480 = vsel %vm338, %v3478, %v3479
      %3481 = vrot.lane.b32.xlu0 %v3193, 64
      %v3482 = vpop.permute.xlu0 %3481
      %3483 = vrot.lane.b32.xlu0 %v3194, 64
      %v3484 = vpop.permute.xlu0 %3483
      %3485 = vrot.lane.b32.xlu0 %v3195, 64
      %v3486 = vpop.permute.xlu0 %3485
      %3487 = vrot.lane.b32.xlu0 %v3196, 64
      %v3488 = vpop.permute.xlu0 %3487
      %3489 = vrot.lane.b32.xlu0 %v3197, 64
      %v3490 = vpop.permute.xlu0 %3489
      %3491 = vrot.lane.b32.xlu0 %v3198, 64
      %v3492 = vpop.permute.xlu0 %3491
      %3493 = vrot.lane.b32.xlu0 %v3199, 64
      %v3494 = vpop.permute.xlu0 %3493
      %3495 = vrot.lane.b32.xlu0 %v3200, 64
      %v3496 = vpop.permute.xlu0 %3495
      %v3505 = vcombine.low %v3308, %v3312
      %v3506 = vcombine.low %v3316, %v3320
      %v3507 = vcombine.low %v3324, %v3328
      %v3508 = vcombine.low %v3332, %v3336
      %v3509 = vcombine.low %v3340, %v3344
      %v3510 = vcombine.low %v3348, %v3352
      %v3511 = vcombine.low %v3356, %v3360
      %v3512 = vcombine.low %v3364, %v3368
      %3513 = vrot.lane.b32.xlu0 %v3505, 64
      %v3514 = vpop.permute.xlu0 %3513
      %3515 = vrot.lane.b32.xlu0 %v3506, 64
      %v3516 = vpop.permute.xlu0 %3515
      %3517 = vrot.lane.b32.xlu0 %v3507, 64
      %v3518 = vpop.permute.xlu0 %3517
      %3519 = vrot.lane.b32.xlu0 %v3508, 64
      %v3520 = vpop.permute.xlu0 %3519
      %3521 = vrot.lane.b32.xlu0 %v3509, 64
      %v3522 = vpop.permute.xlu0 %3521
      %3523 = vrot.lane.b32.xlu0 %v3510, 64
      %v3524 = vpop.permute.xlu0 %3523
      %3525 = vrot.lane.b32.xlu0 %v3511, 64
      %v3526 = vpop.permute.xlu0 %3525
      %3527 = vrot.lane.b32.xlu0 %v3512, 64
      %v3528 = vpop.permute.xlu0 %3527
      %3537 = vrot.lane.b32.xlu0 %v3225, 64
      %v3538 = vpop.permute.xlu0 %3537
      %3539 = vrot.lane.b32.xlu0 %v3226, 64
      %v3540 = vpop.permute.xlu0 %3539
      %3541 = vrot.lane.b32.xlu0 %v3227, 64
      %v3542 = vpop.permute.xlu0 %3541
      %3543 = vrot.lane.b32.xlu0 %v3228, 64
      %v3544 = vpop.permute.xlu0 %3543
      %3545 = vrot.lane.b32.xlu0 %v3229, 64
      %v3546 = vpop.permute.xlu0 %3545
      %3547 = vrot.lane.b32.xlu0 %v3230, 64
      %v3548 = vpop.permute.xlu0 %3547
      %3549 = vrot.lane.b32.xlu0 %v3231, 64
      %v3550 = vpop.permute.xlu0 %3549
      %3551 = vrot.lane.b32.xlu0 %v3232, 64
      %v3552 = vpop.permute.xlu0 %3551
      %v3561 = vcombine.low %v3420, %v3424
      %v3562 = vcombine.low %v3428, %v3432
      %v3563 = vcombine.low %v3436, %v3440
      %v3564 = vcombine.low %v3444, %v3448
      %v3565 = vcombine.low %v3452, %v3456
      %v3566 = vcombine.low %v3460, %v3464
      %v3567 = vcombine.low %v3468, %v3472
      %v3568 = vcombine.low %v3476, %v3480
      %3569 = vrot.lane.b32.xlu0 %v3561, 64
      %v3570 = vpop.permute.xlu0 %3569
      %3571 = vrot.lane.b32.xlu0 %v3562, 64
      %v3572 = vpop.permute.xlu0 %3571
      %3573 = vrot.lane.b32.xlu0 %v3563, 64
      %v3574 = vpop.permute.xlu0 %3573
      %3575 = vrot.lane.b32.xlu0 %v3564, 64
      %v3576 = vpop.permute.xlu0 %3575
      %3577 = vrot.lane.b32.xlu0 %v3565, 64
      %v3578 = vpop.permute.xlu0 %3577
      %3579 = vrot.lane.b32.xlu0 %v3566, 64
      %v3580 = vpop.permute.xlu0 %3579
      %3581 = vrot.lane.b32.xlu0 %v3567, 64
      %v3582 = vpop.permute.xlu0 %3581
      %3583 = vrot.lane.b32.xlu0 %v3568, 64
      %v3584 = vpop.permute.xlu0 %3583
      %v3593 = vsel %vm918, %v3482, %v3514
      %v3594 = vsel %vm918, %v3484, %v3516
      %v3595 = vsel %vm918, %v3486, %v3518
      %v3596 = vsel %vm918, %v3488, %v3520
      %v3597 = vsel %vm918, %v3490, %v3522
      %v3598 = vsel %vm918, %v3492, %v3524
      %v3599 = vsel %vm918, %v3494, %v3526
      %v3600 = vsel %vm918, %v3496, %v3528
      %v3601 = vsel %vm918, %v3538, %v3570
      %v3602 = vsel %vm918, %v3540, %v3572
      %v3603 = vsel %vm918, %v3542, %v3574
      %v3604 = vsel %vm918, %v3544, %v3576
      %v3605 = vsel %vm918, %v3546, %v3578
      %v3606 = vsel %vm918, %v3548, %v3580
      %v3607 = vsel %vm918, %v3550, %v3582
      %v3608 = vsel %vm918, %v3552, %v3584
      %s3609 = scalar_lea.vmem [#allocation2], 192
      %v3610 = vld [vmem:[%s3609] sm:$0xf]
      %v3611 = vld [vmem:[%s3609 + $0x20] sm:$0xf]
      %v3612 = vld [vmem:[%s3609 + $0x40] sm:$0xf]
      %v3613 = vld [vmem:[%s3609 + $0x60] sm:$0xf]
      %v3614 = vld [vmem:[%s3609 + $0xa0] sm:$0xf]
      %v3615 = vld [vmem:[%s3609 + $0xc0] sm:$0xf]
      %v3616 = vld [vmem:[%s3609 + $0xe0] sm:$0xf]
      %v3617 = vld [vmem:[%s3609 + $0x100] sm:$0xf]
      %v3618 = vld [vmem:[%s3609 + $0x140] sm:$0xf]
      %v3619 = vld [vmem:[%s3609 + $0x160] sm:$0xf]
      %v3620 = vld [vmem:[%s3609 + $0x180] sm:$0xf]
      %v3621 = vld [vmem:[%s3609 + $0x1a0] sm:$0xf]
      %v3622 = vld [vmem:[%s3609 + $0x1e0] sm:$0xf]
      %v3623 = vld [vmem:[%s3609 + $0x200] sm:$0xf]
      %v3624 = vld [vmem:[%s3609 + $0x220] sm:$0xf]
      %v3625 = vld [vmem:[%s3609 + $0x240] sm:$0xf]
      %v3642 = vcombine.low %v3610, %v3611
      %v3643 = vcombine.low %v3612, %v3613
      %v3644 = vcombine.low %v3614, %v3615
      %v3645 = vcombine.low %v3616, %v3617
      %v3646 = vcombine.low %v3618, %v3619
      %v3647 = vcombine.low %v3620, %v3621
      %v3648 = vcombine.low %v3622, %v3623
      %v3649 = vcombine.low %v3624, %v3625
      %v3658 = vsel %vm918, %v3642, %v3642
      %v3659 = vsel %vm918, %v3643, %v3643
      %v3660 = vsel %vm918, %v3644, %v3644
      %v3661 = vsel %vm918, %v3645, %v3645
      %v3662 = vsel %vm918, %v3646, %v3646
      %v3663 = vsel %vm918, %v3647, %v3647
      %v3664 = vsel %vm918, %v3648, %v3648
      %v3665 = vsel %vm918, %v3649, %v3649
      %v3666 = vld [vmem:[%s3609] sm:$0x1e]
      %v3667 = vld [vmem:[%s3609 + $0x20] sm:$0x1e]
      %v3668 = vld [vmem:[%s3609 + $0x40] sm:$0x1e]
      %v3669 = vld [vmem:[%s3609 + $0x60] sm:$0x1e]
      %v3670 = vld [vmem:[%s3609 + $0xa0] sm:$0x1e]
      %v3671 = vld [vmem:[%s3609 + $0xc0] sm:$0x1e]
      %v3672 = vld [vmem:[%s3609 + $0xe0] sm:$0x1e]
      %v3673 = vld [vmem:[%s3609 + $0x100] sm:$0x1e]
      %v3674 = vld [vmem:[%s3609 + $0x140] sm:$0x1e]
      %v3675 = vld [vmem:[%s3609 + $0x160] sm:$0x1e]
      %v3676 = vld [vmem:[%s3609 + $0x180] sm:$0x1e]
      %v3677 = vld [vmem:[%s3609 + $0x1a0] sm:$0x1e]
      %v3678 = vld [vmem:[%s3609 + $0x1e0] sm:$0x1e]
      %v3679 = vld [vmem:[%s3609 + $0x200] sm:$0x1e]
      %v3680 = vld [vmem:[%s3609 + $0x220] sm:$0x1e]
      %v3681 = vld [vmem:[%s3609 + $0x240] sm:$0x1e]
      %v3698 = vcombine.high %v3666, %v3666
      %v3699 = vcombine.high %v3667, %v3667
      %v3700 = vcombine.high %v3668, %v3668
      %v3701 = vcombine.high %v3669, %v3669
      %v3702 = vcombine.high %v3670, %v3670
      %v3703 = vcombine.high %v3671, %v3671
      %v3704 = vcombine.high %v3672, %v3672
      %v3705 = vcombine.high %v3673, %v3673
      %v3706 = vcombine.high %v3674, %v3674
      %v3707 = vcombine.high %v3675, %v3675
      %v3708 = vcombine.high %v3676, %v3676
      %v3709 = vcombine.high %v3677, %v3677
      %v3710 = vcombine.high %v3678, %v3678
      %v3711 = vcombine.high %v3679, %v3679
      %v3712 = vcombine.high %v3680, %v3680
      %v3713 = vcombine.high %v3681, %v3681
      %v3714 = vrot.slane %v3666, 5
      %v3715 = vrot.slane %v3714, 4
      %v3716 = vrot.slane %v3698, 5
      %v3717 = vsel %vm338, %v3715, %v3716
      %v3718 = vrot.slane %v3667, 5
      %v3719 = vrot.slane %v3718, 4
      %v3720 = vrot.slane %v3699, 5
      %v3721 = vsel %vm338, %v3719, %v3720
      %v3722 = vrot.slane %v3668, 5
      %v3723 = vrot.slane %v3722, 4
      %v3724 = vrot.slane %v3700, 5
      %v3725 = vsel %vm338, %v3723, %v3724
      %v3726 = vrot.slane %v3669, 5
      %v3727 = vrot.slane %v3726, 4
      %v3728 = vrot.slane %v3701, 5
      %v3729 = vsel %vm338, %v3727, %v3728
      %v3730 = vrot.slane %v3670, 5
      %v3731 = vrot.slane %v3730, 4
      %v3732 = vrot.slane %v3702, 5
      %v3733 = vsel %vm338, %v3731, %v3732
      %v3734 = vrot.slane %v3671, 5
      %v3735 = vrot.slane %v3734, 4
      %v3736 = vrot.slane %v3703, 5
      %v3737 = vsel %vm338, %v3735, %v3736
      %v3738 = vrot.slane %v3672, 5
      %v3739 = vrot.slane %v3738, 4
      %v3740 = vrot.slane %v3704, 5
      %v3741 = vsel %vm338, %v3739, %v3740
      %v3742 = vrot.slane %v3673, 5
      %v3743 = vrot.slane %v3742, 4
      %v3744 = vrot.slane %v3705, 5
      %v3745 = vsel %vm338, %v3743, %v3744
      %v3746 = vrot.slane %v3674, 5
      %v3747 = vrot.slane %v3746, 4
      %v3748 = vrot.slane %v3706, 5
      %v3749 = vsel %vm338, %v3747, %v3748
      %v3750 = vrot.slane %v3675, 5
      %v3751 = vrot.slane %v3750, 4
      %v3752 = vrot.slane %v3707, 5
      %v3753 = vsel %vm338, %v3751, %v3752
      %v3754 = vrot.slane %v3676, 5
      %v3755 = vrot.slane %v3754, 4
      %v3756 = vrot.slane %v3708, 5
      %v3757 = vsel %vm338, %v3755, %v3756
      %v3758 = vrot.slane %v3677, 5
      %v3759 = vrot.slane %v3758, 4
      %v3760 = vrot.slane %v3709, 5
      %v3761 = vsel %vm338, %v3759, %v3760
      %v3762 = vrot.slane %v3678, 5
      %v3763 = vrot.slane %v3762, 4
      %v3764 = vrot.slane %v3710, 5
      %v3765 = vsel %vm338, %v3763, %v3764
      %v3766 = vrot.slane %v3679, 5
      %v3767 = vrot.slane %v3766, 4
      %v3768 = vrot.slane %v3711, 5
      %v3769 = vsel %vm338, %v3767, %v3768
      %v3770 = vrot.slane %v3680, 5
      %v3771 = vrot.slane %v3770, 4
      %v3772 = vrot.slane %v3712, 5
      %v3773 = vsel %vm338, %v3771, %v3772
      %v3774 = vrot.slane %v3681, 5
      %v3775 = vrot.slane %v3774, 4
      %v3776 = vrot.slane %v3713, 5
      %v3777 = vsel %vm338, %v3775, %v3776
      %3778 = vrot.lane.b32.xlu0 %v3642, 64
      %v3779 = vpop.permute.xlu0 %3778
      %3780 = vrot.lane.b32.xlu0 %v3643, 64
      %v3781 = vpop.permute.xlu0 %3780
      %3782 = vrot.lane.b32.xlu0 %v3644, 64
      %v3783 = vpop.permute.xlu0 %3782
      %3784 = vrot.lane.b32.xlu0 %v3645, 64
      %v3785 = vpop.permute.xlu0 %3784
      %3786 = vrot.lane.b32.xlu0 %v3646, 64
      %v3787 = vpop.permute.xlu0 %3786
      %3788 = vrot.lane.b32.xlu0 %v3647, 64
      %v3789 = vpop.permute.xlu0 %3788
      %3790 = vrot.lane.b32.xlu0 %v3648, 64
      %v3791 = vpop.permute.xlu0 %3790
      %3792 = vrot.lane.b32.xlu0 %v3649, 64
      %v3793 = vpop.permute.xlu0 %3792
      %v3802 = vcombine.low %v3717, %v3721
      %v3803 = vcombine.low %v3725, %v3729
      %v3804 = vcombine.low %v3733, %v3737
      %v3805 = vcombine.low %v3741, %v3745
      %v3806 = vcombine.low %v3749, %v3753
      %v3807 = vcombine.low %v3757, %v3761
      %v3808 = vcombine.low %v3765, %v3769
      %v3809 = vcombine.low %v3773, %v3777
      %3810 = vrot.lane.b32.xlu0 %v3802, 64
      %v3811 = vpop.permute.xlu0 %3810
      %3812 = vrot.lane.b32.xlu0 %v3803, 64
      %v3813 = vpop.permute.xlu0 %3812
      %3814 = vrot.lane.b32.xlu0 %v3804, 64
      %v3815 = vpop.permute.xlu0 %3814
      %3816 = vrot.lane.b32.xlu0 %v3805, 64
      %v3817 = vpop.permute.xlu0 %3816
      %3818 = vrot.lane.b32.xlu0 %v3806, 64
      %v3819 = vpop.permute.xlu0 %3818
      %3820 = vrot.lane.b32.xlu0 %v3807, 64
      %v3821 = vpop.permute.xlu0 %3820
      %3822 = vrot.lane.b32.xlu0 %v3808, 64
      %v3823 = vpop.permute.xlu0 %3822
      %3824 = vrot.lane.b32.xlu0 %v3809, 64
      %v3825 = vpop.permute.xlu0 %3824
      %v3834 = vsel %vm918, %v3779, %v3811
      %v3835 = vsel %vm918, %v3781, %v3813
      %v3836 = vsel %vm918, %v3783, %v3815
      %v3837 = vsel %vm918, %v3785, %v3817
      %v3838 = vsel %vm918, %v3787, %v3819
      %v3839 = vsel %vm918, %v3789, %v3821
      %v3840 = vsel %vm918, %v3791, %v3823
      %v3841 = vsel %vm918, %v3793, %v3825
      %v3842 = vld [vmem:[%s3] sm:$0xff]
      %v3843 = vld [vmem:[%s3 + $0x8] sm:$0xff]
      %v3844 = vld [vmem:[%s3 + $0x10] sm:$0xff]
      %v3845 = vld [vmem:[%s3 + $0x18] sm:$0xff]
      %v3846 = vld [vmem:[%s3 + $0x20] sm:$0xff]
      %v3847 = vld [vmem:[%s3 + $0x28] sm:$0xff]
      %v3848 = vld [vmem:[%s3 + $0x30] sm:$0xff]
      %v3849 = vld [vmem:[%s3 + $0x38] sm:$0xff]
      %v3850 = vld [vmem:[%s3 + $0x40] sm:$0xff]
      %v3851 = vld [vmem:[%s3 + $0x48] sm:$0xff]
      %v3852 = vld [vmem:[%s3 + $0x50] sm:$0xff]
      %v3853 = vld [vmem:[%s3 + $0x58] sm:$0xff]
      %v3854 = vld [vmem:[%s3 + $0x60] sm:$0xff]
      %v3855 = vld [vmem:[%s3 + $0x68] sm:$0xff]
      %v3856 = vld [vmem:[%s3 + $0x70] sm:$0xff]
      %v3857 = vld [vmem:[%s3 + $0x78] sm:$0xff]
      %v3858 = vld [vmem:[%s3 + $0x80] sm:$0xff]
      %v3859 = vld [vmem:[%s3 + $0x88] sm:$0xff]
      %v3860 = vld [vmem:[%s3 + $0x90] sm:$0xff]
      %v3861 = vld [vmem:[%s3 + $0x98] sm:$0xff]
      %v3862 = vld [vmem:[%s3 + $0xa0] sm:$0xff]
      %v3863 = vld [vmem:[%s3 + $0xa8] sm:$0xff]
      %v3864 = vld [vmem:[%s3 + $0xb0] sm:$0xff]
      %v3865 = vld [vmem:[%s3 + $0xb8] sm:$0xff]
      %v3866 = vld [vmem:[%s3 + $0xc0] sm:$0xff]
      %v3867 = vld [vmem:[%s3 + $0xc8] sm:$0xff]
      %v3868 = vld [vmem:[%s3 + $0xd0] sm:$0xff]
      %v3869 = vld [vmem:[%s3 + $0xd8] sm:$0xff]
      %v3870 = vld [vmem:[%s3 + $0xe0] sm:$0xff]
      %v3871 = vld [vmem:[%s3 + $0xe8] sm:$0xff]
      %v3872 = vld [vmem:[%s3 + $0xf0] sm:$0xff]
      %v3873 = vld [vmem:[%s3 + $0xf8] sm:$0xff]
      %v3874 = vld [vmem:[%s3 + $0x100] sm:$0xff]
      %v3875 = vld [vmem:[%s3 + $0x108] sm:$0xff]
      %v3876 = vld [vmem:[%s3 + $0x110] sm:$0xff]
      %v3877 = vld [vmem:[%s3 + $0x118] sm:$0xff]
      %v3878 = vld [vmem:[%s3 + $0x120] sm:$0xff]
      %v3879 = vld [vmem:[%s3 + $0x128] sm:$0xff]
      %v3880 = vld [vmem:[%s3 + $0x130] sm:$0xff]
      %v3881 = vld [vmem:[%s3 + $0x138] sm:$0xff]
      %v3882 = vld [vmem:[%s3 + $0x140] sm:$0xff]
      %v3883 = vld [vmem:[%s3 + $0x148] sm:$0xff]
      %v3884 = vld [vmem:[%s3 + $0x150] sm:$0xff]
      %v3885 = vld [vmem:[%s3 + $0x158] sm:$0xff]
      %v3886 = vld [vmem:[%s3 + $0x160] sm:$0xff]
      %v3887 = vld [vmem:[%s3 + $0x168] sm:$0xff]
      %v3888 = vld [vmem:[%s3 + $0x170] sm:$0xff]
      %v3889 = vld [vmem:[%s3 + $0x178] sm:$0xff]
      %v3890 = vld [vmem:[%s3 + $0x180] sm:$0xff]
      %v3891 = vld [vmem:[%s3 + $0x188] sm:$0xff]
      %v3892 = vld [vmem:[%s3 + $0x190] sm:$0xff]
      %v3893 = vld [vmem:[%s3 + $0x198] sm:$0xff]
      %v3894 = vld [vmem:[%s3 + $0x1a0] sm:$0xff]
      %v3895 = vld [vmem:[%s3 + $0x1a8] sm:$0xff]
      %v3896 = vld [vmem:[%s3 + $0x1b0] sm:$0xff]
      %v3897 = vld [vmem:[%s3 + $0x1b8] sm:$0xff]
      %v3898 = vld [vmem:[%s3 + $0x1c0] sm:$0xff]
      %v3899 = vld [vmem:[%s3 + $0x1c8] sm:$0xff]
      %v3900 = vld [vmem:[%s3 + $0x1d0] sm:$0xff]
      %v3901 = vld [vmem:[%s3 + $0x1d8] sm:$0xff]
      %v3902 = vld [vmem:[%s3 + $0x1e0] sm:$0xff]
      %v3903 = vld [vmem:[%s3 + $0x1e8] sm:$0xff]
      %v3904 = vld [vmem:[%s3 + $0x1f0] sm:$0xff]
      %v3905 = vld [vmem:[%s3 + $0x1f8] sm:$0xff]
      %v3906 = vld [vmem:[%s3 + $0x200] sm:$0xff]
      %v3907 = vld [vmem:[%s3 + $0x208] sm:$0xff]
      %v3908 = vld [vmem:[%s3 + $0x210] sm:$0xff]
      %v3909 = vld [vmem:[%s3 + $0x218] sm:$0xff]
      %v3910 = vld [vmem:[%s3 + $0x220] sm:$0xff]
      %v3911 = vld [vmem:[%s3 + $0x228] sm:$0xff]
      %v3912 = vld [vmem:[%s3 + $0x230] sm:$0xff]
      %v3913 = vld [vmem:[%s3 + $0x238] sm:$0xff]
      %v3914 = vld [vmem:[%s3 + $0x240] sm:$0xff]
      %v3915 = vld [vmem:[%s3 + $0x248] sm:$0xff]
      %v3916 = vld [vmem:[%s3 + $0x250] sm:$0xff]
      %v3917 = vld [vmem:[%s3 + $0x258] sm:$0xff]
      %v3918 = vld [vmem:[%s3 + $0x260] sm:$0xff]
      %v3919 = vld [vmem:[%s3 + $0x268] sm:$0xff]
      %v3920 = vld [vmem:[%s3 + $0x270] sm:$0xff]
      %v3921 = vld [vmem:[%s3 + $0x278] sm:$0xff]
      %v3922 = vld [vmem:[%s3 + $0x280] sm:$0xff]
      %v3923 = vld [vmem:[%s3 + $0x288] sm:$0xff]
      %v3924 = vld [vmem:[%s3 + $0x290] sm:$0xff]
      %v3925 = vld [vmem:[%s3 + $0x298] sm:$0xff]
      %v3926 = vld [vmem:[%s3 + $0x2a0] sm:$0xff]
      %v3927 = vld [vmem:[%s3 + $0x2a8] sm:$0xff]
      %v3928 = vld [vmem:[%s3 + $0x2b0] sm:$0xff]
      %v3929 = vld [vmem:[%s3 + $0x2b8] sm:$0xff]
      %v3930 = vld [vmem:[%s3 + $0x2c0] sm:$0xff]
      %v3931 = vld [vmem:[%s3 + $0x2c8] sm:$0xff]
      %v3932 = vld [vmem:[%s3 + $0x2d0] sm:$0xff]
      %v3933 = vld [vmem:[%s3 + $0x2d8] sm:$0xff]
      %v3934 = vld [vmem:[%s3 + $0x2e0] sm:$0xff]
      %v3935 = vld [vmem:[%s3 + $0x2e8] sm:$0xff]
      %v3936 = vld [vmem:[%s3 + $0x2f0] sm:$0xff]
      %v3937 = vld [vmem:[%s3 + $0x2f8] sm:$0xff]
      %v3938 = vld [vmem:[%s3 + $0x300] sm:$0xff]
      %v3939 = vld [vmem:[%s3 + $0x308] sm:$0xff]
      %v3940 = vld [vmem:[%s3 + $0x310] sm:$0xff]
      %v3941 = vld [vmem:[%s3 + $0x318] sm:$0xff]
      %v3942 = vld [vmem:[%s3 + $0x320] sm:$0xff]
      %v3943 = vld [vmem:[%s3 + $0x328] sm:$0xff]
      %v3944 = vld [vmem:[%s3 + $0x330] sm:$0xff]
      %v3945 = vld [vmem:[%s3 + $0x338] sm:$0xff]
      %v3946 = vld [vmem:[%s3 + $0x340] sm:$0xff]
      %v3947 = vld [vmem:[%s3 + $0x348] sm:$0xff]
      %v3948 = vld [vmem:[%s3 + $0x350] sm:$0xff]
      %v3949 = vld [vmem:[%s3 + $0x358] sm:$0xff]
      %v3950 = vld [vmem:[%s3 + $0x360] sm:$0xff]
      %v3951 = vld [vmem:[%s3 + $0x368] sm:$0xff]
      %v3952 = vld [vmem:[%s3 + $0x370] sm:$0xff]
      %v3953 = vld [vmem:[%s3 + $0x378] sm:$0xff]
      %v3954 = vld [vmem:[%s3 + $0x380] sm:$0xff]
      %v3955 = vld [vmem:[%s3 + $0x388] sm:$0xff]
      %v3956 = vld [vmem:[%s3 + $0x390] sm:$0xff]
      %v3957 = vld [vmem:[%s3 + $0x398] sm:$0xff]
      %v3958 = vld [vmem:[%s3 + $0x3a0] sm:$0xff]
      %v3959 = vld [vmem:[%s3 + $0x3a8] sm:$0xff]
      %v3960 = vld [vmem:[%s3 + $0x3b0] sm:$0xff]
      %v3961 = vld [vmem:[%s3 + $0x3b8] sm:$0xff]
      %v3962 = vld [vmem:[%s3 + $0x3c0] sm:$0xff]
      %v3963 = vld [vmem:[%s3 + $0x3c8] sm:$0xff]
      %v3964 = vld [vmem:[%s3 + $0x3d0] sm:$0xff]
      %v3965 = vld [vmem:[%s3 + $0x3d8] sm:$0xff]
      %v3966 = vld [vmem:[%s3 + $0x3e0] sm:$0xff]
      %v3967 = vld [vmem:[%s3 + $0x3e8] sm:$0xff]
      %v3968 = vld [vmem:[%s3 + $0x3f0] sm:$0xff]
      %v3969 = vld [vmem:[%s3 + $0x3f8] sm:$0xff]
      %v3970 = vld [vmem:[%s4] sm:$0x3]
      %v3972 = vlaneseq
      %v3973 = vshrl.u32 %v3972, 7
      %v3974 = vsub.s32 0, %v3973
      %v3975 = vrot.slane %v3970, %v3974
      %v3976 = vlaneseq
      %v3977 = vshrl.u32 %v3976, 7
      %v3978 = vsub.s32 1, %v3977
      %v3979 = vrot.slane %v3970, %v3978
      %3982 = vmatprep.subr.mxu0 %v3843
      %3983 = vmatpush1.msra.mxu0 %v3842
      %3984 = vmatprep.subr.mxu0 %v3845
      %3985 = vmatpush1.msra.mxu0 %v3844
      %3986 = vmatprep.subr.mxu0 %v3847
      %3987 = vmatpush1.msra.mxu0 %v3846
      %3988 = vmatprep.subr.mxu0 %v3849
      %3989 = vmatpush1.msra.mxu0 %v3848
      %3990 = vmatprep.subr.mxu0 %v3851
      %3991 = vmatpush1.msra.mxu0 %v3850
      %3992 = vmatprep.subr.mxu0 %v3853
      %3993 = vmatpush1.msra.mxu0 %v3852
      %3994 = vmatprep.subr.mxu0 %v3855
      %3995 = vmatpush1.msra.mxu0 %v3854
      %3996 = vmatprep.subr.mxu0 %v3857
      %3997 = vmatpush1.msra.mxu0 %v3856
      %3998 = vmatprep.subr.mxu0 %v3859
      %3999 = vmatpush1.msra.mxu0 %v3858
      %4000 = vmatprep.subr.mxu0 %v3861
      %4001 = vmatpush1.msra.mxu0 %v3860
      %4002 = vmatprep.subr.mxu0 %v3863
      %4003 = vmatpush1.msra.mxu0 %v3862
      %4004 = vmatprep.subr.mxu0 %v3865
      %4005 = vmatpush1.msra.mxu0 %v3864
      %4006 = vmatprep.subr.mxu0 %v3867
      %4007 = vmatpush1.msra.mxu0 %v3866
      %4008 = vmatprep.subr.mxu0 %v3869
      %4009 = vmatpush1.msra.mxu0 %v3868
      %4010 = vmatprep.subr.mxu0 %v3871
      %4011 = vmatpush1.msra.mxu0 %v3870
      %4012 = vmatprep.subr.mxu0 %v3873
      %4013 = vmatpush1.msra.mxu0 %v3872
      %4014 = vmatprep.subr.mxu0 %v3875
      %4015 = vmatpush1.msra.mxu0 %v3874
      %4016 = vmatprep.subr.mxu0 %v3877
      %4017 = vmatpush1.msra.mxu0 %v3876
      %4018 = vmatprep.subr.mxu0 %v3879
      %4019 = vmatpush1.msra.mxu0 %v3878
      %4020 = vmatprep.subr.mxu0 %v3881
      %4021 = vmatpush1.msra.mxu0 %v3880
      %4022 = vmatprep.subr.mxu0 %v3883
      %4023 = vmatpush1.msra.mxu0 %v3882
      %4024 = vmatprep.subr.mxu0 %v3885
      %4025 = vmatpush1.msra.mxu0 %v3884
      %4026 = vmatprep.subr.mxu0 %v3887
      %4027 = vmatpush1.msra.mxu0 %v3886
      %4028 = vmatprep.subr.mxu0 %v3889
      %4029 = vmatpush1.msra.mxu0 %v3888
      %4030 = vmatprep.subr.mxu0 %v3891
      %4031 = vmatpush1.msra.mxu0 %v3890
      %4032 = vmatprep.subr.mxu0 %v3893
      %4033 = vmatpush1.msra.mxu0 %v3892
      %4034 = vmatprep.subr.mxu0 %v3895
      %4035 = vmatpush1.msra.mxu0 %v3894
      %4036 = vmatprep.subr.mxu0 %v3897
      %4037 = vmatpush1.msra.mxu0 %v3896
      %4038 = vmatprep.subr.mxu0 %v3899
      %4039 = vmatpush1.msra.mxu0 %v3898
      %4040 = vmatprep.subr.mxu0 %v3901
      %4041 = vmatpush1.msra.mxu0 %v3900
      %4042 = vmatprep.subr.mxu0 %v3903
      %4043 = vmatpush1.msra.mxu0 %v3902
      %4044 = vmatprep.subr.mxu0 %v3905
      %4045 = vmatpush1.msra.mxu0 %v3904
      %4046 = vmatprep.mubr.f32.mxu0 %v1951
      %4047 = vmatmul.mubr.f32.gmra.mrb[0].mxu0 %v1943
      %v4048 = vpop.f32.mrb[0].mxu0
      %v4049 = vadd.f32 %v3975, %v4048
      %v4050 = vpop.f32.mrb[0].mxu0
      %v4051 = vadd.f32 %v3979, %v4050
      %4052 = vmatprep.mubr.f32.mxu0 %v1952
      %4053 = vmatmul.mubr.f32.gmra.mrb[0].mxu0 %v1944
      %v4054 = vpop.f32.mrb[0].mxu0
      %v4055 = vadd.f32 %v3975, %v4054
      %v4056 = vpop.f32.mrb[0].mxu0
      %v4057 = vadd.f32 %v3979, %v4056
      %4058 = vmatprep.mubr.f32.mxu0 %v1953
      %4059 = vmatmul.mubr.f32.gmra.mrb[0].mxu0 %v1945
      %v4060 = vpop.f32.mrb[0].mxu0
      %v4061 = vadd.f32 %v3975, %v4060
      %v4062 = vpop.f32.mrb[0].mxu0
      %v4063 = vadd.f32 %v3979, %v4062
      %4064 = vmatprep.mubr.f32.mxu0 %v1954
      %4065 = vmatmul.mubr.f32.gmra.mrb[0].mxu0 %v1946
      %v4066 = vpop.f32.mrb[0].mxu0
      %v4067 = vadd.f32 %v3975, %v4066
      %v4068 = vpop.f32.mrb[0].mxu0
      %v4069 = vadd.f32 %v3979, %v4068
      %4070 = vmatprep.mubr.f32.mxu0 %v1955
      %4071 = vmatmul.mubr.f32.gmra.mrb[0].mxu0 %v1947
      %v4072 = vpop.f32.mrb[0].mxu0
      %v4073 = vadd.f32 %v3975, %v4072
      %v4074 = vpop.f32.mrb[0].mxu0
      %v4075 = vadd.f32 %v3979, %v4074
      %4076 = vmatprep.mubr.f32.mxu0 %v1956
      %4077 = vmatmul.mubr.f32.gmra.mrb[0].mxu0 %v1948
      %v4078 = vpop.f32.mrb[0].mxu0
      %v4079 = vadd.f32 %v3975, %v4078
      %v4080 = vpop.f32.mrb[0].mxu0
      %v4081 = vadd.f32 %v3979, %v4080
      %4082 = vmatprep.mubr.f32.mxu0 %v1957
      %4083 = vmatmul.mubr.f32.gmra.mrb[0].mxu0 %v1949
      %v4084 = vpop.f32.mrb[0].mxu0
      %v4085 = vadd.f32 %v3975, %v4084
      %v4086 = vpop.f32.mrb[0].mxu0
      %v4087 = vadd.f32 %v3979, %v4086
      %4088 = vmatprep.mubr.f32.mxu0 %v1958
      %4089 = vmatmul.mubr.f32.gmra.mrb[0].mxu0 %v1950
      %v4090 = vpop.f32.mrb[0].mxu0
      %v4091 = vadd.f32 %v3975, %v4090
      %v4092 = vpop.f32.mrb[0].mxu0
      %v4093 = vadd.f32 %v3979, %v4092
      %4094 = vmatprep.mubr.f32.mxu0 %v2655
      %4095 = vmatmul.mubr.f32.gmra.mrb[0].mxu0 %v2647
      %v4096 = vpop.f32.mrb[0].mxu0
      %v4097 = vadd.f32 %v3975, %v4096
      %v4098 = vpop.f32.mrb[0].mxu0
      %v4099 = vadd.f32 %v3979, %v4098
      %4100 = vmatprep.mubr.f32.mxu0 %v2656
      %4101 = vmatmul.mubr.f32.gmra.mrb[0].mxu0 %v2648
      %v4102 = vpop.f32.mrb[0].mxu0
      %v4103 = vadd.f32 %v3975, %v4102
      %v4104 = vpop.f32.mrb[0].mxu0
      %v4105 = vadd.f32 %v3979, %v4104
      %4106 = vmatprep.mubr.f32.mxu0 %v2657
      %4107 = vmatmul.mubr.f32.gmra.mrb[0].mxu0 %v2649
      %v4108 = vpop.f32.mrb[0].mxu0
      %v4109 = vadd.f32 %v3975, %v4108
      %v4110 = vpop.f32.mrb[0].mxu0
      %v4111 = vadd.f32 %v3979, %v4110
      %4112 = vmatprep.mubr.f32.mxu0 %v2658
      %4113 = vmatmul.mubr.f32.gmra.mrb[0].mxu0 %v2650
      %v4114 = vpop.f32.mrb[0].mxu0
      %v4115 = vadd.f32 %v3975, %v4114
      %v4116 = vpop.f32.mrb[0].mxu0
      %v4117 = vadd.f32 %v3979, %v4116
      %4118 = vmatprep.mubr.f32.mxu0 %v2659
      %4119 = vmatmul.mubr.f32.gmra.mrb[0].mxu0 %v2651
      %v4120 = vpop.f32.mrb[0].mxu0
      %v4121 = vadd.f32 %v3975, %v4120
      %v4122 = vpop.f32.mrb[0].mxu0
      %v4123 = vadd.f32 %v3979, %v4122
      %4124 = vmatprep.mubr.f32.mxu0 %v2660
      %4125 = vmatmul.mubr.f32.gmra.mrb[0].mxu0 %v2652
      %v4126 = vpop.f32.mrb[0].mxu0
      %v4127 = vadd.f32 %v3975, %v4126
      %v4128 = vpop.f32.mrb[0].mxu0
      %v4129 = vadd.f32 %v3979, %v4128
      %4130 = vmatprep.mubr.f32.mxu0 %v2661
      %4131 = vmatmul.mubr.f32.gmra.mrb[0].mxu0 %v2653
      %v4132 = vpop.f32.mrb[0].mxu0
      %v4133 = vadd.f32 %v3975, %v4132
      %v4134 = vpop.f32.mrb[0].mxu0
      %v4135 = vadd.f32 %v3979, %v4134
      %4136 = vmatprep.mubr.f32.mxu0 %v2662
      %4137 = vmatmul.mubr.f32.gmra.mrb[0].mxu0 %v2654
      %v4138 = vpop.f32.mrb[0].mxu0
      %v4139 = vadd.f32 %v3975, %v4138
      %v4140 = vpop.f32.mrb[0].mxu0
      %v4141 = vadd.f32 %v3979, %v4140
      %4142 = vmatprep.mubr.f32.mxu0 %v2776
      %4143 = vmatmul.mubr.f32.gmra.mrb[0].mxu0 %v1951
      %v4144 = vpop.f32.mrb[0].mxu0
      %v4145 = vadd.f32 %v3975, %v4144
      %v4146 = vpop.f32.mrb[0].mxu0
      %v4147 = vadd.f32 %v3979, %v4146
      %4148 = vmatprep.mubr.f32.mxu0 %v2777
      %4149 = vmatmul.mubr.f32.gmra.mrb[0].mxu0 %v1952
      %v4150 = vpop.f32.mrb[0].mxu0
      %v4151 = vadd.f32 %v3975, %v4150
      %v4152 = vpop.f32.mrb[0].mxu0
      %v4153 = vadd.f32 %v3979, %v4152
      %4154 = vmatprep.mubr.f32.mxu0 %v2778
      %4155 = vmatmul.mubr.f32.gmra.mrb[0].mxu0 %v1953
      %v4156 = vpop.f32.mrb[0].mxu0
      %v4157 = vadd.f32 %v3975, %v4156
      %v4158 = vpop.f32.mrb[0].mxu0
      %v4159 = vadd.f32 %v3979, %v4158
      %4160 = vmatprep.mubr.f32.mxu0 %v2779
      %4161 = vmatmul.mubr.f32.gmra.mrb[0].mxu0 %v1954
      %v4162 = vpop.f32.mrb[0].mxu0
      %v4163 = vadd.f32 %v3975, %v4162
      %v4164 = vpop.f32.mrb[0].mxu0
      %v4165 = vadd.f32 %v3979, %v4164
      %4166 = vmatprep.mubr.f32.mxu0 %v2780
      %4167 = vmatmul.mubr.f32.gmra.mrb[0].mxu0 %v1955
      %v4168 = vpop.f32.mrb[0].mxu0
      %v4169 = vadd.f32 %v3975, %v4168
      %v4170 = vpop.f32.mrb[0].mxu0
      %v4171 = vadd.f32 %v3979, %v4170
      %4172 = vmatprep.mubr.f32.mxu0 %v2781
      %4173 = vmatmul.mubr.f32.gmra.mrb[0].mxu0 %v1956
      %v4174 = vpop.f32.mrb[0].mxu0
      %v4175 = vadd.f32 %v3975, %v4174
      %v4176 = vpop.f32.mrb[0].mxu0
      %v4177 = vadd.f32 %v3979, %v4176
      %4178 = vmatprep.mubr.f32.mxu0 %v2782
      %4179 = vmatmul.mubr.f32.gmra.mrb[0].mxu0 %v1957
      %v4180 = vpop.f32.mrb[0].mxu0
      %v4181 = vadd.f32 %v3975, %v4180
      %v4182 = vpop.f32.mrb[0].mxu0
      %v4183 = vadd.f32 %v3979, %v4182
      %4184 = vmatprep.mubr.f32.mxu0 %v2783
      %4185 = vmatmul.mubr.f32.gmra.mrb[0].mxu0 %v1958
      %v4186 = vpop.f32.mrb[0].mxu0
      %v4187 = vadd.f32 %v3975, %v4186
      %v4188 = vpop.f32.mrb[0].mxu0
      %v4189 = vadd.f32 %v3979, %v4188
      %4190 = vmatprep.mubr.f32.mxu0 %v3128
      %4191 = vmatmul.mubr.f32.gmra.mrb[0].mxu0 %v2655
      %v4192 = vpop.f32.mrb[0].mxu0
      %v4193 = vadd.f32 %v3975, %v4192
      %v4194 = vpop.f32.mrb[0].mxu0
      %v4195 = vadd.f32 %v3979, %v4194
      %4196 = vmatprep.mubr.f32.mxu0 %v3129
      %4197 = vmatmul.mubr.f32.gmra.mrb[0].mxu0 %v2656
      %v4198 = vpop.f32.mrb[0].mxu0
      %v4199 = vadd.f32 %v3975, %v4198
      %v4200 = vpop.f32.mrb[0].mxu0
      %v4201 = vadd.f32 %v3979, %v4200
      %4202 = vmatprep.mubr.f32.mxu0 %v3130
      %4203 = vmatmul.mubr.f32.gmra.mrb[0].mxu0 %v2657
      %v4204 = vpop.f32.mrb[0].mxu0
      %v4205 = vadd.f32 %v3975, %v4204
      %v4206 = vpop.f32.mrb[0].mxu0
      %v4207 = vadd.f32 %v3979, %v4206
      %4208 = vmatprep.mubr.f32.mxu0 %v3131
      %4209 = vmatmul.mubr.f32.gmra.mrb[0].mxu0 %v2658
      %v4210 = vpop.f32.mrb[0].mxu0
      %v4211 = vadd.f32 %v3975, %v4210
      %v4212 = vpop.f32.mrb[0].mxu0
      %v4213 = vadd.f32 %v3979, %v4212
      %4214 = vmatprep.mubr.f32.mxu0 %v3132
      %4215 = vmatmul.mubr.f32.gmra.mrb[0].mxu0 %v2659
      %v4216 = vpop.f32.mrb[0].mxu0
      %v4217 = vadd.f32 %v3975, %v4216
      %v4218 = vpop.f32.mrb[0].mxu0
      %v4219 = vadd.f32 %v3979, %v4218
      %4220 = vmatprep.mubr.f32.mxu0 %v3133
      %4221 = vmatmul.mubr.f32.gmra.mrb[0].mxu0 %v2660
      %v4222 = vpop.f32.mrb[0].mxu0
      %v4223 = vadd.f32 %v3975, %v4222
      %v4224 = vpop.f32.mrb[0].mxu0
      %v4225 = vadd.f32 %v3979, %v4224
      %4226 = vmatprep.mubr.f32.mxu0 %v3134
      %4227 = vmatmul.mubr.f32.gmra.mrb[0].mxu0 %v2661
      %v4228 = vpop.f32.mrb[0].mxu0
      %v4229 = vadd.f32 %v3975, %v4228
      %v4230 = vpop.f32.mrb[0].mxu0
      %v4231 = vadd.f32 %v3979, %v4230
      %4232 = vmatprep.mubr.f32.mxu0 %v3135
      %4233 = vmatmul.mubr.f32.gmra.mrb[0].mxu0 %v2662
      %v4234 = vpop.f32.mrb[0].mxu0
      %v4235 = vadd.f32 %v3975, %v4234
      %v4236 = vpop.f32.mrb[0].mxu0
      %v4237 = vadd.f32 %v3979, %v4236
      %4238 = vmatprep.mubr.f32.mxu0 %v1967
      %4239 = vmatmul.mubr.f32.gmra.mrb[0].mxu0 %v1959
      %v4240 = vpop.f32.mrb[0].mxu0
      %v4241 = vadd.f32 %v3975, %v4240
      %v4242 = vpop.f32.mrb[0].mxu0
      %v4243 = vadd.f32 %v3979, %v4242
      %4244 = vmatprep.mubr.f32.mxu0 %v1968
      %4245 = vmatmul.mubr.f32.gmra.mrb[0].mxu0 %v1960
      %v4246 = vpop.f32.mrb[0].mxu0
      %v4247 = vadd.f32 %v3975, %v4246
      %v4248 = vpop.f32.mrb[0].mxu0
      %v4249 = vadd.f32 %v3979, %v4248
      %4250 = vmatprep.mubr.f32.mxu0 %v1969
      %4251 = vmatmul.mubr.f32.gmra.mrb[0].mxu0 %v1961
      %v4252 = vpop.f32.mrb[0].mxu0
      %v4253 = vadd.f32 %v3975, %v4252
      %v4254 = vpop.f32.mrb[0].mxu0
      %v4255 = vadd.f32 %v3979, %v4254
      %4256 = vmatprep.mubr.f32.mxu0 %v1970
      %4257 = vmatmul.mubr.f32.gmra.mrb[0].mxu0 %v1962
      %v4258 = vpop.f32.mrb[0].mxu0
      %v4259 = vadd.f32 %v3975, %v4258
      %v4260 = vpop.f32.mrb[0].mxu0
      %v4261 = vadd.f32 %v3979, %v4260
      %4262 = vmatprep.mubr.f32.mxu0 %v1971
      %4263 = vmatmul.mubr.f32.gmra.mrb[0].mxu0 %v1963
      %v4264 = vpop.f32.mrb[0].mxu0
      %v4265 = vadd.f32 %v3975, %v4264
      %v4266 = vpop.f32.mrb[0].mxu0
      %v4267 = vadd.f32 %v3979, %v4266
      %4268 = vmatprep.mubr.f32.mxu0 %v1972
      %4269 = vmatmul.mubr.f32.gmra.mrb[0].mxu0 %v1964
      %v4270 = vpop.f32.mrb[0].mxu0
      %v4271 = vadd.f32 %v3975, %v4270
      %v4272 = vpop.f32.mrb[0].mxu0
      %v4273 = vadd.f32 %v3979, %v4272
      %4274 = vmatprep.mubr.f32.mxu0 %v1973
      %4275 = vmatmul.mubr.f32.gmra.mrb[0].mxu0 %v1965
      %v4276 = vpop.f32.mrb[0].mxu0
      %v4277 = vadd.f32 %v3975, %v4276
      %v4278 = vpop.f32.mrb[0].mxu0
      %v4279 = vadd.f32 %v3979, %v4278
      %4280 = vmatprep.mubr.f32.mxu0 %v1974
      %4281 = vmatmul.mubr.f32.gmra.mrb[0].mxu0 %v1966
      %v4282 = vpop.f32.mrb[0].mxu0
      %v4283 = vadd.f32 %v3975, %v4282
      %v4284 = vpop.f32.mrb[0].mxu0
      %v4285 = vadd.f32 %v3979, %v4284
      %4286 = vmatprep.mubr.f32.mxu0 %v2671
      %4287 = vmatmul.mubr.f32.gmra.mrb[0].mxu0 %v2663
      %v4288 = vpop.f32.mrb[0].mxu0
      %v4289 = vadd.f32 %v3975, %v4288
      %v4290 = vpop.f32.mrb[0].mxu0
      %v4291 = vadd.f32 %v3979, %v4290
      %4292 = vmatprep.mubr.f32.mxu0 %v2672
      %4293 = vmatmul.mubr.f32.gmra.mrb[0].mxu0 %v2664
      %v4294 = vpop.f32.mrb[0].mxu0
      %v4295 = vadd.f32 %v3975, %v4294
      %v4296 = vpop.f32.mrb[0].mxu0
      %v4297 = vadd.f32 %v3979, %v4296
      %4298 = vmatprep.mubr.f32.mxu0 %v2673
      %4299 = vmatmul.mubr.f32.gmra.mrb[0].mxu0 %v2665
      %v4300 = vpop.f32.mrb[0].mxu0
      %v4301 = vadd.f32 %v3975, %v4300
      %v4302 = vpop.f32.mrb[0].mxu0
      %v4303 = vadd.f32 %v3979, %v4302
      %4304 = vmatprep.mubr.f32.mxu0 %v2674
      %4305 = vmatmul.mubr.f32.gmra.mrb[0].mxu0 %v2666
      %v4306 = vpop.f32.mrb[0].mxu0
      %v4307 = vadd.f32 %v3975, %v4306
      %v4308 = vpop.f32.mrb[0].mxu0
      %v4309 = vadd.f32 %v3979, %v4308
      %4310 = vmatprep.mubr.f32.mxu0 %v2675
      %4311 = vmatmul.mubr.f32.gmra.mrb[0].mxu0 %v2667
      %v4312 = vpop.f32.mrb[0].mxu0
      %v4313 = vadd.f32 %v3975, %v4312
      %v4314 = vpop.f32.mrb[0].mxu0
      %v4315 = vadd.f32 %v3979, %v4314
      %4316 = vmatprep.mubr.f32.mxu0 %v2676
      %4317 = vmatmul.mubr.f32.gmra.mrb[0].mxu0 %v2668
      %v4318 = vpop.f32.mrb[0].mxu0
      %v4319 = vadd.f32 %v3975, %v4318
      %v4320 = vpop.f32.mrb[0].mxu0
      %v4321 = vadd.f32 %v3979, %v4320
      %4322 = vmatprep.mubr.f32.mxu0 %v2677
      %4323 = vmatmul.mubr.f32.gmra.mrb[0].mxu0 %v2669
      %v4324 = vpop.f32.mrb[0].mxu0
      %v4325 = vadd.f32 %v3975, %v4324
      %v4326 = vpop.f32.mrb[0].mxu0
      %v4327 = vadd.f32 %v3979, %v4326
      %4328 = vmatprep.mubr.f32.mxu0 %v2678
      %4329 = vmatmul.mubr.f32.gmra.mrb[0].mxu0 %v2670
      %v4330 = vpop.f32.mrb[0].mxu0
      %v4331 = vadd.f32 %v3975, %v4330
      %v4332 = vpop.f32.mrb[0].mxu0
      %v4333 = vadd.f32 %v3979, %v4332
      %4334 = vmatprep.mubr.f32.mxu0 %v2784
      %4335 = vmatmul.mubr.f32.gmra.mrb[0].mxu0 %v1967
      %v4336 = vpop.f32.mrb[0].mxu0
      %v4337 = vadd.f32 %v3975, %v4336
      %v4338 = vpop.f32.mrb[0].mxu0
      %v4339 = vadd.f32 %v3979, %v4338
      %4340 = vmatprep.mubr.f32.mxu0 %v2785
      %4341 = vmatmul.mubr.f32.gmra.mrb[0].mxu0 %v1968
      %v4342 = vpop.f32.mrb[0].mxu0
      %v4343 = vadd.f32 %v3975, %v4342
      %v4344 = vpop.f32.mrb[0].mxu0
      %v4345 = vadd.f32 %v3979, %v4344
      %4346 = vmatprep.mubr.f32.mxu0 %v2786
      %4347 = vmatmul.mubr.f32.gmra.mrb[0].mxu0 %v1969
      %v4348 = vpop.f32.mrb[0].mxu0
      %v4349 = vadd.f32 %v3975, %v4348
      %v4350 = vpop.f32.mrb[0].mxu0
      %v4351 = vadd.f32 %v3979, %v4350
      %4352 = vmatprep.mubr.f32.mxu0 %v2787
      %4353 = vmatmul.mubr.f32.gmra.mrb[0].mxu0 %v1970
      %v4354 = vpop.f32.mrb[0].mxu0
      %v4355 = vadd.f32 %v3975, %v4354
      %v4356 = vpop.f32.mrb[0].mxu0
      %v4357 = vadd.f32 %v3979, %v4356
      %4358 = vmatprep.mubr.f32.mxu0 %v2788
      %4359 = vmatmul.mubr.f32.gmra.mrb[0].mxu0 %v1971
      %v4360 = vpop.f32.mrb[0].mxu0
      %v4361 = vadd.f32 %v3975, %v4360
      %v4362 = vpop.f32.mrb[0].mxu0
      %v4363 = vadd.f32 %v3979, %v4362
      %4364 = vmatprep.mubr.f32.mxu0 %v2789
      %4365 = vmatmul.mubr.f32.gmra.mrb[0].mxu0 %v1972
      %v4366 = vpop.f32.mrb[0].mxu0
      %v4367 = vadd.f32 %v3975, %v4366
      %v4368 = vpop.f32.mrb[0].mxu0
      %v4369 = vadd.f32 %v3979, %v4368
      %4370 = vmatprep.mubr.f32.mxu0 %v2790
      %4371 = vmatmul.mubr.f32.gmra.mrb[0].mxu0 %v1973
      %v4372 = vpop.f32.mrb[0].mxu0
      %v4373 = vadd.f32 %v3975, %v4372
      %v4374 = vpop.f32.mrb[0].mxu0
      %v4375 = vadd.f32 %v3979, %v4374
      %4376 = vmatprep.mubr.f32.mxu0 %v2791
      %4377 = vmatmul.mubr.f32.gmra.mrb[0].mxu0 %v1974
      %v4378 = vpop.f32.mrb[0].mxu0
      %v4379 = vadd.f32 %v3975, %v4378
      %v4380 = vpop.f32.mrb[0].mxu0
      %v4381 = vadd.f32 %v3979, %v4380
      %4382 = vmatprep.mubr.f32.mxu0 %v3136
      %4383 = vmatmul.mubr.f32.gmra.mrb[0].mxu0 %v2671
      %v4384 = vpop.f32.mrb[0].mxu0
      %v4385 = vadd.f32 %v3975, %v4384
      %v4386 = vpop.f32.mrb[0].mxu0
      %v4387 = vadd.f32 %v3979, %v4386
      %4388 = vmatprep.mubr.f32.mxu0 %v3137
      %4389 = vmatmul.mubr.f32.gmra.mrb[0].mxu0 %v2672
      %v4390 = vpop.f32.mrb[0].mxu0
      %v4391 = vadd.f32 %v3975, %v4390
      %v4392 = vpop.f32.mrb[0].mxu0
      %v4393 = vadd.f32 %v3979, %v4392
      %4394 = vmatprep.mubr.f32.mxu0 %v3138
      %4395 = vmatmul.mubr.f32.gmra.mrb[0].mxu0 %v2673
      %v4396 = vpop.f32.mrb[0].mxu0
      %v4397 = vadd.f32 %v3975, %v4396
      %v4398 = vpop.f32.mrb[0].mxu0
      %v4399 = vadd.f32 %v3979, %v4398
      %4400 = vmatprep.mubr.f32.mxu0 %v3139
      %4401 = vmatmul.mubr.f32.gmra.mrb[0].mxu0 %v2674
      %v4402 = vpop.f32.mrb[0].mxu0
      %v4403 = vadd.f32 %v3975, %v4402
      %v4404 = vpop.f32.mrb[0].mxu0
      %v4405 = vadd.f32 %v3979, %v4404
      %4406 = vmatprep.mubr.f32.mxu0 %v3140
      %4407 = vmatmul.mubr.f32.gmra.mrb[0].mxu0 %v2675
      %v4408 = vpop.f32.mrb[0].mxu0
      %v4409 = vadd.f32 %v3975, %v4408
      %v4410 = vpop.f32.mrb[0].mxu0
      %v4411 = vadd.f32 %v3979, %v4410
      %4412 = vmatprep.mubr.f32.mxu0 %v3141
      %4413 = vmatmul.mubr.f32.gmra.mrb[0].mxu0 %v2676
      %v4414 = vpop.f32.mrb[0].mxu0
      %v4415 = vadd.f32 %v3975, %v4414
      %v4416 = vpop.f32.mrb[0].mxu0
      %v4417 = vadd.f32 %v3979, %v4416
      %4418 = vmatprep.mubr.f32.mxu0 %v3142
      %4419 = vmatmul.mubr.f32.gmra.mrb[0].mxu0 %v2677
      %v4420 = vpop.f32.mrb[0].mxu0
      %v4421 = vadd.f32 %v3975, %v4420
      %v4422 = vpop.f32.mrb[0].mxu0
      %v4423 = vadd.f32 %v3979, %v4422
      %4424 = vmatprep.mubr.f32.mxu0 %v3143
      %4425 = vmatmul.mubr.f32.gmra.mrb[0].mxu0 %v2678
      %v4426 = vpop.f32.mrb[0].mxu0
      %v4427 = vadd.f32 %v3975, %v4426
      %v4428 = vpop.f32.mrb[0].mxu0
      %v4429 = vadd.f32 %v3979, %v4428
      %4430 = vdwg.mxu0
      %4431 = vmatprep.subr.mxu0 %v3907
      %4432 = vmatpush1.msra.mxu0 %v3906
      %4433 = vmatprep.subr.mxu0 %v3909
      %4434 = vmatpush1.msra.mxu0 %v3908
      %4435 = vmatprep.subr.mxu0 %v3911
      %4436 = vmatpush1.msra.mxu0 %v3910
      %4437 = vmatprep.subr.mxu0 %v3913
      %4438 = vmatpush1.msra.mxu0 %v3912
      %4439 = vmatprep.subr.mxu0 %v3915
      %4440 = vmatpush1.msra.mxu0 %v3914
      %4441 = vmatprep.subr.mxu0 %v3917
      %4442 = vmatpush1.msra.mxu0 %v3916
      %4443 = vmatprep.subr.mxu0 %v3919
      %4444 = vmatpush1.msra.mxu0 %v3918
      %4445 = vmatprep.subr.mxu0 %v3921
      %4446 = vmatpush1.msra.mxu0 %v3920
      %4447 = vmatprep.subr.mxu0 %v3923
      %4448 = vmatpush1.msra.mxu0 %v3922
      %4449 = vmatprep.subr.mxu0 %v3925
      %4450 = vmatpush1.msra.mxu0 %v3924
      %4451 = vmatprep.subr.mxu0 %v3927
      %4452 = vmatpush1.msra.mxu0 %v3926
      %4453 = vmatprep.subr.mxu0 %v3929
      %4454 = vmatpush1.msra.mxu0 %v3928
      %4455 = vmatprep.subr.mxu0 %v3931
      %4456 = vmatpush1.msra.mxu0 %v3930
      %4457 = vmatprep.subr.mxu0 %v3933
      %4458 = vmatpush1.msra.mxu0 %v3932
      %4459 = vmatprep.subr.mxu0 %v3935
      %4460 = vmatpush1.msra.mxu0 %v3934
      %4461 = vmatprep.subr.mxu0 %v3937
      %4462 = vmatpush1.msra.mxu0 %v3936
      %4463 = vmatprep.subr.mxu0 %v3939
      %4464 = vmatpush1.msra.mxu0 %v3938
      %4465 = vmatprep.subr.mxu0 %v3941
      %4466 = vmatpush1.msra.mxu0 %v3940
      %4467 = vmatprep.subr.mxu0 %v3943
      %4468 = vmatpush1.msra.mxu0 %v3942
      %4469 = vmatprep.subr.mxu0 %v3945
      %4470 = vmatpush1.msra.mxu0 %v3944
      %4471 = vmatprep.subr.mxu0 %v3947
      %4472 = vmatpush1.msra.mxu0 %v3946
      %4473 = vmatprep.subr.mxu0 %v3949
      %4474 = vmatpush1.msra.mxu0 %v3948
      %4475 = vmatprep.subr.mxu0 %v3951
      %4476 = vmatpush1.msra.mxu0 %v3950
      %4477 = vmatprep.subr.mxu0 %v3953
      %4478 = vmatpush1.msra.mxu0 %v3952
      %4479 = vmatprep.subr.mxu0 %v3955
      %4480 = vmatpush1.msra.mxu0 %v3954
      %4481 = vmatprep.subr.mxu0 %v3957
      %4482 = vmatpush1.msra.mxu0 %v3956
      %4483 = vmatprep.subr.mxu0 %v3959
      %4484 = vmatpush1.msra.mxu0 %v3958
      %4485 = vmatprep.subr.mxu0 %v3961
      %4486 = vmatpush1.msra.mxu0 %v3960
      %4487 = vmatprep.subr.mxu0 %v3963
      %4488 = vmatpush1.msra.mxu0 %v3962
      %4489 = vmatprep.subr.mxu0 %v3965
      %4490 = vmatpush1.msra.mxu0 %v3964
      %4491 = vmatprep.subr.mxu0 %v3967
      %4492 = vmatpush1.msra.mxu0 %v3966
      %4493 = vmatprep.subr.mxu0 %v3969
      %4494 = vmatpush1.msra.mxu0 %v3968
      %4495 = vmatprep.mubr.f32.mxu0 %v1967
      %4496 = vmatmul.mubr.f32.gmra.mrb[0].mxu0 %v1959
      %v4497 = vpop.f32.mrb[0].mxu0
      %v4498 = vadd.f32 %v4049, %v4497
      %v4499 = vpop.f32.mrb[0].mxu0
      %v4500 = vadd.f32 %v4051, %v4499
      %4501 = vmatprep.mubr.f32.mxu0 %v1968
      %4502 = vmatmul.mubr.f32.gmra.mrb[0].mxu0 %v1960
      %v4503 = vpop.f32.mrb[0].mxu0
      %v4504 = vadd.f32 %v4055, %v4503
      %v4505 = vpop.f32.mrb[0].mxu0
      %v4506 = vadd.f32 %v4057, %v4505
      %4507 = vmatprep.mubr.f32.mxu0 %v1969
      %4508 = vmatmul.mubr.f32.gmra.mrb[0].mxu0 %v1961
      %v4509 = vpop.f32.mrb[0].mxu0
      %v4510 = vadd.f32 %v4061, %v4509
      %v4511 = vpop.f32.mrb[0].mxu0
      %v4512 = vadd.f32 %v4063, %v4511
      %4513 = vmatprep.mubr.f32.mxu0 %v1970
      %4514 = vmatmul.mubr.f32.gmra.mrb[0].mxu0 %v1962
      %v4515 = vpop.f32.mrb[0].mxu0
      %v4516 = vadd.f32 %v4067, %v4515
      %v4517 = vpop.f32.mrb[0].mxu0
      %v4518 = vadd.f32 %v4069, %v4517
      %4519 = vmatprep.mubr.f32.mxu0 %v1971
      %4520 = vmatmul.mubr.f32.gmra.mrb[0].mxu0 %v1963
      %v4521 = vpop.f32.mrb[0].mxu0
      %v4522 = vadd.f32 %v4073, %v4521
      %v4523 = vpop.f32.mrb[0].mxu0
      %v4524 = vadd.f32 %v4075, %v4523
      %4525 = vmatprep.mubr.f32.mxu0 %v1972
      %4526 = vmatmul.mubr.f32.gmra.mrb[0].mxu0 %v1964
      %v4527 = vpop.f32.mrb[0].mxu0
      %v4528 = vadd.f32 %v4079, %v4527
      %v4529 = vpop.f32.mrb[0].mxu0
      %v4530 = vadd.f32 %v4081, %v4529
      %4531 = vmatprep.mubr.f32.mxu0 %v1973
      %4532 = vmatmul.mubr.f32.gmra.mrb[0].mxu0 %v1965
      %v4533 = vpop.f32.mrb[0].mxu0
      %v4534 = vadd.f32 %v4085, %v4533
      %v4535 = vpop.f32.mrb[0].mxu0
      %v4536 = vadd.f32 %v4087, %v4535
      %4537 = vmatprep.mubr.f32.mxu0 %v1974
      %4538 = vmatmul.mubr.f32.gmra.mrb[0].mxu0 %v1966
      %v4539 = vpop.f32.mrb[0].mxu0
      %v4540 = vadd.f32 %v4091, %v4539
      %v4541 = vpop.f32.mrb[0].mxu0
      %v4542 = vadd.f32 %v4093, %v4541
      %4543 = vmatprep.mubr.f32.mxu0 %v2671
      %4544 = vmatmul.mubr.f32.gmra.mrb[0].mxu0 %v2663
      %v4545 = vpop.f32.mrb[0].mxu0
      %v4546 = vadd.f32 %v4097, %v4545
      %v4547 = vpop.f32.mrb[0].mxu0
      %v4548 = vadd.f32 %v4099, %v4547
      %4549 = vmatprep.mubr.f32.mxu0 %v2672
      %4550 = vmatmul.mubr.f32.gmra.mrb[0].mxu0 %v2664
      %v4551 = vpop.f32.mrb[0].mxu0
      %v4552 = vadd.f32 %v4103, %v4551
      %v4553 = vpop.f32.mrb[0].mxu0
      %v4554 = vadd.f32 %v4105, %v4553
      %4555 = vmatprep.mubr.f32.mxu0 %v2673
      %4556 = vmatmul.mubr.f32.gmra.mrb[0].mxu0 %v2665
      %v4557 = vpop.f32.mrb[0].mxu0
      %v4558 = vadd.f32 %v4109, %v4557
      %v4559 = vpop.f32.mrb[0].mxu0
      %v4560 = vadd.f32 %v4111, %v4559
      %4561 = vmatprep.mubr.f32.mxu0 %v2674
      %4562 = vmatmul.mubr.f32.gmra.mrb[0].mxu0 %v2666
      %v4563 = vpop.f32.mrb[0].mxu0
      %v4564 = vadd.f32 %v4115, %v4563
      %v4565 = vpop.f32.mrb[0].mxu0
      %v4566 = vadd.f32 %v4117, %v4565
      %4567 = vmatprep.mubr.f32.mxu0 %v2675
      %4568 = vmatmul.mubr.f32.gmra.mrb[0].mxu0 %v2667
      %v4569 = vpop.f32.mrb[0].mxu0
      %v4570 = vadd.f32 %v4121, %v4569
      %v4571 = vpop.f32.mrb[0].mxu0
      %v4572 = vadd.f32 %v4123, %v4571
      %4573 = vmatprep.mubr.f32.mxu0 %v2676
      %4574 = vmatmul.mubr.f32.gmra.mrb[0].mxu0 %v2668
      %v4575 = vpop.f32.mrb[0].mxu0
      %v4576 = vadd.f32 %v4127, %v4575
      %v4577 = vpop.f32.mrb[0].mxu0
      %v4578 = vadd.f32 %v4129, %v4577
      %4579 = vmatprep.mubr.f32.mxu0 %v2677
      %4580 = vmatmul.mubr.f32.gmra.mrb[0].mxu0 %v2669
      %v4581 = vpop.f32.mrb[0].mxu0
      %v4582 = vadd.f32 %v4133, %v4581
      %v4583 = vpop.f32.mrb[0].mxu0
      %v4584 = vadd.f32 %v4135, %v4583
      %4585 = vmatprep.mubr.f32.mxu0 %v2678
      %4586 = vmatmul.mubr.f32.gmra.mrb[0].mxu0 %v2670
      %v4587 = vpop.f32.mrb[0].mxu0
      %v4588 = vadd.f32 %v4139, %v4587
      %v4589 = vpop.f32.mrb[0].mxu0
      %v4590 = vadd.f32 %v4141, %v4589
      %4591 = vmatprep.mubr.f32.mxu0 %v2784
      %4592 = vmatmul.mubr.f32.gmra.mrb[0].mxu0 %v1967
      %v4593 = vpop.f32.mrb[0].mxu0
      %v4594 = vadd.f32 %v4145, %v4593
      %v4595 = vpop.f32.mrb[0].mxu0
      %v4596 = vadd.f32 %v4147, %v4595
      %4597 = vmatprep.mubr.f32.mxu0 %v2785
      %4598 = vmatmul.mubr.f32.gmra.mrb[0].mxu0 %v1968
      %v4599 = vpop.f32.mrb[0].mxu0
      %v4600 = vadd.f32 %v4151, %v4599
      %v4601 = vpop.f32.mrb[0].mxu0
      %v4602 = vadd.f32 %v4153, %v4601
      %4603 = vmatprep.mubr.f32.mxu0 %v2786
      %4604 = vmatmul.mubr.f32.gmra.mrb[0].mxu0 %v1969
      %v4605 = vpop.f32.mrb[0].mxu0
      %v4606 = vadd.f32 %v4157, %v4605
      %v4607 = vpop.f32.mrb[0].mxu0
      %v4608 = vadd.f32 %v4159, %v4607
      %4609 = vmatprep.mubr.f32.mxu0 %v2787
      %4610 = vmatmul.mubr.f32.gmra.mrb[0].mxu0 %v1970
      %v4611 = vpop.f32.mrb[0].mxu0
      %v4612 = vadd.f32 %v4163, %v4611
      %v4613 = vpop.f32.mrb[0].mxu0
      %v4614 = vadd.f32 %v4165, %v4613
      %4615 = vmatprep.mubr.f32.mxu0 %v2788
      %4616 = vmatmul.mubr.f32.gmra.mrb[0].mxu0 %v1971
      %v4617 = vpop.f32.mrb[0].mxu0
      %v4618 = vadd.f32 %v4169, %v4617
      %v4619 = vpop.f32.mrb[0].mxu0
      %v4620 = vadd.f32 %v4171, %v4619
      %4621 = vmatprep.mubr.f32.mxu0 %v2789
      %4622 = vmatmul.mubr.f32.gmra.mrb[0].mxu0 %v1972
      %v4623 = vpop.f32.mrb[0].mxu0
      %v4624 = vadd.f32 %v4175, %v4623
      %v4625 = vpop.f32.mrb[0].mxu0
      %v4626 = vadd.f32 %v4177, %v4625
      %4627 = vmatprep.mubr.f32.mxu0 %v2790
      %4628 = vmatmul.mubr.f32.gmra.mrb[0].mxu0 %v1973
      %v4629 = vpop.f32.mrb[0].mxu0
      %v4630 = vadd.f32 %v4181, %v4629
      %v4631 = vpop.f32.mrb[0].mxu0
      %v4632 = vadd.f32 %v4183, %v4631
      %4633 = vmatprep.mubr.f32.mxu0 %v2791
      %4634 = vmatmul.mubr.f32.gmra.mrb[0].mxu0 %v1974
      %v4635 = vpop.f32.mrb[0].mxu0
      %v4636 = vadd.f32 %v4187, %v4635
      %v4637 = vpop.f32.mrb[0].mxu0
      %v4638 = vadd.f32 %v4189, %v4637
      %4639 = vmatprep.mubr.f32.mxu0 %v3136
      %4640 = vmatmul.mubr.f32.gmra.mrb[0].mxu0 %v2671
      %v4641 = vpop.f32.mrb[0].mxu0
      %v4642 = vadd.f32 %v4193, %v4641
      %v4643 = vpop.f32.mrb[0].mxu0
      %v4644 = vadd.f32 %v4195, %v4643
      %4645 = vmatprep.mubr.f32.mxu0 %v3137
      %4646 = vmatmul.mubr.f32.gmra.mrb[0].mxu0 %v2672
      %v4647 = vpop.f32.mrb[0].mxu0
      %v4648 = vadd.f32 %v4199, %v4647
      %v4649 = vpop.f32.mrb[0].mxu0
      %v4650 = vadd.f32 %v4201, %v4649
      %4651 = vmatprep.mubr.f32.mxu0 %v3138
      %4652 = vmatmul.mubr.f32.gmra.mrb[0].mxu0 %v2673
      %v4653 = vpop.f32.mrb[0].mxu0
      %v4654 = vadd.f32 %v4205, %v4653
      %v4655 = vpop.f32.mrb[0].mxu0
      %v4656 = vadd.f32 %v4207, %v4655
      %4657 = vmatprep.mubr.f32.mxu0 %v3139
      %4658 = vmatmul.mubr.f32.gmra.mrb[0].mxu0 %v2674
      %v4659 = vpop.f32.mrb[0].mxu0
      %v4660 = vadd.f32 %v4211, %v4659
      %v4661 = vpop.f32.mrb[0].mxu0
      %v4662 = vadd.f32 %v4213, %v4661
      %4663 = vmatprep.mubr.f32.mxu0 %v3140
      %4664 = vmatmul.mubr.f32.gmra.mrb[0].mxu0 %v2675
      %v4665 = vpop.f32.mrb[0].mxu0
      %v4666 = vadd.f32 %v4217, %v4665
      %v4667 = vpop.f32.mrb[0].mxu0
      %v4668 = vadd.f32 %v4219, %v4667
      %4669 = vmatprep.mubr.f32.mxu0 %v3141
      %4670 = vmatmul.mubr.f32.gmra.mrb[0].mxu0 %v2676
      %v4671 = vpop.f32.mrb[0].mxu0
      %v4672 = vadd.f32 %v4223, %v4671
      %v4673 = vpop.f32.mrb[0].mxu0
      %v4674 = vadd.f32 %v4225, %v4673
      %4675 = vmatprep.mubr.f32.mxu0 %v3142
      %4676 = vmatmul.mubr.f32.gmra.mrb[0].mxu0 %v2677
      %v4677 = vpop.f32.mrb[0].mxu0
      %v4678 = vadd.f32 %v4229, %v4677
      %v4679 = vpop.f32.mrb[0].mxu0
      %v4680 = vadd.f32 %v4231, %v4679
      %4681 = vmatprep.mubr.f32.mxu0 %v3143
      %4682 = vmatmul.mubr.f32.gmra.mrb[0].mxu0 %v2678
      %v4683 = vpop.f32.mrb[0].mxu0
      %v4684 = vadd.f32 %v4235, %v4683
      %v4685 = vpop.f32.mrb[0].mxu0
      %v4686 = vadd.f32 %v4237, %v4685
      %4687 = vmatprep.mubr.f32.mxu0 %v3249
      %4688 = vmatmul.mubr.f32.gmra.mrb[0].mxu0 %v3241
      %v4689 = vpop.f32.mrb[0].mxu0
      %v4690 = vadd.f32 %v4241, %v4689
      %v4691 = vpop.f32.mrb[0].mxu0
      %v4692 = vadd.f32 %v4243, %v4691
      %4693 = vmatprep.mubr.f32.mxu0 %v3250
      %4694 = vmatmul.mubr.f32.gmra.mrb[0].mxu0 %v3242
      %v4695 = vpop.f32.mrb[0].mxu0
      %v4696 = vadd.f32 %v4247, %v4695
      %v4697 = vpop.f32.mrb[0].mxu0
      %v4698 = vadd.f32 %v4249, %v4697
      %4699 = vmatprep.mubr.f32.mxu0 %v3251
      %4700 = vmatmul.mubr.f32.gmra.mrb[0].mxu0 %v3243
      %v4701 = vpop.f32.mrb[0].mxu0
      %v4702 = vadd.f32 %v4253, %v4701
      %v4703 = vpop.f32.mrb[0].mxu0
      %v4704 = vadd.f32 %v4255, %v4703
      %4705 = vmatprep.mubr.f32.mxu0 %v3252
      %4706 = vmatmul.mubr.f32.gmra.mrb[0].mxu0 %v3244
      %v4707 = vpop.f32.mrb[0].mxu0
      %v4708 = vadd.f32 %v4259, %v4707
      %v4709 = vpop.f32.mrb[0].mxu0
      %v4710 = vadd.f32 %v4261, %v4709
      %4711 = vmatprep.mubr.f32.mxu0 %v3253
      %4712 = vmatmul.mubr.f32.gmra.mrb[0].mxu0 %v3245
      %v4713 = vpop.f32.mrb[0].mxu0
      %v4714 = vadd.f32 %v4265, %v4713
      %v4715 = vpop.f32.mrb[0].mxu0
      %v4716 = vadd.f32 %v4267, %v4715
      %4717 = vmatprep.mubr.f32.mxu0 %v3254
      %4718 = vmatmul.mubr.f32.gmra.mrb[0].mxu0 %v3246
      %v4719 = vpop.f32.mrb[0].mxu0
      %v4720 = vadd.f32 %v4271, %v4719
      %v4721 = vpop.f32.mrb[0].mxu0
      %v4722 = vadd.f32 %v4273, %v4721
      %4723 = vmatprep.mubr.f32.mxu0 %v3255
      %4724 = vmatmul.mubr.f32.gmra.mrb[0].mxu0 %v3247
      %v4725 = vpop.f32.mrb[0].mxu0
      %v4726 = vadd.f32 %v4277, %v4725
      %v4727 = vpop.f32.mrb[0].mxu0
      %v4728 = vadd.f32 %v4279, %v4727
      %4729 = vmatprep.mubr.f32.mxu0 %v3256
      %4730 = vmatmul.mubr.f32.gmra.mrb[0].mxu0 %v3248
      %v4731 = vpop.f32.mrb[0].mxu0
      %v4732 = vadd.f32 %v4283, %v4731
      %v4733 = vpop.f32.mrb[0].mxu0
      %v4734 = vadd.f32 %v4285, %v4733
      %4735 = vmatprep.mubr.f32.mxu0 %v3601
      %4736 = vmatmul.mubr.f32.gmra.mrb[0].mxu0 %v3593
      %v4737 = vpop.f32.mrb[0].mxu0
      %v4738 = vadd.f32 %v4289, %v4737
      %v4739 = vpop.f32.mrb[0].mxu0
      %v4740 = vadd.f32 %v4291, %v4739
      %4741 = vmatprep.mubr.f32.mxu0 %v3602
      %4742 = vmatmul.mubr.f32.gmra.mrb[0].mxu0 %v3594
      %v4743 = vpop.f32.mrb[0].mxu0
      %v4744 = vadd.f32 %v4295, %v4743
      %v4745 = vpop.f32.mrb[0].mxu0
      %v4746 = vadd.f32 %v4297, %v4745
      %4747 = vmatprep.mubr.f32.mxu0 %v3603
      %4748 = vmatmul.mubr.f32.gmra.mrb[0].mxu0 %v3595
      %v4749 = vpop.f32.mrb[0].mxu0
      %v4750 = vadd.f32 %v4301, %v4749
      %v4751 = vpop.f32.mrb[0].mxu0
      %v4752 = vadd.f32 %v4303, %v4751
      %4753 = vmatprep.mubr.f32.mxu0 %v3604
      %4754 = vmatmul.mubr.f32.gmra.mrb[0].mxu0 %v3596
      %v4755 = vpop.f32.mrb[0].mxu0
      %v4756 = vadd.f32 %v4307, %v4755
      %v4757 = vpop.f32.mrb[0].mxu0
      %v4758 = vadd.f32 %v4309, %v4757
      %4759 = vmatprep.mubr.f32.mxu0 %v3605
      %4760 = vmatmul.mubr.f32.gmra.mrb[0].mxu0 %v3597
      %v4761 = vpop.f32.mrb[0].mxu0
      %v4762 = vadd.f32 %v4313, %v4761
      %v4763 = vpop.f32.mrb[0].mxu0
      %v4764 = vadd.f32 %v4315, %v4763
      %4765 = vmatprep.mubr.f32.mxu0 %v3606
      %4766 = vmatmul.mubr.f32.gmra.mrb[0].mxu0 %v3598
      %v4767 = vpop.f32.mrb[0].mxu0
      %v4768 = vadd.f32 %v4319, %v4767
      %v4769 = vpop.f32.mrb[0].mxu0
      %v4770 = vadd.f32 %v4321, %v4769
      %4771 = vmatprep.mubr.f32.mxu0 %v3607
      %4772 = vmatmul.mubr.f32.gmra.mrb[0].mxu0 %v3599
      %v4773 = vpop.f32.mrb[0].mxu0
      %v4774 = vadd.f32 %v4325, %v4773
      %v4775 = vpop.f32.mrb[0].mxu0
      %v4776 = vadd.f32 %v4327, %v4775
      %4777 = vmatprep.mubr.f32.mxu0 %v3608
      %4778 = vmatmul.mubr.f32.gmra.mrb[0].mxu0 %v3600
      %v4779 = vpop.f32.mrb[0].mxu0
      %v4780 = vadd.f32 %v4331, %v4779
      %v4781 = vpop.f32.mrb[0].mxu0
      %v4782 = vadd.f32 %v4333, %v4781
      %4783 = vmatprep.mubr.f32.mxu0 %v3658
      %4784 = vmatmul.mubr.f32.gmra.mrb[0].mxu0 %v3249
      %v4785 = vpop.f32.mrb[0].mxu0
      %v4786 = vadd.f32 %v4337, %v4785
      %v4787 = vpop.f32.mrb[0].mxu0
      %v4788 = vadd.f32 %v4339, %v4787
      %4789 = vmatprep.mubr.f32.mxu0 %v3659
      %4790 = vmatmul.mubr.f32.gmra.mrb[0].mxu0 %v3250
      %v4791 = vpop.f32.mrb[0].mxu0
      %v4792 = vadd.f32 %v4343, %v4791
      %v4793 = vpop.f32.mrb[0].mxu0
      %v4794 = vadd.f32 %v4345, %v4793
      %4795 = vmatprep.mubr.f32.mxu0 %v3660
      %4796 = vmatmul.mubr.f32.gmra.mrb[0].mxu0 %v3251
      %v4797 = vpop.f32.mrb[0].mxu0
      %v4798 = vadd.f32 %v4349, %v4797
      %v4799 = vpop.f32.mrb[0].mxu0
      %v4800 = vadd.f32 %v4351, %v4799
      %4801 = vmatprep.mubr.f32.mxu0 %v3661
      %4802 = vmatmul.mubr.f32.gmra.mrb[0].mxu0 %v3252
      %v4803 = vpop.f32.mrb[0].mxu0
      %v4804 = vadd.f32 %v4355, %v4803
      %v4805 = vpop.f32.mrb[0].mxu0
      %v4806 = vadd.f32 %v4357, %v4805
      %4807 = vmatprep.mubr.f32.mxu0 %v3662
      %4808 = vmatmul.mubr.f32.gmra.mrb[0].mxu0 %v3253
      %v4809 = vpop.f32.mrb[0].mxu0
      %v4810 = vadd.f32 %v4361, %v4809
      %v4811 = vpop.f32.mrb[0].mxu0
      %v4812 = vadd.f32 %v4363, %v4811
      %4813 = vmatprep.mubr.f32.mxu0 %v3663
      %4814 = vmatmul.mubr.f32.gmra.mrb[0].mxu0 %v3254
      %v4815 = vpop.f32.mrb[0].mxu0
      %v4816 = vadd.f32 %v4367, %v4815
      %v4817 = vpop.f32.mrb[0].mxu0
      %v4818 = vadd.f32 %v4369, %v4817
      %4819 = vmatprep.mubr.f32.mxu0 %v3664
      %4820 = vmatmul.mubr.f32.gmra.mrb[0].mxu0 %v3255
      %v4821 = vpop.f32.mrb[0].mxu0
      %v4822 = vadd.f32 %v4373, %v4821
      %v4823 = vpop.f32.mrb[0].mxu0
      %v4824 = vadd.f32 %v4375, %v4823
      %4825 = vmatprep.mubr.f32.mxu0 %v3665
      %4826 = vmatmul.mubr.f32.gmra.mrb[0].mxu0 %v3256
      %v4827 = vpop.f32.mrb[0].mxu0
      %v4828 = vadd.f32 %v4379, %v4827
      %v4829 = vpop.f32.mrb[0].mxu0
      %v4830 = vadd.f32 %v4381, %v4829
      %4831 = vmatprep.mubr.f32.mxu0 %v3834
      %4832 = vmatmul.mubr.f32.gmra.mrb[0].mxu0 %v3601
      %v4833 = vpop.f32.mrb[0].mxu0
      %v4834 = vadd.f32 %v4385, %v4833
      %v4835 = vpop.f32.mrb[0].mxu0
      %v4836 = vadd.f32 %v4387, %v4835
      %4837 = vmatprep.mubr.f32.mxu0 %v3835
      %4838 = vmatmul.mubr.f32.gmra.mrb[0].mxu0 %v3602
      %v4839 = vpop.f32.mrb[0].mxu0
      %v4840 = vadd.f32 %v4391, %v4839
      %v4841 = vpop.f32.mrb[0].mxu0
      %v4842 = vadd.f32 %v4393, %v4841
      %4843 = vmatprep.mubr.f32.mxu0 %v3836
      %4844 = vmatmul.mubr.f32.gmra.mrb[0].mxu0 %v3603
      %v4845 = vpop.f32.mrb[0].mxu0
      %v4846 = vadd.f32 %v4397, %v4845
      %v4847 = vpop.f32.mrb[0].mxu0
      %v4848 = vadd.f32 %v4399, %v4847
      %4849 = vmatprep.mubr.f32.mxu0 %v3837
      %4850 = vmatmul.mubr.f32.gmra.mrb[0].mxu0 %v3604
      %v4851 = vpop.f32.mrb[0].mxu0
      %v4852 = vadd.f32 %v4403, %v4851
      %v4853 = vpop.f32.mrb[0].mxu0
      %v4854 = vadd.f32 %v4405, %v4853
      %4855 = vmatprep.mubr.f32.mxu0 %v3838
      %4856 = vmatmul.mubr.f32.gmra.mrb[0].mxu0 %v3605
      %v4857 = vpop.f32.mrb[0].mxu0
      %v4858 = vadd.f32 %v4409, %v4857
      %v4859 = vpop.f32.mrb[0].mxu0
      %v4860 = vadd.f32 %v4411, %v4859
      %4861 = vmatprep.mubr.f32.mxu0 %v3839
      %4862 = vmatmul.mubr.f32.gmra.mrb[0].mxu0 %v3606
      %v4863 = vpop.f32.mrb[0].mxu0
      %v4864 = vadd.f32 %v4415, %v4863
      %v4865 = vpop.f32.mrb[0].mxu0
      %v4866 = vadd.f32 %v4417, %v4865
      %4867 = vmatprep.mubr.f32.mxu0 %v3840
      %4868 = vmatmul.mubr.f32.gmra.mrb[0].mxu0 %v3607
      %v4869 = vpop.f32.mrb[0].mxu0
      %v4870 = vadd.f32 %v4421, %v4869
      %v4871 = vpop.f32.mrb[0].mxu0
      %v4872 = vadd.f32 %v4423, %v4871
      %4873 = vmatprep.mubr.f32.mxu0 %v3841
      %4874 = vmatmul.mubr.f32.gmra.mrb[0].mxu0 %v3608
      %v4875 = vpop.f32.mrb[0].mxu0
      %v4876 = vadd.f32 %v4427, %v4875
      %v4877 = vpop.f32.mrb[0].mxu0
      %v4878 = vadd.f32 %v4429, %v4877
      %4879 = vdwg.mxu0
      %v4880 = vmax.f32 %v4498, 0.0
      %v4881 = vmax.f32 %v4500, 0.0
      %v4882 = vmax.f32 %v4504, 0.0
      %v4883 = vmax.f32 %v4506, 0.0
      %v4884 = vmax.f32 %v4510, 0.0
      %v4885 = vmax.f32 %v4512, 0.0
      %v4886 = vmax.f32 %v4516, 0.0
      %v4887 = vmax.f32 %v4518, 0.0
      %v4888 = vmax.f32 %v4522, 0.0
      %v4889 = vmax.f32 %v4524, 0.0
      %v4890 = vmax.f32 %v4528, 0.0
      %v4891 = vmax.f32 %v4530, 0.0
      %v4892 = vmax.f32 %v4534, 0.0
      %v4893 = vmax.f32 %v4536, 0.0
      %v4894 = vmax.f32 %v4540, 0.0
      %v4895 = vmax.f32 %v4542, 0.0
      %v4896 = vmax.f32 %v4546, 0.0
      %v4897 = vmax.f32 %v4548, 0.0
      %v4898 = vmax.f32 %v4552, 0.0
      %v4899 = vmax.f32 %v4554, 0.0
      %v4900 = vmax.f32 %v4558, 0.0
      %v4901 = vmax.f32 %v4560, 0.0
      %v4902 = vmax.f32 %v4564, 0.0
      %v4903 = vmax.f32 %v4566, 0.0
      %v4904 = vmax.f32 %v4570, 0.0
      %v4905 = vmax.f32 %v4572, 0.0
      %v4906 = vmax.f32 %v4576, 0.0
      %v4907 = vmax.f32 %v4578, 0.0
      %v4908 = vmax.f32 %v4582, 0.0
      %v4909 = vmax.f32 %v4584, 0.0
      %v4910 = vmax.f32 %v4588, 0.0
      %v4911 = vmax.f32 %v4590, 0.0
      %v4912 = vmax.f32 %v4594, 0.0
      %v4913 = vmax.f32 %v4596, 0.0
      %v4914 = vmax.f32 %v4600, 0.0
      %v4915 = vmax.f32 %v4602, 0.0
      %v4916 = vmax.f32 %v4606, 0.0
      %v4917 = vmax.f32 %v4608, 0.0
      %v4918 = vmax.f32 %v4612, 0.0
      %v4919 = vmax.f32 %v4614, 0.0
      %v4920 = vmax.f32 %v4618, 0.0
      %v4921 = vmax.f32 %v4620, 0.0
      %v4922 = vmax.f32 %v4624, 0.0
      %v4923 = vmax.f32 %v4626, 0.0
      %v4924 = vmax.f32 %v4630, 0.0
      %v4925 = vmax.f32 %v4632, 0.0
      %v4926 = vmax.f32 %v4636, 0.0
      %v4927 = vmax.f32 %v4638, 0.0
      %v4928 = vmax.f32 %v4642, 0.0
      %v4929 = vmax.f32 %v4644, 0.0
      %v4930 = vmax.f32 %v4648, 0.0
      %v4931 = vmax.f32 %v4650, 0.0
      %v4932 = vmax.f32 %v4654, 0.0
      %v4933 = vmax.f32 %v4656, 0.0
      %v4934 = vmax.f32 %v4660, 0.0
      %v4935 = vmax.f32 %v4662, 0.0
      %v4936 = vmax.f32 %v4666, 0.0
      %v4937 = vmax.f32 %v4668, 0.0
      %v4938 = vmax.f32 %v4672, 0.0
      %v4939 = vmax.f32 %v4674, 0.0
      %v4940 = vmax.f32 %v4678, 0.0
      %v4941 = vmax.f32 %v4680, 0.0
      %v4942 = vmax.f32 %v4684, 0.0
      %v4943 = vmax.f32 %v4686, 0.0
      %v4944 = vmax.f32 %v4690, 0.0
      %v4945 = vmax.f32 %v4692, 0.0
      %v4946 = vmax.f32 %v4696, 0.0
      %v4947 = vmax.f32 %v4698, 0.0
      %v4948 = vmax.f32 %v4702, 0.0
      %v4949 = vmax.f32 %v4704, 0.0
      %v4950 = vmax.f32 %v4708, 0.0
      %v4951 = vmax.f32 %v4710, 0.0
      %v4952 = vmax.f32 %v4714, 0.0
      %v4953 = vmax.f32 %v4716, 0.0
      %v4954 = vmax.f32 %v4720, 0.0
      %v4955 = vmax.f32 %v4722, 0.0
      %v4956 = vmax.f32 %v4726, 0.0
      %v4957 = vmax.f32 %v4728, 0.0
      %v4958 = vmax.f32 %v4732, 0.0
      %v4959 = vmax.f32 %v4734, 0.0
      %v4960 = vmax.f32 %v4738, 0.0
      %v4961 = vmax.f32 %v4740, 0.0
      %v4962 = vmax.f32 %v4744, 0.0
      %v4963 = vmax.f32 %v4746, 0.0
      %v4964 = vmax.f32 %v4750, 0.0
      %v4965 = vmax.f32 %v4752, 0.0
      %v4966 = vmax.f32 %v4756, 0.0
      %v4967 = vmax.f32 %v4758, 0.0
      %v4968 = vmax.f32 %v4762, 0.0
      %v4969 = vmax.f32 %v4764, 0.0
      %v4970 = vmax.f32 %v4768, 0.0
      %v4971 = vmax.f32 %v4770, 0.0
      %v4972 = vmax.f32 %v4774, 0.0
      %v4973 = vmax.f32 %v4776, 0.0
      %v4974 = vmax.f32 %v4780, 0.0
      %v4975 = vmax.f32 %v4782, 0.0
      %v4976 = vmax.f32 %v4786, 0.0
      %v4977 = vmax.f32 %v4788, 0.0
      %v4978 = vmax.f32 %v4792, 0.0
      %v4979 = vmax.f32 %v4794, 0.0
      %v4980 = vmax.f32 %v4798, 0.0
      %v4981 = vmax.f32 %v4800, 0.0
      %v4982 = vmax.f32 %v4804, 0.0
      %v4983 = vmax.f32 %v4806, 0.0
      %v4984 = vmax.f32 %v4810, 0.0
      %v4985 = vmax.f32 %v4812, 0.0
      %v4986 = vmax.f32 %v4816, 0.0
      %v4987 = vmax.f32 %v4818, 0.0
      %v4988 = vmax.f32 %v4822, 0.0
      %v4989 = vmax.f32 %v4824, 0.0
      %v4990 = vmax.f32 %v4828, 0.0
      %v4991 = vmax.f32 %v4830, 0.0
      %v4992 = vmax.f32 %v4834, 0.0
      %v4993 = vmax.f32 %v4836, 0.0
      %v4994 = vmax.f32 %v4840, 0.0
      %v4995 = vmax.f32 %v4842, 0.0
      %v4996 = vmax.f32 %v4846, 0.0
      %v4997 = vmax.f32 %v4848, 0.0
      %v4998 = vmax.f32 %v4852, 0.0
      %v4999 = vmax.f32 %v4854, 0.0
      %v5000 = vmax.f32 %v4858, 0.0
      %v5001 = vmax.f32 %v4860, 0.0
      %v5002 = vmax.f32 %v4864, 0.0
      %v5003 = vmax.f32 %v4866, 0.0
      %v5004 = vmax.f32 %v4870, 0.0
      %v5005 = vmax.f32 %v4872, 0.0
      %v5006 = vmax.f32 %v4876, 0.0
      %v5007 = vmax.f32 %v4878, 0.0
      %v5008 = vld [vmem:[%s5] sm:$0xff]
      %v5009 = vld [vmem:[%s5 + $0x8] sm:$0xff]
      %v5010 = vld [vmem:[%s5 + $0x10] sm:$0xff]
      %v5011 = vld [vmem:[%s5 + $0x18] sm:$0xff]
      %v5012 = vld [vmem:[%s5 + $0x20] sm:$0xff]
      %v5013 = vld [vmem:[%s5 + $0x28] sm:$0xff]
      %v5014 = vld [vmem:[%s6] sm:$0xff]
      %v5015 = vld [vmem:[%s6 + $0x8] sm:$0xff]
      %v5016 = vld [vmem:[%s6 + $0x10] sm:$0xff]
      %5018 = vset.pattern.permute.xlu0 0
      %5019 = vperm.xlu0 %5018, %v5014
      %v5020 = vpop.permute.xlu0 %5019
      %5023 = vset.pattern.permute.xlu0 0
      %5024 = vperm.xlu0 %5023, %v5015
      %v5025 = vpop.permute.xlu0 %5024
      %5028 = vset.pattern.permute.xlu0 0
      %5029 = vperm.xlu0 %5028, %v5016
      %v5030 = vpop.permute.xlu0 %5029
      %5032 = vmatprep.subr.mxu0 %v4881
      %5033 = vmatpush1.xpose.msra.mxu0 %v4880
      %5034 = vmatprep.subr.mxu0 %v4883
      %5035 = vmatpush1.xpose.msra.mxu0 %v4882
      %5036 = vmatprep.subr.mxu0 %v4885
      %5037 = vmatpush1.xpose.msra.mxu0 %v4884
      %5038 = vmatprep.subr.mxu0 %v4887
      %5039 = vmatpush1.xpose.msra.mxu0 %v4886
      %5040 = vmatprep.subr.mxu0 %v4889
      %5041 = vmatpush1.xpose.msra.mxu0 %v4888
      %5042 = vmatprep.subr.mxu0 %v4891
      %5043 = vmatpush1.xpose.msra.mxu0 %v4890
      %5044 = vmatprep.subr.mxu0 %v4893
      %5045 = vmatpush1.xpose.msra.mxu0 %v4892
      %5046 = vmatprep.subr.mxu0 %v4895
      %5047 = vmatpush1.xpose.msra.mxu0 %v4894
      %5048 = vmatprep.subr.mxu0 %v4897
      %5049 = vmatpush1.xpose.msra.mxu0 %v4896
      %5050 = vmatprep.subr.mxu0 %v4899
      %5051 = vmatpush1.xpose.msra.mxu0 %v4898
      %5052 = vmatprep.subr.mxu0 %v4901
      %5053 = vmatpush1.xpose.msra.mxu0 %v4900
      %5054 = vmatprep.subr.mxu0 %v4903
      %5055 = vmatpush1.xpose.msra.mxu0 %v4902
      %5056 = vmatprep.subr.mxu0 %v4905
      %5057 = vmatpush1.xpose.msra.mxu0 %v4904
      %5058 = vmatprep.subr.mxu0 %v4907
      %5059 = vmatpush1.xpose.msra.mxu0 %v4906
      %5060 = vmatprep.subr.mxu0 %v4909
      %5061 = vmatpush1.xpose.msra.mxu0 %v4908
      %5062 = vmatprep.subr.mxu0 %v4911
      %5063 = vmatpush1.xpose.msra.mxu0 %v4910
      %5064 = vmatprep.subr.mxu0 %v4913
      %5065 = vmatpush1.xpose.msra.mxu0 %v4912
      %5066 = vmatprep.subr.mxu0 %v4915
      %5067 = vmatpush1.xpose.msra.mxu0 %v4914
      %5068 = vmatprep.subr.mxu0 %v4917
      %5069 = vmatpush1.xpose.msra.mxu0 %v4916
      %5070 = vmatprep.subr.mxu0 %v4919
      %5071 = vmatpush1.xpose.msra.mxu0 %v4918
      %5072 = vmatprep.subr.mxu0 %v4921
      %5073 = vmatpush1.xpose.msra.mxu0 %v4920
      %5074 = vmatprep.subr.mxu0 %v4923
      %5075 = vmatpush1.xpose.msra.mxu0 %v4922
      %5076 = vmatprep.subr.mxu0 %v4925
      %5077 = vmatpush1.xpose.msra.mxu0 %v4924
      %5078 = vmatprep.subr.mxu0 %v4927
      %5079 = vmatpush1.xpose.msra.mxu0 %v4926
      %5080 = vmatprep.subr.mxu0 %v4929
      %5081 = vmatpush1.xpose.msra.mxu0 %v4928
      %5082 = vmatprep.subr.mxu0 %v4931
      %5083 = vmatpush1.xpose.msra.mxu0 %v4930
      %5084 = vmatprep.subr.mxu0 %v4933
      %5085 = vmatpush1.xpose.msra.mxu0 %v4932
      %5086 = vmatprep.subr.mxu0 %v4935
      %5087 = vmatpush1.xpose.msra.mxu0 %v4934
      %5088 = vmatprep.subr.mxu0 %v4937
      %5089 = vmatpush1.xpose.msra.mxu0 %v4936
      %5090 = vmatprep.subr.mxu0 %v4939
      %5091 = vmatpush1.xpose.msra.mxu0 %v4938
      %5092 = vmatprep.subr.mxu0 %v4941
      %5093 = vmatpush1.xpose.msra.mxu0 %v4940
      %5094 = vmatprep.subr.mxu0 %v4943
      %5095 = vmatpush1.xpose.msra.mxu0 %v4942
      %5096 = vmatprep.mubr.f32.mxu0 %v5009
      %5097 = vmatmul.mubr.f32.gmra.mrb[0].mxu0 %v5008
      %v5098 = vpop.f32.mrb[0].mxu0
      %v5099 = vadd.f32 %v5020, %v5098
      %v5100 = vpop.f32.mrb[0].mxu0
      %v5101 = vadd.f32 %v5020, %v5100
      %5102 = vmatprep.mubr.f32.mxu0 %v5011
      %5103 = vmatmul.mubr.f32.gmra.mrb[0].mxu0 %v5010
      %v5104 = vpop.f32.mrb[0].mxu0
      %v5105 = vadd.f32 %v5025, %v5104
      %v5106 = vpop.f32.mrb[0].mxu0
      %v5107 = vadd.f32 %v5025, %v5106
      %5108 = vmatprep.mubr.f32.mxu0 %v5013
      %5109 = vmatmul.mubr.f32.gmra.mrb[0].mxu0 %v5012
      %v5110 = vpop.f32.mrb[0].mxu0
      %v5111 = vadd.f32 %v5030, %v5110
      %v5112 = vpop.f32.mrb[0].mxu0
      %v5113 = vadd.f32 %v5030, %v5112
      %5114 = vdwg.mxu0
      %5115 = vmatprep.subr.mxu0 %v4945
      %5116 = vmatpush1.xpose.msra.mxu0 %v4944
      %5117 = vmatprep.subr.mxu0 %v4947
      %5118 = vmatpush1.xpose.msra.mxu0 %v4946
      %5119 = vmatprep.subr.mxu0 %v4949
      %5120 = vmatpush1.xpose.msra.mxu0 %v4948
      %5121 = vmatprep.subr.mxu0 %v4951
      %5122 = vmatpush1.xpose.msra.mxu0 %v4950
      %5123 = vmatprep.subr.mxu0 %v4953
      %5124 = vmatpush1.xpose.msra.mxu0 %v4952
      %5125 = vmatprep.subr.mxu0 %v4955
      %5126 = vmatpush1.xpose.msra.mxu0 %v4954
      %5127 = vmatprep.subr.mxu0 %v4957
      %5128 = vmatpush1.xpose.msra.mxu0 %v4956
      %5129 = vmatprep.subr.mxu0 %v4959
      %5130 = vmatpush1.xpose.msra.mxu0 %v4958
      %5131 = vmatprep.subr.mxu0 %v4961
      %5132 = vmatpush1.xpose.msra.mxu0 %v4960
      %5133 = vmatprep.subr.mxu0 %v4963
      %5134 = vmatpush1.xpose.msra.mxu0 %v4962
      %5135 = vmatprep.subr.mxu0 %v4965
      %5136 = vmatpush1.xpose.msra.mxu0 %v4964
      %5137 = vmatprep.subr.mxu0 %v4967
      %5138 = vmatpush1.xpose.msra.mxu0 %v4966
      %5139 = vmatprep.subr.mxu0 %v4969
      %5140 = vmatpush1.xpose.msra.mxu0 %v4968
      %5141 = vmatprep.subr.mxu0 %v4971
      %5142 = vmatpush1.xpose.msra.mxu0 %v4970
      %5143 = vmatprep.subr.mxu0 %v4973
      %5144 = vmatpush1.xpose.msra.mxu0 %v4972
      %5145 = vmatprep.subr.mxu0 %v4975
      %5146 = vmatpush1.xpose.msra.mxu0 %v4974
      %5147 = vmatprep.subr.mxu0 %v4977
      %5148 = vmatpush1.xpose.msra.mxu0 %v4976
      %5149 = vmatprep.subr.mxu0 %v4979
      %5150 = vmatpush1.xpose.msra.mxu0 %v4978
      %5151 = vmatprep.subr.mxu0 %v4981
      %5152 = vmatpush1.xpose.msra.mxu0 %v4980
      %5153 = vmatprep.subr.mxu0 %v4983
      %5154 = vmatpush1.xpose.msra.mxu0 %v4982
      %5155 = vmatprep.subr.mxu0 %v4985
      %5156 = vmatpush1.xpose.msra.mxu0 %v4984
      %5157 = vmatprep.subr.mxu0 %v4987
      %5158 = vmatpush1.xpose.msra.mxu0 %v4986
      %5159 = vmatprep.subr.mxu0 %v4989
      %5160 = vmatpush1.xpose.msra.mxu0 %v4988
      %5161 = vmatprep.subr.mxu0 %v4991
      %5162 = vmatpush1.xpose.msra.mxu0 %v4990
      %5163 = vmatprep.subr.mxu0 %v4993
      %5164 = vmatpush1.xpose.msra.mxu0 %v4992
      %5165 = vmatprep.subr.mxu0 %v4995
      %5166 = vmatpush1.xpose.msra.mxu0 %v4994
      %5167 = vmatprep.subr.mxu0 %v4997
      %5168 = vmatpush1.xpose.msra.mxu0 %v4996
      %5169 = vmatprep.subr.mxu0 %v4999
      %5170 = vmatpush1.xpose.msra.mxu0 %v4998
      %5171 = vmatprep.subr.mxu0 %v5001
      %5172 = vmatpush1.xpose.msra.mxu0 %v5000
      %5173 = vmatprep.subr.mxu0 %v5003
      %5174 = vmatpush1.xpose.msra.mxu0 %v5002
      %5175 = vmatprep.subr.mxu0 %v5005
      %5176 = vmatpush1.xpose.msra.mxu0 %v5004
      %5177 = vmatprep.subr.mxu0 %v5007
      %5178 = vmatpush1.xpose.msra.mxu0 %v5006
      %5179 = vmatprep.mubr.f32.mxu0 %v5009
      %5180 = vmatmul.mubr.f32.gmra.mrb[0].mxu0 %v5008
      %v5181 = vpop.f32.mrb[0].mxu0
      %v5182 = vadd.f32 %v5020, %v5181
      %v5183 = vpop.f32.mrb[0].mxu0
      %v5184 = vadd.f32 %v5020, %v5183
      %5185 = vmatprep.mubr.f32.mxu0 %v5011
      %5186 = vmatmul.mubr.f32.gmra.mrb[0].mxu0 %v5010
      %v5187 = vpop.f32.mrb[0].mxu0
      %v5188 = vadd.f32 %v5025, %v5187
      %v5189 = vpop.f32.mrb[0].mxu0
      %v5190 = vadd.f32 %v5025, %v5189
      %5191 = vmatprep.mubr.f32.mxu0 %v5013
      %5192 = vmatmul.mubr.f32.gmra.mrb[0].mxu0 %v5012
      %v5193 = vpop.f32.mrb[0].mxu0
      %v5194 = vadd.f32 %v5030, %v5193
      %v5195 = vpop.f32.mrb[0].mxu0
      %v5196 = vadd.f32 %v5030, %v5195
      %5197 = vdwg.mxu0
      %5198 = vst [vmem:[%s278] sm:$0xff] %v5099
      %5199 = vst [vmem:[%s278 + $0x8] sm:$0xff] %v5101
      %5200 = vst [vmem:[%s278 + $0x10] sm:$0xff] %v5182
      %5201 = vst [vmem:[%s278 + $0x18] sm:$0xff] %v5184
      %5202 = vst [vmem:[%s278 + $0x20] sm:$0xff] %v5105
      %5203 = vst [vmem:[%s278 + $0x28] sm:$0xff] %v5107
      %5204 = vst [vmem:[%s278 + $0x30] sm:$0xff] %v5188
      %5205 = vst [vmem:[%s278 + $0x38] sm:$0xff] %v5190
      %5206 = vst [vmem:[%s278 + $0x40] sm:$0xff] %v5111
      %5207 = vst [vmem:[%s278 + $0x48] sm:$0xff] %v5113
      %5208 = vst [vmem:[%s278 + $0x50] sm:$0xff] %v5194
      %5209 = vst [vmem:[%s278 + $0x58] sm:$0xff] %v5196
      %p5210 = scmp.lt.s32.totalorder %s18, 1
      %s5211 = scalar_select %p5210, %s18, 1
      %s5212 = smul.addr %s5211, 12
      %s5213 = smul.addr %s5212, 8
      %s5214 = scalar_lea.vmem %s7, %s5213
      // Predicated region
      $region49: #{final_projection_forward.1} parent=47 // pred_check
        %p5215 = pneg %p188
      $region50: #{final_projection_forward.1} parent=47 // pred_check_branch
        %5217 = sbr.rel (%p5215) target = $region52
      $region51: #{final_projection_forward.1} parent=47 // pred_region
        _
      $region52: #{final_projection_forward.1} parent=47 // pred_fallthru
        _
    $region48: #{final_projection_forward.1} parent=5 // pred_fallthru
      _
    %p5218 = scmp.le.s32.totalorder 2, %s13
    // Predicated region
    $region53: #{final_projection_forward.1} parent=5 // pred_check
      %p5219 = pneg %p5218
    $region54: #{final_projection_forward.1} parent=5 // pred_check_branch
      %5221 = sbr.rel (%p5219) target = $region56
    $region55: #{final_projection_forward.1} parent=5 // pred_region
      %s5222 = ssub.s32 %s13, 2
      // Predicated region
      $region57: #{final_projection_forward.1} parent=55 // pred_check
        %p5223 = pneg %p194
      $region58: #{final_projection_forward.1} parent=55 // pred_check_branch
        %5225 = sbr.rel (%p5223) target = $region60
      $region59: #{final_projection_forward.1} parent=55 // pred_region
        %p5226 = scmp.lt.s32.totalorder %s19, 1
        %s5227 = scalar_select %p5226, %s19, 1
        %s5228 = smul.addr %s5227, 12
        %s5229 = smul.addr %s5228, 8
        %s5230 = scalar_lea.vmem %s7, %s5229
      $region60: #{final_projection_forward.1} parent=55 // pred_fallthru
        _
    $region56: #{final_projection_forward.1} parent=5 // pred_fallthru
      _
  $region6: #{final_projection_forward.1} parent=0 // loop_footer
    %s17 = sadd.s32 1, %s13
  $region7: #{final_projection_forward.1} parent=0 // loop_footer_branch
    %12 = sbr.rel target = $region3
  $region8: #{final_projection_forward.1} parent=0 // loop_exit
    _

</llo_original>
